<compile_context>
chip_gen: v7x
topology: tpu7x:2x2x1
jax: 0.10.0
libtpu: 0.0.40
codegen_flags: <defaults>
</compile_context>

<pallas_src>
import functools

import jax
import jax.numpy as jnp
from jax.experimental import pallas as pl
from jax.experimental.pallas import tpu as pltpu

BN_EPS = 1e-5
NORM_EPS = 1e-12   # guards all-zero spatial locations (NaN hazard in x/||x||)


def _round_up(x, m):
    return ((x + m - 1) // m) * m


def _pair_block_kernel(seg_ref, pn_ref, praw_ref, gn_ref, gmean_ref,
                       out_ref, r_ref, *, tp_blk, tg_blk, hw):
    # corr[g_flat, tp*hw + q] = <gallery_n[g_flat, :], probe_n[tp, :, q]>
    # (TG*HW, C) @ (C, TP*HW): one MXU matmul for the whole probe x gallery block.
    corr = jnp.dot(gn_ref[...], pn_ref[...],
                   preferred_element_type=jnp.float32)        # (TG*HW, TP*HW)

    # Softmax over the probe locations q of each probe (lane segments of width hw).
    # Unit-normalized features => |corr| <= 1, so no max-subtraction is needed.
    e = jnp.exp(corr)                                          # lane-dense EUP work
    seg = seg_ref[...]                                         # (TP, TP*HW) 0/1 segments
    denom = jax.lax.dot_general(e, seg, (((1,), (1,)), ((), ())),
                                preferred_element_type=jnp.float32)   # (TG*HW, TP)
    inv = 1.0 / denom                                          # exact reciprocal
    inv_b = jax.lax.dot_general(inv, seg, (((1,), (0,)), ((), ())),
                                preferred_element_type=jnp.float32)   # (TG*HW, TP*HW)
    att = e * inv_b

    # Mean of att over the hw gallery locations of each gallery:
    # sublane-group reduce (reshape is layout-free, rides the XLU slot).
    r_ref[...] = jnp.sum(att.reshape(tg_blk, hw, tp_blk * hw),
                         axis=1) * jnp.float32(1.0 / hw)       # (TG, TP*HW)

    gmean = gmean_ref[...]                                     # (TG, C) raw gallery mean
    # Tiny per-probe tail: only mean_{gallery loc}(warped_probe) is needed, so a
    # (TG, HW) @ (HW, C) matmul per probe produces the warped spatial mean directly.
    # Static Python unroll => compile-time offsets; HBM writeback is still one
    # (TP, TG, C) block DMA.
    for tp in range(tp_blk):
        r_tp = r_ref[:, tp * hw:(tp + 1) * hw]                 # (TG, HW)
        praw_tp = praw_ref[tp * hw:(tp + 1) * hw, :]           # (HW, C) raw probe
        wm = jnp.dot(r_tp, praw_tp,
                     preferred_element_type=jnp.float32)       # (TG, C)
        diff = wm - gmean
        out_ref[tp] = diff * diff


@functools.partial(jax.jit, static_argnames=("num_classes",))
def random_walk_embed_p2g(probe_x, gallery_x, bn_params, cls_w, cls_b, *, num_classes):
    """probe_x, gallery_x: NCHW float32.  Returns (N_probe, N_gallery, num_classes)."""
    n_probe, c, h, w = probe_x.shape
    n_gallery = gallery_x.shape[0]
    hw = h * w

    probe = probe_x.reshape(n_probe, c, hw)          # (Np, C, HW)  (native NCHW order)
    gallery = gallery_x.reshape(n_gallery, c, hw)    # (Ng, C, HW)

    # Hoisted per-location channel L2 normalization: O(Np + Ng), not O(Np*Ng).
    p_norm = jnp.sqrt(jnp.sum(probe * probe, axis=1, keepdims=True) + NORM_EPS)
    probe_n = probe / p_norm
    g_norm = jnp.sqrt(jnp.sum(gallery * gallery, axis=1, keepdims=True) + NORM_EPS)
    gallery_n = gallery / g_norm
    g_mean = jnp.mean(gallery, axis=2)               # (Ng, C) raw gallery spatial mean

    # Block sizes: tp_blk*hw / tg_blk*hw target ~128-256 MXU/lane columns & rows.
    tp_cap = max(8, _round_up(max(256 // hw, 1), 8))
    tp_blk = min(_round_up(n_probe, 8), tp_cap)
    if (tp_blk * hw) % 128 != 0:                     # lane-dense probe columns, or
        tp_blk = _round_up(n_probe, 8)               # fall back to a single probe block
    tg_cap = max(8, _round_up(max(256 // hw, 1), 8))
    tg_blk = min(_round_up(n_gallery, 8), tg_cap)

    np_pad = _round_up(n_probe, tp_blk)
    ng_pad = _round_up(n_gallery, tg_blk)

    def pad0(x, n):
        d = n - x.shape[0]
        return x if d == 0 else jnp.pad(x, ((0, d),) + ((0, 0),) * (x.ndim - 1))

    probe_n = pad0(probe_n, np_pad)
    probe_p = pad0(probe, np_pad)
    gallery_n = pad0(gallery_n, ng_pad)
    g_mean = pad0(g_mean, ng_pad)

    # Kernel layouts:
    #   pn_cl   (C, Np_pad*HW): channel-major, lane-dense RHS of the corr matmul.
    #   praw_sm (Np_pad*HW, C): raw probe, spatial-major for the warped-mean tail.
    #   gn_sm   (Ng_pad*HW, C): normalized gallery, spatial-major LHS (standard dot).
    pn_cl = jnp.transpose(probe_n, (1, 0, 2)).reshape(c, np_pad * hw)
    praw_sm = jnp.transpose(probe_p, (0, 2, 1)).reshape(np_pad * hw, c)
    gn_sm = jnp.transpose(gallery_n, (0, 2, 1)).reshape(ng_pad * hw, c)

    # 0/1 probe-segment indicator (built once; constant index_map -> loaded once).
    seg = (jnp.arange(tp_blk, dtype=jnp.int32)[:, None]
           == (jnp.arange(tp_blk * hw, dtype=jnp.int32)[None, :] // hw)
           ).astype(jnp.float32)                                   # (TP, TP*HW)

    kernel = functools.partial(_pair_block_kernel,
                               tp_blk=tp_blk, tg_blk=tg_blk, hw=hw)

    grid_spec = pltpu.PrefetchScalarGridSpec(
        num_scalar_prefetch=0,
        grid=(np_pad // tp_blk, ng_pad // tg_blk),   # probe outer (resident), gallery inner
        in_specs=[
            pl.BlockSpec((tp_blk, tp_blk * hw), lambda i, j: (0, 0)),   # seg
            pl.BlockSpec((c, tp_blk * hw), lambda i, j: (0, i)),        # normalized probe
            pl.BlockSpec((tp_blk * hw, c), lambda i, j: (i, 0)),        # raw probe
            pl.BlockSpec((tg_blk * hw, c), lambda i, j: (j, 0)),        # normalized gallery
            pl.BlockSpec((tg_blk, c), lambda i, j: (j, 0)),             # gallery spatial mean
        ],
        out_specs=pl.BlockSpec((tp_blk, tg_blk, c), lambda i, j: (i, j, 0)),
        scratch_shapes=[pltpu.VMEM((tg_blk, tp_blk * hw), jnp.float32)],
    )

    d2 = pl.pallas_call(
        kernel,
        out_shape=jax.ShapeDtypeStruct((np_pad, ng_pad, c), jnp.float32),
        grid_spec=grid_spec,
        compiler_params=pltpu.CompilerParams(
            dimension_semantics=("parallel", "parallel")),
    )(seg, pn_cl, praw_sm, gn_sm, g_mean)

    d2 = d2[:n_probe, :n_gallery, :]                 # drop padded probes/galleries

    # Eval-mode BatchNorm1d folded exactly into the classifier, applied in XLA:
    # with tiny num_classes the in-kernel padded-logit store would be ~94% padding.
    gamma, beta, mu, var = bn_params[0], bn_params[1], bn_params[2], bn_params[3]
    scale = gamma / jnp.sqrt(var + BN_EPS)           # (C,)
    w_fold = scale[:, None] * cls_w                  # (C, NC)
    b_fold = cls_b + (beta - mu * scale) @ cls_w     # (1, NC)
    logits = d2.reshape(n_probe * n_gallery, c) @ w_fold + b_fold
    return logits.reshape(n_probe, n_gallery, num_classes)


def _reference(probe_x, gallery_x, bn_params, cls_w, cls_b):
    """Pure-JAX reference mirroring the PyTorch forward (eval mode)."""
    n_probe, c, h, w = probe_x.shape
    n_gallery = gallery_x.shape[0]
    hw = h * w
    p = jnp.transpose(probe_x.reshape(n_probe, c, hw), (0, 2, 1))      # (Np, HW, C)
    g = jnp.transpose(gallery_x.reshape(n_gallery, c, hw), (0, 2, 1))  # (Ng, HW, C)

    def pair(gi, pi):
        gn = gi / jnp.linalg.norm(gi, axis=1, keepdims=True)
        pn = pi / jnp.linalg.norm(pi, axis=1, keepdims=True)
        corr = gn @ pn.T
        att = jax.nn.softmax(corr, axis=1)
        warped = att @ pi
        d2 = jnp.mean(warped - gi, axis=0) ** 2
        gamma, beta, mu, var = bn_params[0], bn_params[1], bn_params[2], bn_params[3]
        bn = (d2 - mu) / jnp.sqrt(var + BN_EPS) * gamma + beta
        return bn @ cls_w + cls_b[0]

    return jax.vmap(lambda pi: jax.vmap(lambda gi: pair(gi, pi))(g))(p)


if __name__ == "__main__":
    # Small, module-consistent shapes; sized so the kernel runs a 2x2 grid of
    # pair blocks (exercises index maps, residency and padding slicing).
    N_PROBE, N_GALLERY = 18, 19
    C, H, W = 16, 4, 4          # feat_num = C = 16
    NUM_CLASSES = 8

    key = jax.random.PRNGKey(0)
    k_probe, k_gallery, k_w, k_bn = jax.random.split(key, 4)

    probe_x = jax.random.normal(k_probe, (N_PROBE, C, H, W), dtype=jnp.float32)
    gallery_x = jax.random.normal(k_gallery, (N_GALLERY, C, H, W), dtype=jnp.float32)

    # BatchNorm1d parameters / running stats "as if after some training"
    # (exercises the exact BN->classifier fold).
    kg, kb, km, kv = jax.random.split(k_bn, 4)
    gamma = 1.0 + 0.1 * jax.random.normal(kg, (C,), dtype=jnp.float32)
    beta = 0.1 * jax.random.normal(kb, (C,), dtype=jnp.float32)
    mu = 0.05 * jax.random.normal(km, (C,), dtype=jnp.float32)
    var = 1.0 + 0.1 * jax.random.uniform(kv, (C,), dtype=jnp.float32)
    bn_params = jnp.stack([gamma, beta, mu, var]).astype(jnp.float32)  # (4, C)

    # classifier.weight ~ N(0, 0.001), bias = 0   (stored as (C, NC) = W^T)
    cls_w = jax.random.normal(k_w, (C, NUM_CLASSES), dtype=jnp.float32) * 0.001
    cls_b = jnp.zeros((1, NUM_CLASSES), dtype=jnp.float32)

    out = random_walk_embed_p2g(
        probe_x, gallery_x, bn_params, cls_w, cls_b, num_classes=NUM_CLASSES
    )
    out = jax.block_until_ready(out)

    ref = _reference(probe_x, gallery_x, bn_params, cls_w, cls_b)
    assert out.shape == (N_PROBE, N_GALLERY, NUM_CLASSES), out.shape
    err = float(jnp.abs(out - ref).max())
    assert jnp.allclose(out, ref, rtol=5e-3, atol=1e-5), err

    print("KERNEL_OK")
</pallas_src>

<mosaic_0001>
module attributes {stable_mosaic.version = 11 : i64} {
  func.func @_pair_block_kernel(%arg0: i32, %arg1: i32, %arg2: memref<16x256xf32, #tpu.memory_space<vmem>>, %arg3: memref<16x256xf32, #tpu.memory_space<vmem>>, %arg4: memref<256x16xf32, #tpu.memory_space<vmem>>, %arg5: memref<256x16xf32, #tpu.memory_space<vmem>>, %arg6: memref<16x16xf32, #tpu.memory_space<vmem>>, %arg7: memref<16x16x16xf32, #tpu.memory_space<vmem>>, %arg8: memref<16x256xf32, #tpu.memory_space<vmem>>) attributes {dimension_semantics = [#tpu.dimension_semantics<parallel>, #tpu.dimension_semantics<parallel>], iteration_bounds = array<i64: 2, 2>, scalar_prefetch = 0 : i64, scratch_operands = 1 : i64, tpu.core_type = #tpu.core_type<tc>, window_params = [{pipeline_mode = #tpu.pipeline_mode<synchronous>, transform_indices = @transform_0, window_bounds = array<i64: 16, 256>}, {transform_indices = @transform_1, window_bounds = array<i64: 16, 256>}, {transform_indices = @transform_2, window_bounds = array<i64: 256, 16>}, {transform_indices = @transform_3, window_bounds = array<i64: 256, 16>}, {transform_indices = @transform_4, window_bounds = array<i64: 16, 16>}, {transform_indices = @transform_5, window_bounds = array<i64: 16, 16, 16>}]} {
    %c0 = arith.constant 0 : index
    %c0_0 = arith.constant 0 : index
    %0 = vector.load %arg5[%c0, %c0_0] : memref<256x16xf32, #tpu.memory_space<vmem>>, vector<256x16xf32>
    %c0_1 = arith.constant 0 : index
    %c0_2 = arith.constant 0 : index
    %1 = vector.load %arg3[%c0_1, %c0_2] : memref<16x256xf32, #tpu.memory_space<vmem>>, vector<16x256xf32>
    %cst = arith.constant dense<0.000000e+00> : vector<256x256xf32>
    %2 = tpu.matmul %0, %1, %cst {dimension_numbers = #tpu.dot_dimension_numbers<[1], [0], [0], [1], [0, 0, 1, 1], [], []>} : vector<256x16xf32>, vector<16x256xf32>, vector<256x256xf32> -> vector<256x256xf32>
    %3 = math.exp %2 : vector<256x256xf32>
    %c0_3 = arith.constant 0 : index
    %c0_4 = arith.constant 0 : index
    %4 = vector.load %arg2[%c0_3, %c0_4] : memref<16x256xf32, #tpu.memory_space<vmem>>, vector<16x256xf32>
    %cst_5 = arith.constant dense<0.000000e+00> : vector<256x16xf32>
    %5 = tpu.matmul %3, %4, %cst_5 {dimension_numbers = #tpu.dot_dimension_numbers<[1], [1], [0], [0], [0, 0, 1, 0], [], []>} : vector<256x256xf32>, vector<16x256xf32>, vector<256x16xf32> -> vector<256x16xf32>
    %cst_6 = arith.constant 1.000000e+00 : f32
    %6 = vector.broadcast %cst_6 : f32 to vector<256x16xf32>
    %7 = arith.divf %6, %5 : vector<256x16xf32>
    %cst_7 = arith.constant dense<0.000000e+00> : vector<256x256xf32>
    %8 = tpu.matmul %7, %4, %cst_7 {dimension_numbers = #tpu.dot_dimension_numbers<[1], [0], [0], [1], [0, 0, 1, 1], [], []>} : vector<256x16xf32>, vector<16x256xf32>, vector<256x256xf32> -> vector<256x256xf32>
    %9 = arith.mulf %3, %8 : vector<256x256xf32>
    %10 = vector.shape_cast %9 : vector<256x256xf32> to vector<16x16x256xf32>
    %cst_8 = arith.constant dense<0.000000e+00> : vector<16x256xf32>
    %11 = vector.multi_reduction <add>, %10, %cst_8 [1] : vector<16x16x256xf32> to vector<16x256xf32>
    %cst_9 = arith.constant 6.250000e-02 : f32
    %12 = vector.broadcast %cst_9 : f32 to vector<16x256xf32>
    %13 = arith.mulf %11, %12 : vector<16x256xf32>
    %c0_10 = arith.constant 0 : index
    %c0_11 = arith.constant 0 : index
    %14 = vector.load %arg8[%c0_10, %c0_11] : memref<16x256xf32, #tpu.memory_space<vmem>>, vector<16x256xf32>
    tpu.vector_store %arg8[%c0_10, %c0_11], %13 {strides = array<i32>} : memref<16x256xf32, #tpu.memory_space<vmem>>, vector<16x256xf32>,
    %c0_12 = arith.constant 0 : index
    %c0_13 = arith.constant 0 : index
    %15 = vector.load %arg6[%c0_12, %c0_13] : memref<16x16xf32, #tpu.memory_space<vmem>>, vector<16x16xf32>
    %c0_14 = arith.constant 0 : index
    %c0_15 = arith.constant 0 : index
    %16 = vector.load %arg8[%c0_14, %c0_15] : memref<16x256xf32, #tpu.memory_space<vmem>>, vector<16x16xf32>
    %c0_16 = arith.constant 0 : index
    %c0_17 = arith.constant 0 : index
    %17 = vector.load %arg4[%c0_16, %c0_17] : memref<256x16xf32, #tpu.memory_space<vmem>>, vector<16x16xf32>
    %cst_18 = arith.constant dense<0.000000e+00> : vector<16x16xf32>
    %18 = tpu.matmul %16, %17, %cst_18 {dimension_numbers = #tpu.dot_dimension_numbers<[1], [0], [0], [1], [0, 0, 1, 1], [], []>} : vector<16x16xf32>, vector<16x16xf32>, vector<16x16xf32> -> vector<16x16xf32>
    %19 = arith.subf %18, %15 : vector<16x16xf32>
    %20 = arith.mulf %19, %19 : vector<16x16xf32>
    %c0_19 = arith.constant 0 : index
    %c0_20 = arith.constant 0 : index
    %c0_21 = arith.constant 0 : index
    %21 = vector.load %arg7[%c0_19, %c0_20, %c0_21] : memref<16x16x16xf32, #tpu.memory_space<vmem>>, vector<1x16x16xf32>
    %22 = vector.shape_cast %21 : vector<1x16x16xf32> to vector<16x16xf32>
    %23 = vector.shape_cast %20 : vector<16x16xf32> to vector<1x16x16xf32>
    tpu.vector_store %arg7[%c0_19, %c0_20, %c0_21], %23 {strides = array<i32>} : memref<16x16x16xf32, #tpu.memory_space<vmem>>, vector<1x16x16xf32>,
    %c0_22 = arith.constant 0 : index
    %c16 = arith.constant 16 : index
    %24 = vector.load %arg8[%c0_22, %c16] : memref<16x256xf32, #tpu.memory_space<vmem>>, vector<16x16xf32>
    %c16_23 = arith.constant 16 : index
    %c0_24 = arith.constant 0 : index
    %25 = vector.load %arg4[%c16_23, %c0_24] : memref<256x16xf32, #tpu.memory_space<vmem>>, vector<16x16xf32>
    %cst_25 = arith.constant dense<0.000000e+00> : vector<16x16xf32>
    %26 = tpu.matmul %24, %25, %cst_25 {dimension_numbers = #tpu.dot_dimension_numbers<[1], [0], [0], [1], [0, 0, 1, 1], [], []>} : vector<16x16xf32>, vector<16x16xf32>, vector<16x16xf32> -> vector<16x16xf32>
    %27 = arith.subf %26, %15 : vector<16x16xf32>
    %28 = arith.mulf %27, %27 : vector<16x16xf32>
    %c1 = arith.constant 1 : index
    %c0_26 = arith.constant 0 : index
    %c0_27 = arith.constant 0 : index
    %29 = vector.load %arg7[%c1, %c0_26, %c0_27] : memref<16x16x16xf32, #tpu.memory_space<vmem>>, vector<1x16x16xf32>
    %30 = vector.shape_cast %29 : vector<1x16x16xf32> to vector<16x16xf32>
    %31 = vector.shape_cast %28 : vector<16x16xf32> to vector<1x16x16xf32>
    tpu.vector_store %arg7[%c1, %c0_26, %c0_27], %31 {strides = array<i32>} : memref<16x16x16xf32, #tpu.memory_space<vmem>>, vector<1x16x16xf32>,
    %c0_28 = arith.constant 0 : index
    %c32 = arith.constant 32 : index
    %32 = vector.load %arg8[%c0_28, %c32] : memref<16x256xf32, #tpu.memory_space<vmem>>, vector<16x16xf32>
    %c32_29 = arith.constant 32 : index
    %c0_30 = arith.constant 0 : index
    %33 = vector.load %arg4[%c32_29, %c0_30] : memref<256x16xf32, #tpu.memory_space<vmem>>, vector<16x16xf32>
    %cst_31 = arith.constant dense<0.000000e+00> : vector<16x16xf32>
    %34 = tpu.matmul %32, %33, %cst_31 {dimension_numbers = #tpu.dot_dimension_numbers<[1], [0], [0], [1], [0, 0, 1, 1], [], []>} : vector<16x16xf32>, vector<16x16xf32>, vector<16x16xf32> -> vector<16x16xf32>
    %35 = arith.subf %34, %15 : vector<16x16xf32>
    %36 = arith.mulf %35, %35 : vector<16x16xf32>
    %c2 = arith.constant 2 : index
    %c0_32 = arith.constant 0 : index
    %c0_33 = arith.constant 0 : index
    %37 = vector.load %arg7[%c2, %c0_32, %c0_33] : memref<16x16x16xf32, #tpu.memory_space<vmem>>, vector<1x16x16xf32>
    %38 = vector.shape_cast %37 : vector<1x16x16xf32> to vector<16x16xf32>
    %39 = vector.shape_cast %36 : vector<16x16xf32> to vector<1x16x16xf32>
    tpu.vector_store %arg7[%c2, %c0_32, %c0_33], %39 {strides = array<i32>} : memref<16x16x16xf32, #tpu.memory_space<vmem>>, vector<1x16x16xf32>,
    %c0_34 = arith.constant 0 : index
    %c48 = arith.constant 48 : index
    %40 = vector.load %arg8[%c0_34, %c48] : memref<16x256xf32, #tpu.memory_space<vmem>>, vector<16x16xf32>
    %c48_35 = arith.constant 48 : index
    %c0_36 = arith.constant 0 : index
    %41 = vector.load %arg4[%c48_35, %c0_36] : memref<256x16xf32, #tpu.memory_space<vmem>>, vector<16x16xf32>
    %cst_37 = arith.constant dense<0.000000e+00> : vector<16x16xf32>
    %42 = tpu.matmul %40, %41, %cst_37 {dimension_numbers = #tpu.dot_dimension_numbers<[1], [0], [0], [1], [0, 0, 1, 1], [], []>} : vector<16x16xf32>, vector<16x16xf32>, vector<16x16xf32> -> vector<16x16xf32>
    %43 = arith.subf %42, %15 : vector<16x16xf32>
    %44 = arith.mulf %43, %43 : vector<16x16xf32>
    %c3 = arith.constant 3 : index
    %c0_38 = arith.constant 0 : index
    %c0_39 = arith.constant 0 : index
    %45 = vector.load %arg7[%c3, %c0_38, %c0_39] : memref<16x16x16xf32, #tpu.memory_space<vmem>>, vector<1x16x16xf32>
    %46 = vector.shape_cast %45 : vector<1x16x16xf32> to vector<16x16xf32>
    %47 = vector.shape_cast %44 : vector<16x16xf32> to vector<1x16x16xf32>
    tpu.vector_store %arg7[%c3, %c0_38, %c0_39], %47 {strides = array<i32>} : memref<16x16x16xf32, #tpu.memory_space<vmem>>, vector<1x16x16xf32>,
    %c0_40 = arith.constant 0 : index
    %c64 = arith.constant 64 : index
    %48 = vector.load %arg8[%c0_40, %c64] : memref<16x256xf32, #tpu.memory_space<vmem>>, vector<16x16xf32>
    %c64_41 = arith.constant 64 : index
    %c0_42 = arith.constant 0 : index
    %49 = vector.load %arg4[%c64_41, %c0_42] : memref<256x16xf32, #tpu.memory_space<vmem>>, vector<16x16xf32>
    %cst_43 = arith.constant dense<0.000000e+00> : vector<16x16xf32>
    %50 = tpu.matmul %48, %49, %cst_43 {dimension_numbers = #tpu.dot_dimension_numbers<[1], [0], [0], [1], [0, 0, 1, 1], [], []>} : vector<16x16xf32>, vector<16x16xf32>, vector<16x16xf32> -> vector<16x16xf32>
    %51 = arith.subf %50, %15 : vector<16x16xf32>
    %52 = arith.mulf %51, %51 : vector<16x16xf32>
    %c4 = arith.constant 4 : index
    %c0_44 = arith.constant 0 : index
    %c0_45 = arith.constant 0 : index
    %53 = vector.load %arg7[%c4, %c0_44, %c0_45] : memref<16x16x16xf32, #tpu.memory_space<vmem>>, vector<1x16x16xf32>
    %54 = vector.shape_cast %53 : vector<1x16x16xf32> to vector<16x16xf32>
    %55 = vector.shape_cast %52 : vector<16x16xf32> to vector<1x16x16xf32>
    tpu.vector_store %arg7[%c4, %c0_44, %c0_45], %55 {strides = array<i32>} : memref<16x16x16xf32, #tpu.memory_space<vmem>>, vector<1x16x16xf32>,
    %c0_46 = arith.constant 0 : index
    %c80 = arith.constant 80 : index
    %56 = vector.load %arg8[%c0_46, %c80] : memref<16x256xf32, #tpu.memory_space<vmem>>, vector<16x16xf32>
    %c80_47 = arith.constant 80 : index
    %c0_48 = arith.constant 0 : index
    %57 = vector.load %arg4[%c80_47, %c0_48] : memref<256x16xf32, #tpu.memory_space<vmem>>, vector<16x16xf32>
    %cst_49 = arith.constant dense<0.000000e+00> : vector<16x16xf32>
    %58 = tpu.matmul %56, %57, %cst_49 {dimension_numbers = #tpu.dot_dimension_numbers<[1], [0], [0], [1], [0, 0, 1, 1], [], []>} : vector<16x16xf32>, vector<16x16xf32>, vector<16x16xf32> -> vector<16x16xf32>
    %59 = arith.subf %58, %15 : vector<16x16xf32>
    %60 = arith.mulf %59, %59 : vector<16x16xf32>
    %c5 = arith.constant 5 : index
    %c0_50 = arith.constant 0 : index
    %c0_51 = arith.constant 0 : index
    %61 = vector.load %arg7[%c5, %c0_50, %c0_51] : memref<16x16x16xf32, #tpu.memory_space<vmem>>, vector<1x16x16xf32>
    %62 = vector.shape_cast %61 : vector<1x16x16xf32> to vector<16x16xf32>
    %63 = vector.shape_cast %60 : vector<16x16xf32> to vector<1x16x16xf32>
    tpu.vector_store %arg7[%c5, %c0_50, %c0_51], %63 {strides = array<i32>} : memref<16x16x16xf32, #tpu.memory_space<vmem>>, vector<1x16x16xf32>,
    %c0_52 = arith.constant 0 : index
    %c96 = arith.constant 96 : index
    %64 = vector.load %arg8[%c0_52, %c96] : memref<16x256xf32, #tpu.memory_space<vmem>>, vector<16x16xf32>
    %c96_53 = arith.constant 96 : index
    %c0_54 = arith.constant 0 : index
    %65 = vector.load %arg4[%c96_53, %c0_54] : memref<256x16xf32, #tpu.memory_space<vmem>>, vector<16x16xf32>
    %cst_55 = arith.constant dense<0.000000e+00> : vector<16x16xf32>
    %66 = tpu.matmul %64, %65, %cst_55 {dimension_numbers = #tpu.dot_dimension_numbers<[1], [0], [0], [1], [0, 0, 1, 1], [], []>} : vector<16x16xf32>, vector<16x16xf32>, vector<16x16xf32> -> vector<16x16xf32>
    %67 = arith.subf %66, %15 : vector<16x16xf32>
    %68 = arith.mulf %67, %67 : vector<16x16xf32>
    %c6 = arith.constant 6 : index
    %c0_56 = arith.constant 0 : index
    %c0_57 = arith.constant 0 : index
    %69 = vector.load %arg7[%c6, %c0_56, %c0_57] : memref<16x16x16xf32, #tpu.memory_space<vmem>>, vector<1x16x16xf32>
    %70 = vector.shape_cast %69 : vector<1x16x16xf32> to vector<16x16xf32>
    %71 = vector.shape_cast %68 : vector<16x16xf32> to vector<1x16x16xf32>
    tpu.vector_store %arg7[%c6, %c0_56, %c0_57], %71 {strides = array<i32>} : memref<16x16x16xf32, #tpu.memory_space<vmem>>, vector<1x16x16xf32>,
    %c0_58 = arith.constant 0 : index
    %c112 = arith.constant 112 : index
    %72 = vector.load %arg8[%c0_58, %c112] : memref<16x256xf32, #tpu.memory_space<vmem>>, vector<16x16xf32>
    %c112_59 = arith.constant 112 : index
    %c0_60 = arith.constant 0 : index
    %73 = vector.load %arg4[%c112_59, %c0_60] : memref<256x16xf32, #tpu.memory_space<vmem>>, vector<16x16xf32>
    %cst_61 = arith.constant dense<0.000000e+00> : vector<16x16xf32>
    %74 = tpu.matmul %72, %73, %cst_61 {dimension_numbers = #tpu.dot_dimension_numbers<[1], [0], [0], [1], [0, 0, 1, 1], [], []>} : vector<16x16xf32>, vector<16x16xf32>, vector<16x16xf32> -> vector<16x16xf32>
    %75 = arith.subf %74, %15 : vector<16x16xf32>
    %76 = arith.mulf %75, %75 : vector<16x16xf32>
    %c7 = arith.constant 7 : index
    %c0_62 = arith.constant 0 : index
    %c0_63 = arith.constant 0 : index
    %77 = vector.load %arg7[%c7, %c0_62, %c0_63] : memref<16x16x16xf32, #tpu.memory_space<vmem>>, vector<1x16x16xf32>
    %78 = vector.shape_cast %77 : vector<1x16x16xf32> to vector<16x16xf32>
    %79 = vector.shape_cast %76 : vector<16x16xf32> to vector<1x16x16xf32>
    tpu.vector_store %arg7[%c7, %c0_62, %c0_63], %79 {strides = array<i32>} : memref<16x16x16xf32, #tpu.memory_space<vmem>>, vector<1x16x16xf32>,
    %c0_64 = arith.constant 0 : index
    %c128 = arith.constant 128 : index
    %80 = vector.load %arg8[%c0_64, %c128] : memref<16x256xf32, #tpu.memory_space<vmem>>, vector<16x16xf32>
    %c128_65 = arith.constant 128 : index
    %c0_66 = arith.constant 0 : index
    %81 = vector.load %arg4[%c128_65, %c0_66] : memref<256x16xf32, #tpu.memory_space<vmem>>, vector<16x16xf32>
    %cst_67 = arith.constant dense<0.000000e+00> : vector<16x16xf32>
    %82 = tpu.matmul %80, %81, %cst_67 {dimension_numbers = #tpu.dot_dimension_numbers<[1], [0], [0], [1], [0, 0, 1, 1], [], []>} : vector<16x16xf32>, vector<16x16xf32>, vector<16x16xf32> -> vector<16x16xf32>
    %83 = arith.subf %82, %15 : vector<16x16xf32>
    %84 = arith.mulf %83, %83 : vector<16x16xf32>
    %c8 = arith.constant 8 : index
    %c0_68 = arith.constant 0 : index
    %c0_69 = arith.constant 0 : index
    %85 = vector.load %arg7[%c8, %c0_68, %c0_69] : memref<16x16x16xf32, #tpu.memory_space<vmem>>, vector<1x16x16xf32>
    %86 = vector.shape_cast %85 : vector<1x16x16xf32> to vector<16x16xf32>
    %87 = vector.shape_cast %84 : vector<16x16xf32> to vector<1x16x16xf32>
    tpu.vector_store %arg7[%c8, %c0_68, %c0_69], %87 {strides = array<i32>} : memref<16x16x16xf32, #tpu.memory_space<vmem>>, vector<1x16x16xf32>,
    %c0_70 = arith.constant 0 : index
    %c144 = arith.constant 144 : index
    %88 = vector.load %arg8[%c0_70, %c144] : memref<16x256xf32, #tpu.memory_space<vmem>>, vector<16x16xf32>
    %c144_71 = arith.constant 144 : index
    %c0_72 = arith.constant 0 : index
    %89 = vector.load %arg4[%c144_71, %c0_72] : memref<256x16xf32, #tpu.memory_space<vmem>>, vector<16x16xf32>
    %cst_73 = arith.constant dense<0.000000e+00> : vector<16x16xf32>
    %90 = tpu.matmul %88, %89, %cst_73 {dimension_numbers = #tpu.dot_dimension_numbers<[1], [0], [0], [1], [0, 0, 1, 1], [], []>} : vector<16x16xf32>, vector<16x16xf32>, vector<16x16xf32> -> vector<16x16xf32>
    %91 = arith.subf %90, %15 : vector<16x16xf32>
    %92 = arith.mulf %91, %91 : vector<16x16xf32>
    %c9 = arith.constant 9 : index
    %c0_74 = arith.constant 0 : index
    %c0_75 = arith.constant 0 : index
    %93 = vector.load %arg7[%c9, %c0_74, %c0_75] : memref<16x16x16xf32, #tpu.memory_space<vmem>>, vector<1x16x16xf32>
    %94 = vector.shape_cast %93 : vector<1x16x16xf32> to vector<16x16xf32>
    %95 = vector.shape_cast %92 : vector<16x16xf32> to vector<1x16x16xf32>
    tpu.vector_store %arg7[%c9, %c0_74, %c0_75], %95 {strides = array<i32>} : memref<16x16x16xf32, #tpu.memory_space<vmem>>, vector<1x16x16xf32>,
    %c0_76 = arith.constant 0 : index
    %c160 = arith.constant 160 : index
    %96 = vector.load %arg8[%c0_76, %c160] : memref<16x256xf32, #tpu.memory_space<vmem>>, vector<16x16xf32>
    %c160_77 = arith.constant 160 : index
    %c0_78 = arith.constant 0 : index
    %97 = vector.load %arg4[%c160_77, %c0_78] : memref<256x16xf32, #tpu.memory_space<vmem>>, vector<16x16xf32>
    %cst_79 = arith.constant dense<0.000000e+00> : vector<16x16xf32>
    %98 = tpu.matmul %96, %97, %cst_79 {dimension_numbers = #tpu.dot_dimension_numbers<[1], [0], [0], [1], [0, 0, 1, 1], [], []>} : vector<16x16xf32>, vector<16x16xf32>, vector<16x16xf32> -> vector<16x16xf32>
    %99 = arith.subf %98, %15 : vector<16x16xf32>
    %100 = arith.mulf %99, %99 : vector<16x16xf32>
    %c10 = arith.constant 10 : index
    %c0_80 = arith.constant 0 : index
    %c0_81 = arith.constant 0 : index
    %101 = vector.load %arg7[%c10, %c0_80, %c0_81] : memref<16x16x16xf32, #tpu.memory_space<vmem>>, vector<1x16x16xf32>
    %102 = vector.shape_cast %101 : vector<1x16x16xf32> to vector<16x16xf32>
    %103 = vector.shape_cast %100 : vector<16x16xf32> to vector<1x16x16xf32>
    tpu.vector_store %arg7[%c10, %c0_80, %c0_81], %103 {strides = array<i32>} : memref<16x16x16xf32, #tpu.memory_space<vmem>>, vector<1x16x16xf32>,
    %c0_82 = arith.constant 0 : index
    %c176 = arith.constant 176 : index
    %104 = vector.load %arg8[%c0_82, %c176] : memref<16x256xf32, #tpu.memory_space<vmem>>, vector<16x16xf32>
    %c176_83 = arith.constant 176 : index
    %c0_84 = arith.constant 0 : index
    %105 = vector.load %arg4[%c176_83, %c0_84] : memref<256x16xf32, #tpu.memory_space<vmem>>, vector<16x16xf32>
    %cst_85 = arith.constant dense<0.000000e+00> : vector<16x16xf32>
    %106 = tpu.matmul %104, %105, %cst_85 {dimension_numbers = #tpu.dot_dimension_numbers<[1], [0], [0], [1], [0, 0, 1, 1], [], []>} : vector<16x16xf32>, vector<16x16xf32>, vector<16x16xf32> -> vector<16x16xf32>
    %107 = arith.subf %106, %15 : vector<16x16xf32>
    %108 = arith.mulf %107, %107 : vector<16x16xf32>
    %c11 = arith.constant 11 : index
    %c0_86 = arith.constant 0 : index
    %c0_87 = arith.constant 0 : index
    %109 = vector.load %arg7[%c11, %c0_86, %c0_87] : memref<16x16x16xf32, #tpu.memory_space<vmem>>, vector<1x16x16xf32>
    %110 = vector.shape_cast %109 : vector<1x16x16xf32> to vector<16x16xf32>
    %111 = vector.shape_cast %108 : vector<16x16xf32> to vector<1x16x16xf32>
    tpu.vector_store %arg7[%c11, %c0_86, %c0_87], %111 {strides = array<i32>} : memref<16x16x16xf32, #tpu.memory_space<vmem>>, vector<1x16x16xf32>,
    %c0_88 = arith.constant 0 : index
    %c192 = arith.constant 192 : index
    %112 = vector.load %arg8[%c0_88, %c192] : memref<16x256xf32, #tpu.memory_space<vmem>>, vector<16x16xf32>
    %c192_89 = arith.constant 192 : index
    %c0_90 = arith.constant 0 : index
    %113 = vector.load %arg4[%c192_89, %c0_90] : memref<256x16xf32, #tpu.memory_space<vmem>>, vector<16x16xf32>
    %cst_91 = arith.constant dense<0.000000e+00> : vector<16x16xf32>
    %114 = tpu.matmul %112, %113, %cst_91 {dimension_numbers = #tpu.dot_dimension_numbers<[1], [0], [0], [1], [0, 0, 1, 1], [], []>} : vector<16x16xf32>, vector<16x16xf32>, vector<16x16xf32> -> vector<16x16xf32>
    %115 = arith.subf %114, %15 : vector<16x16xf32>
    %116 = arith.mulf %115, %115 : vector<16x16xf32>
    %c12 = arith.constant 12 : index
    %c0_92 = arith.constant 0 : index
    %c0_93 = arith.constant 0 : index
    %117 = vector.load %arg7[%c12, %c0_92, %c0_93] : memref<16x16x16xf32, #tpu.memory_space<vmem>>, vector<1x16x16xf32>
    %118 = vector.shape_cast %117 : vector<1x16x16xf32> to vector<16x16xf32>
    %119 = vector.shape_cast %116 : vector<16x16xf32> to vector<1x16x16xf32>
    tpu.vector_store %arg7[%c12, %c0_92, %c0_93], %119 {strides = array<i32>} : memref<16x16x16xf32, #tpu.memory_space<vmem>>, vector<1x16x16xf32>,
    %c0_94 = arith.constant 0 : index
    %c208 = arith.constant 208 : index
    %120 = vector.load %arg8[%c0_94, %c208] : memref<16x256xf32, #tpu.memory_space<vmem>>, vector<16x16xf32>
    %c208_95 = arith.constant 208 : index
    %c0_96 = arith.constant 0 : index
    %121 = vector.load %arg4[%c208_95, %c0_96] : memref<256x16xf32, #tpu.memory_space<vmem>>, vector<16x16xf32>
    %cst_97 = arith.constant dense<0.000000e+00> : vector<16x16xf32>
    %122 = tpu.matmul %120, %121, %cst_97 {dimension_numbers = #tpu.dot_dimension_numbers<[1], [0], [0], [1], [0, 0, 1, 1], [], []>} : vector<16x16xf32>, vector<16x16xf32>, vector<16x16xf32> -> vector<16x16xf32>
    %123 = arith.subf %122, %15 : vector<16x16xf32>
    %124 = arith.mulf %123, %123 : vector<16x16xf32>
    %c13 = arith.constant 13 : index
    %c0_98 = arith.constant 0 : index
    %c0_99 = arith.constant 0 : index
    %125 = vector.load %arg7[%c13, %c0_98, %c0_99] : memref<16x16x16xf32, #tpu.memory_space<vmem>>, vector<1x16x16xf32>
    %126 = vector.shape_cast %125 : vector<1x16x16xf32> to vector<16x16xf32>
    %127 = vector.shape_cast %124 : vector<16x16xf32> to vector<1x16x16xf32>
    tpu.vector_store %arg7[%c13, %c0_98, %c0_99], %127 {strides = array<i32>} : memref<16x16x16xf32, #tpu.memory_space<vmem>>, vector<1x16x16xf32>,
    %c0_100 = arith.constant 0 : index
    %c224 = arith.constant 224 : index
    %128 = vector.load %arg8[%c0_100, %c224] : memref<16x256xf32, #tpu.memory_space<vmem>>, vector<16x16xf32>
    %c224_101 = arith.constant 224 : index
    %c0_102 = arith.constant 0 : index
    %129 = vector.load %arg4[%c224_101, %c0_102] : memref<256x16xf32, #tpu.memory_space<vmem>>, vector<16x16xf32>
    %cst_103 = arith.constant dense<0.000000e+00> : vector<16x16xf32>
    %130 = tpu.matmul %128, %129, %cst_103 {dimension_numbers = #tpu.dot_dimension_numbers<[1], [0], [0], [1], [0, 0, 1, 1], [], []>} : vector<16x16xf32>, vector<16x16xf32>, vector<16x16xf32> -> vector<16x16xf32>
    %131 = arith.subf %130, %15 : vector<16x16xf32>
    %132 = arith.mulf %131, %131 : vector<16x16xf32>
    %c14 = arith.constant 14 : index
    %c0_104 = arith.constant 0 : index
    %c0_105 = arith.constant 0 : index
    %133 = vector.load %arg7[%c14, %c0_104, %c0_105] : memref<16x16x16xf32, #tpu.memory_space<vmem>>, vector<1x16x16xf32>
    %134 = vector.shape_cast %133 : vector<1x16x16xf32> to vector<16x16xf32>
    %135 = vector.shape_cast %132 : vector<16x16xf32> to vector<1x16x16xf32>
    tpu.vector_store %arg7[%c14, %c0_104, %c0_105], %135 {strides = array<i32>} : memref<16x16x16xf32, #tpu.memory_space<vmem>>, vector<1x16x16xf32>,
    %c0_106 = arith.constant 0 : index
    %c240 = arith.constant 240 : index
    %136 = vector.load %arg8[%c0_106, %c240] : memref<16x256xf32, #tpu.memory_space<vmem>>, vector<16x16xf32>
    %c240_107 = arith.constant 240 : index
    %c0_108 = arith.constant 0 : index
    %137 = vector.load %arg4[%c240_107, %c0_108] : memref<256x16xf32, #tpu.memory_space<vmem>>, vector<16x16xf32>
    %cst_109 = arith.constant dense<0.000000e+00> : vector<16x16xf32>
    %138 = tpu.matmul %136, %137, %cst_109 {dimension_numbers = #tpu.dot_dimension_numbers<[1], [0], [0], [1], [0, 0, 1, 1], [], []>} : vector<16x16xf32>, vector<16x16xf32>, vector<16x16xf32> -> vector<16x16xf32>
    %139 = arith.subf %138, %15 : vector<16x16xf32>
    %140 = arith.mulf %139, %139 : vector<16x16xf32>
    %c15 = arith.constant 15 : index
    %c0_110 = arith.constant 0 : index
    %c0_111 = arith.constant 0 : index
    %141 = vector.load %arg7[%c15, %c0_110, %c0_111] : memref<16x16x16xf32, #tpu.memory_space<vmem>>, vector<1x16x16xf32>
    %142 = vector.shape_cast %141 : vector<1x16x16xf32> to vector<16x16xf32>
    %143 = vector.shape_cast %140 : vector<16x16xf32> to vector<1x16x16xf32>
    tpu.vector_store %arg7[%c15, %c0_110, %c0_111], %143 {strides = array<i32>} : memref<16x16x16xf32, #tpu.memory_space<vmem>>, vector<1x16x16xf32>,
    return
  }
  func.func @transform_0(%arg0: i32, %arg1: i32) -> (i32, i32) {
    %c0_i32 = arith.constant 0 : i32
    %c0_i32_0 = arith.constant 0 : i32
    %c0_i32_1 = arith.constant 0 : i32
    return %c0_i32, %c0_i32_0 : i32, i32
  }
  func.func @transform_1(%arg0: i32, %arg1: i32) -> (i32, i32) {
    %c0_i32 = arith.constant 0 : i32
    %c0_i32_0 = arith.constant 0 : i32
    return %c0_i32, %arg0 : i32, i32
  }
  func.func @transform_2(%arg0: i32, %arg1: i32) -> (i32, i32) {
    %c0_i32 = arith.constant 0 : i32
    %c0_i32_0 = arith.constant 0 : i32
    return %arg0, %c0_i32 : i32, i32
  }
  func.func @transform_3(%arg0: i32, %arg1: i32) -> (i32, i32) {
    %c0_i32 = arith.constant 0 : i32
    %c0_i32_0 = arith.constant 0 : i32
    return %arg1, %c0_i32 : i32, i32
  }
  func.func @transform_4(%arg0: i32, %arg1: i32) -> (i32, i32) {
    %c0_i32 = arith.constant 0 : i32
    %c0_i32_0 = arith.constant 0 : i32
    return %arg1, %c0_i32 : i32, i32
  }
  func.func @transform_5(%arg0: i32, %arg1: i32) -> (i32, i32, i32) {
    %c0_i32 = arith.constant 0 : i32
    %c0_i32_0 = arith.constant 0 : i32
    return %arg0, %arg1, %c0_i32 : i32, i32, i32
  }
}

</mosaic_0001>

<llo_original>
// kernel: random_walk_embed_p2g.1
$region0: #{random_walk_embed_p2g.1}
  #allocation0 [shape = 'u32[]', space=smem, size = 0x4, offset = 0x4, fixed_abs, tag = 'smem constant byte address 0x4 - core index']
  #allocation1 [shape = 'u32[144,128]{1,0:T(1,128)}', space=vmem, size = 0x12000, scoped, tag = 'internal scratch']
  #allocation2 [shape = 'f32[16,256]{1,0:T(8,128)}', space=vmem, size = 0x4000, scoped, tag = 'scratch operand']
  %s0 = inlined_call_operand.vmem [shape: f32[16,256], index: 0, kind: input, shape index: {}]
  %s1 = inlined_call_operand.vmem [shape: f32[16,512], index: 1, kind: input, shape index: {}]
  %s2 = inlined_call_operand.vmem [shape: f32[512,16], index: 2, kind: input, shape index: {}]
  %s3 = inlined_call_operand.vmem [shape: f32[512,16], index: 3, kind: input, shape index: {}]
  %s4 = inlined_call_operand.vmem [shape: f32[32,16], index: 4, kind: input, shape index: {}]
  %s5 = inlined_call_operand.vmem [shape: f32[32,32,16], index: 5, kind: output, shape index: {}]
  %s6 = sld [smem:[#allocation0]]
  $region110: #{random_walk_embed_p2g.1} parent=0
    _
  %s8 = ssub.s32 1, %s6
  %s9 = scalar_select 0, %s8, %s6
  $region1: #{random_walk_embed_p2g.1} parent=0
    #allocation3 [shape = 'u8[32768]{0}', space=vmem, size = 0x8000, scoped, tag = 'input window, operand 1']
    #allocation4 [shape = 'u8[262144]{0}', space=vmem, size = 0x40000, scoped, tag = 'output window, operand 0']
    loop: start=0, step=1, limit=6
    $region2: #{random_walk_embed_p2g.1} parent=1 // loop_pre_header
      _
    $region3: #{random_walk_embed_p2g.1} parent=1 // loop_header
      %s11 = sphi 0, %s15
      %p12 = scmp.ge.s32.totalorder %s11, 6
      %s18 = sphi 0, %s30
      %s19 = sphi 0, %s26
      %s20 = sphi 0, %s18
      %s21 = sphi 0, %s19
      %s22 = sphi 0, %s20
      %s23 = sphi 0, %s21
      %s31 = sphi 0, %s31
      %s33 = sphi 0, %s31
      %s34 = sphi 0, %s33
      %s48 = sphi 0, %s34
      %s54 = sphi 0, %s56
      %s57 = sphi 0, %s54
      %s58 = sphi 0, %s57
      %s74 = sphi 0, %s58
      %s80 = sphi 0, %s82
      %s83 = sphi 0, %s80
      %s84 = sphi 0, %s83
      %s100 = sphi 0, %s84
      %s106 = sphi 0, %s108
      %s109 = sphi 0, %s106
      %s110 = sphi 0, %s109
      %s126 = sphi 0, %s110
      %s132 = sphi 0, %s134
      %s135 = sphi 0, %s132
      %s136 = sphi 0, %s135
      %s152 = sphi 0, %s136
      %s160 = sphi 0, %s162
      %s163 = sphi 0, %s160
      %s164 = sphi 0, %s163
      %s180 = sphi 0, %s164
    $region4: #{random_walk_embed_p2g.1} parent=1 // loop_header_branch
      %14 = sbr.rel (%p12) target = $region8
    $region5: #{random_walk_embed_p2g.1} parent=1 // loop_body
      %s16 = ssub.s32 %s11, 1
      %s17 = ssub.s32 %s11, 2
      %s24 = sadd.s32 1, %s19
      %p25 = scmp.ge.s32.totalorder %s24, 2
      %s26 = scalar_select %p25, 0, %s24
      %s27 = sadd.s32 1, %s18
      %s28 = scalar_select %p25, %s27, %s18
      %p29 = scmp.ge.s32.totalorder %s28, 2
      %s30 = scalar_select %p29, 0, %s28
      %s32 = sadd.s32 %s31, 1
      %p35 = scmp.eq.s32.totalorder %s11, 3
      %p36 = scmp.ne.s32.totalorder %s31, %s33
      %p37 = scmp.eq.s32.totalorder %s11, 0
      %p38 = por %p36, %p37
      %p39 = scmp.ne.s32.totalorder %s31, %s33
      %p40 = scmp.eq.s32.totalorder %s16, 3
      %p41 = por %p39, %p40
      %p42 = scmp.ne.s32.totalorder %s33, %s34
      %p43 = scmp.eq.s32.totalorder %s16, 0
      %p44 = por %p42, %p43
      %p45 = scmp.ne.s32.totalorder %s33, %s34
      %p46 = scmp.eq.s32.totalorder %s17, 3
      %p47 = por %p45, %p46
      %p49 = scmp.ne.s32.totalorder %s34, %s48
      %p50 = scmp.eq.s32.totalorder %s17, 0
      %p51 = por %p49, %p50
      %s52 = ssub.s32 %s18, %s30
      %p53 = scmp.eq.s32.totalorder %s52, 0
      %s55 = sadd.s32 %s54, 1
      %s56 = scalar_select %p53, %s54, %s55
      %p59 = pneg %p53
      %p60 = scmp.eq.s32.totalorder %s11, 3
      %p61 = por %p59, %p60
      %p62 = scmp.ne.s32.totalorder %s54, %s57
      %p63 = scmp.eq.s32.totalorder %s11, 0
      %p64 = por %p62, %p63
      %p65 = scmp.ne.s32.totalorder %s54, %s57
      %p66 = scmp.eq.s32.totalorder %s16, 3
      %p67 = por %p65, %p66
      %p68 = scmp.ne.s32.totalorder %s57, %s58
      %p69 = scmp.eq.s32.totalorder %s16, 0
      %p70 = por %p68, %p69
      %p71 = scmp.ne.s32.totalorder %s57, %s58
      %p72 = scmp.eq.s32.totalorder %s17, 3
      %p73 = por %p71, %p72
      %p75 = scmp.ne.s32.totalorder %s58, %s74
      %p76 = scmp.eq.s32.totalorder %s17, 0
      %p77 = por %p75, %p76
      %s78 = ssub.s32 %s18, %s30
      %p79 = scmp.eq.s32.totalorder %s78, 0
      %s81 = sadd.s32 %s80, 1
      %s82 = scalar_select %p79, %s80, %s81
      %p85 = pneg %p79
      %p86 = scmp.eq.s32.totalorder %s11, 3
      %p87 = por %p85, %p86
      %p88 = scmp.ne.s32.totalorder %s80, %s83
      %p89 = scmp.eq.s32.totalorder %s11, 0
      %p90 = por %p88, %p89
      %p91 = scmp.ne.s32.totalorder %s80, %s83
      %p92 = scmp.eq.s32.totalorder %s16, 3
      %p93 = por %p91, %p92
      %p94 = scmp.ne.s32.totalorder %s83, %s84
      %p95 = scmp.eq.s32.totalorder %s16, 0
      %p96 = por %p94, %p95
      %p97 = scmp.ne.s32.totalorder %s83, %s84
      %p98 = scmp.eq.s32.totalorder %s17, 3
      %p99 = por %p97, %p98
      %p101 = scmp.ne.s32.totalorder %s84, %s100
      %p102 = scmp.eq.s32.totalorder %s17, 0
      %p103 = por %p101, %p102
      %s104 = ssub.s32 %s19, %s26
      %p105 = scmp.eq.s32.totalorder %s104, 0
      %s107 = sadd.s32 %s106, 1
      %s108 = scalar_select %p105, %s106, %s107
      %p111 = pneg %p105
      %p112 = scmp.eq.s32.totalorder %s11, 3
      %p113 = por %p111, %p112
      %p114 = scmp.ne.s32.totalorder %s106, %s109
      %p115 = scmp.eq.s32.totalorder %s11, 0
      %p116 = por %p114, %p115
      %p117 = scmp.ne.s32.totalorder %s106, %s109
      %p118 = scmp.eq.s32.totalorder %s16, 3
      %p119 = por %p117, %p118
      %p120 = scmp.ne.s32.totalorder %s109, %s110
      %p121 = scmp.eq.s32.totalorder %s16, 0
      %p122 = por %p120, %p121
      %p123 = scmp.ne.s32.totalorder %s109, %s110
      %p124 = scmp.eq.s32.totalorder %s17, 3
      %p125 = por %p123, %p124
      %p127 = scmp.ne.s32.totalorder %s110, %s126
      %p128 = scmp.eq.s32.totalorder %s17, 0
      %p129 = por %p127, %p128
      %s130 = ssub.s32 %s19, %s26
      %p131 = scmp.eq.s32.totalorder %s130, 0
      %s133 = sadd.s32 %s132, 1
      %s134 = scalar_select %p131, %s132, %s133
      %p137 = pneg %p131
      %p138 = scmp.eq.s32.totalorder %s11, 3
      %p139 = por %p137, %p138
      %p140 = scmp.ne.s32.totalorder %s132, %s135
      %p141 = scmp.eq.s32.totalorder %s11, 0
      %p142 = por %p140, %p141
      %p143 = scmp.ne.s32.totalorder %s132, %s135
      %p144 = scmp.eq.s32.totalorder %s16, 3
      %p145 = por %p143, %p144
      %p146 = scmp.ne.s32.totalorder %s135, %s136
      %p147 = scmp.eq.s32.totalorder %s16, 0
      %p148 = por %p146, %p147
      %p149 = scmp.ne.s32.totalorder %s135, %s136
      %p150 = scmp.eq.s32.totalorder %s17, 3
      %p151 = por %p149, %p150
      %p153 = scmp.ne.s32.totalorder %s136, %s152
      %p154 = scmp.eq.s32.totalorder %s17, 0
      %p155 = por %p153, %p154
      %s156 = ssub.s32 %s18, %s30
      %s157 = ssub.s32 %s19, %s26
      %s158 = sor.u32 %s156, %s157
      %p159 = scmp.eq.s32.totalorder %s158, 0
      %s161 = sadd.s32 %s160, 1
      %s162 = scalar_select %p159, %s160, %s161
      %p165 = pneg %p159
      %p166 = scmp.eq.s32.totalorder %s11, 3
      %p167 = por %p165, %p166
      %p168 = scmp.ne.s32.totalorder %s160, %s163
      %p169 = scmp.eq.s32.totalorder %s11, 0
      %p170 = por %p168, %p169
      %p171 = scmp.ne.s32.totalorder %s160, %s163
      %p172 = scmp.eq.s32.totalorder %s16, 3
      %p173 = por %p171, %p172
      %p174 = scmp.ne.s32.totalorder %s163, %s164
      %p175 = scmp.eq.s32.totalorder %s16, 0
      %p176 = por %p174, %p175
      %p177 = scmp.ne.s32.totalorder %s163, %s164
      %p178 = scmp.eq.s32.totalorder %s17, 3
      %p179 = por %p177, %p178
      %p181 = scmp.ne.s32.totalorder %s164, %s180
      %p182 = scmp.eq.s32.totalorder %s17, 0
      %p183 = por %p181, %p182
      %p184 = scmp.le.s32.totalorder 1, %s11
      %p185 = scmp.lt.s32.totalorder %s11, 5
      %p186 = pnand %p184, %p185
      %p187 = pneg %p186
      // Predicated region
      $region9: #{random_walk_embed_p2g.1} parent=5 // pred_check
        _
      $region10: #{random_walk_embed_p2g.1} parent=5 // pred_check_branch
        %189 = sbr.rel (%p186) target = $region12
      $region11: #{random_walk_embed_p2g.1} parent=5 // pred_region
        %s190 = ssub.s32 %s11, 1
        // Predicated region
        $region13: #{random_walk_embed_p2g.1} parent=11 // pred_check
          %p191 = pneg %p44
        $region14: #{random_walk_embed_p2g.1} parent=11 // pred_check_branch
          %193 = sbr.rel (%p191) target = $region16
        $region15: #{random_walk_embed_p2g.1} parent=11 // pred_region
          _
        $region16: #{random_walk_embed_p2g.1} parent=11 // pred_fallthru
          _
      $region12: #{random_walk_embed_p2g.1} parent=5 // pred_fallthru
        _
      %p194 = scmp.lt.s32.totalorder %s11, 4
      // Predicated region
      $region17: #{random_walk_embed_p2g.1} parent=5 // pred_check
        %p195 = pneg %p194
      $region18: #{random_walk_embed_p2g.1} parent=5 // pred_check_branch
        %197 = sbr.rel (%p195) target = $region20
      $region19: #{random_walk_embed_p2g.1} parent=5 // pred_region
        // Predicated region
        $region21: #{random_walk_embed_p2g.1} parent=19 // pred_check
          %p198 = pneg %p64
        $region22: #{random_walk_embed_p2g.1} parent=19 // pred_check_branch
          %200 = sbr.rel (%p198) target = $region24
        $region23: #{random_walk_embed_p2g.1} parent=19 // pred_region
          %s201 = sand.u32 %s54, 1
          %s202 = sand.u32 %s54, 1
          %s203 = smul.addr %s202, 32
          %s204 = scalar_lea.vmem [#allocation3], %s203
          %s205 = smul.u32 2, %s18
          %s206 = smul.addr %s205, 8
          %s207 = scalar_lea.vmem %s1, %s206
          // Predicated region
          $region25: #{random_walk_embed_p2g.1} parent=23 // pred_check
            _
          $region26: #{random_walk_embed_p2g.1} parent=23 // pred_check_branch
            %209 = sbr.rel (0) target = $region28
          $region27: #{random_walk_embed_p2g.1} parent=23 // pred_region
            // Predicated region
            $region29: #{random_walk_embed_p2g.1} parent=27 // pred_check
              _
            $region30: #{random_walk_embed_p2g.1} parent=27 // pred_check_branch
              %211 = sbr.rel (0) target = $region32
            $region31: #{random_walk_embed_p2g.1} parent=27 // pred_region
              loop: start=0, step=1, limit=1
              $region33: #{random_walk_embed_p2g.1} parent=31 // loop_pre_header
                _
              $region34: #{random_walk_embed_p2g.1} parent=31 // loop_header
                %s213 = sphi 0, %s217
                %p214 = scmp.ge.s32.totalorder %s213, 1
                %s218 = sphi %s207, %s207
                %s219 = sphi %s204, %s204
              $region35: #{random_walk_embed_p2g.1} parent=31 // loop_header_branch
                %216 = sbr.rel (%p214) target = $region39
              $region36: #{random_walk_embed_p2g.1} parent=31 // loop_body
                %v220 = vld [vmem:[%s218] sm:$0xff]
                %221 = vst [vmem:[%s219] sm:$0xff] %v220
                %v222 = vld [vmem:[%s218 + $0x8] sm:$0xff]
                %223 = vst [vmem:[%s219 + $0x8] sm:$0xff] %v222
                %v224 = vld [vmem:[%s218 + $0x20] sm:$0xff]
                %225 = vst [vmem:[%s219 + $0x10] sm:$0xff] %v224
                %v226 = vld [vmem:[%s218 + $0x28] sm:$0xff]
                %227 = vst [vmem:[%s219 + $0x18] sm:$0xff] %v226
              $region37: #{random_walk_embed_p2g.1} parent=31 // loop_footer
                %s217 = sadd.s32 1, %s213
              $region38: #{random_walk_embed_p2g.1} parent=31 // loop_footer_branch
                %212 = sbr.rel target = $region34
              $region39: #{random_walk_embed_p2g.1} parent=31 // loop_exit
                _
            $region32: #{random_walk_embed_p2g.1} parent=27 // pred_fallthru
              _
            // Predicated region
            $region40: #{random_walk_embed_p2g.1} parent=27 // pred_check
              _
            $region41: #{random_walk_embed_p2g.1} parent=27 // pred_check_branch
              %229 = sbr.rel target = $region43
            $region42: #{random_walk_embed_p2g.1} parent=27 // pred_region
              _
            $region43: #{random_walk_embed_p2g.1} parent=27 // pred_fallthru
              _
          $region28: #{random_walk_embed_p2g.1} parent=23 // pred_fallthru
            _
          %230 = vnop
        $region24: #{random_walk_embed_p2g.1} parent=19 // pred_fallthru
          _
        // Predicated region
        $region44: #{random_walk_embed_p2g.1} parent=19 // pred_check
          %p231 = pneg %p90
        $region45: #{random_walk_embed_p2g.1} parent=19 // pred_check_branch
          %233 = sbr.rel (%p231) target = $region47
        $region46: #{random_walk_embed_p2g.1} parent=19 // pred_region
          %s234 = smul.u32 32, %s18
          %p235 = scmp.lt.s32.totalorder %s234, 63
          %s236 = scalar_select %p235, %s234, 63
          %s237 = smul.addr %s236, 8
          %s238 = scalar_lea.vmem %s2, %s237
          %s239 = smul.u32 32, %s18
        $region47: #{random_walk_embed_p2g.1} parent=19 // pred_fallthru
          _
        // Predicated region
        $region48: #{random_walk_embed_p2g.1} parent=19 // pred_check
          %p240 = pneg %p116
        $region49: #{random_walk_embed_p2g.1} parent=19 // pred_check_branch
          %242 = sbr.rel (%p240) target = $region51
        $region50: #{random_walk_embed_p2g.1} parent=19 // pred_region
          %s243 = smul.u32 32, %s19
          %p244 = scmp.lt.s32.totalorder %s243, 63
          %s245 = scalar_select %p244, %s243, 63
          %s246 = smul.addr %s245, 8
          %s247 = scalar_lea.vmem %s3, %s246
          %s248 = smul.u32 32, %s19
        $region51: #{random_walk_embed_p2g.1} parent=19 // pred_fallthru
          _
        // Predicated region
        $region52: #{random_walk_embed_p2g.1} parent=19 // pred_check
          %p249 = pneg %p142
        $region53: #{random_walk_embed_p2g.1} parent=19 // pred_check_branch
          %251 = sbr.rel (%p249) target = $region55
        $region54: #{random_walk_embed_p2g.1} parent=19 // pred_region
          %s252 = smul.u32 2, %s19
          %p253 = scmp.lt.s32.totalorder %s252, 3
          %s254 = scalar_select %p253, %s252, 3
          %s255 = smul.addr %s254, 8
          %s256 = scalar_lea.vmem %s4, %s255
          %s257 = smul.u32 2, %s19
        $region55: #{random_walk_embed_p2g.1} parent=19 // pred_fallthru
          _
      $region20: #{random_walk_embed_p2g.1} parent=5 // pred_fallthru
        _
      %p258 = scmp.le.s32.totalorder 1, %s11
      %p259 = scmp.lt.s32.totalorder %s11, 5
      %p260 = pnand %p258, %p259
      %p261 = pneg %p260
      // Predicated region
      $region56: #{random_walk_embed_p2g.1} parent=5 // pred_check
        _
      $region57: #{random_walk_embed_p2g.1} parent=5 // pred_check_branch
        %263 = sbr.rel (%p260) target = $region59
      $region58: #{random_walk_embed_p2g.1} parent=5 // pred_region
        %s264 = ssub.s32 %s11, 1
        %s265 = sand.u32 %s57, 1
        %s266 = sand.u32 %s57, 1
        %s267 = smul.addr %s266, 32
        %s268 = scalar_lea.vmem [#allocation3], %s267
        // Predicated region
        $region60: #{random_walk_embed_p2g.1} parent=58 // pred_check
          %p269 = pneg %p70
        $region61: #{random_walk_embed_p2g.1} parent=58 // pred_check_branch
          %271 = sbr.rel (%p269) target = $region63
        $region62: #{random_walk_embed_p2g.1} parent=58 // pred_region
          _
        $region63: #{random_walk_embed_p2g.1} parent=58 // pred_fallthru
          _
        %p272 = pneg %p44
        %p273 = pneg %p41
        %s274 = sand.u32 %s57, 1
        %s275 = sand.u32 %s57, 1
        %s276 = smul.addr %s275, 32
        %s277 = scalar_lea.vmem [#allocation3], %s276
        %p278 = pneg %p70
        %p279 = pneg %p67
        %s280 = smul.u32 32, %s20
        %p281 = scmp.lt.s32.totalorder %s280, 63
        %s282 = scalar_select %p281, %s280, 63
        %s283 = smul.addr %s282, 8
        %s284 = scalar_lea.vmem %s2, %s283
        %p285 = pneg %p96
        %p286 = pneg %p93
        %s287 = smul.u32 32, %s21
        %p288 = scmp.lt.s32.totalorder %s287, 63
        %s289 = scalar_select %p288, %s287, 63
        %s290 = smul.addr %s289, 8
        %s291 = scalar_lea.vmem %s3, %s290
        %p292 = pneg %p122
        %p293 = pneg %p119
        %s294 = smul.u32 2, %s21
        %p295 = scmp.lt.s32.totalorder %s294, 3
        %s296 = scalar_select %p295, %s294, 3
        %s297 = smul.addr %s296, 8
        %s298 = scalar_lea.vmem %s4, %s297
        %p299 = pneg %p148
        %p300 = pneg %p145
        %p301 = pneg %p176
        %p302 = pneg %p173
        %s303 = sand.u32 %s163, 1
        %s304 = sand.u32 %s163, 1
        %s305 = smul.addr %s304, 256
        %s306 = scalar_lea.vmem [#allocation4], %s305
        %s307 = smul.u32 2, %s20
        %s308 = smul.u32 32, %s20
        %p309 = scmp.lt.s32.totalorder %s308, 63
        %s310 = scalar_select %p309, %s308, 63
        %s311 = smul.addr %s310, 8
        %s312 = scalar_lea.vmem %s2, %s311
        %s313 = smul.u32 32, %s20
        %s314 = smul.u32 32, %s21
        %p315 = scmp.lt.s32.totalorder %s314, 63
        %s316 = scalar_select %p315, %s314, 63
        %s317 = smul.addr %s316, 8
        %s318 = scalar_lea.vmem %s3, %s317
        %s319 = smul.u32 32, %s21
        %s320 = smul.u32 2, %s21
        %p321 = scmp.lt.s32.totalorder %s320, 3
        %s322 = scalar_select %p321, %s320, 3
        %s323 = smul.addr %s322, 8
        %s324 = scalar_lea.vmem %s4, %s323
        %s325 = smul.u32 2, %s21
        %s326 = smul.u32 16, %s20
        %s327 = smul.u32 2, %s21
        %v328 = vld [vmem:[%s318] sm:$0xff]
        %v329 = vld [vmem:[%s318 + $0x8] sm:$0xff]
        %v330 = vld [vmem:[%s318 + $0x10] sm:$0xff]
        %v331 = vld [vmem:[%s318 + $0x18] sm:$0xff]
        %v332 = vld [vmem:[%s318 + $0x20] sm:$0xff]
        %v333 = vld [vmem:[%s318 + $0x28] sm:$0xff]
        %v334 = vld [vmem:[%s318 + $0x30] sm:$0xff]
        %v335 = vld [vmem:[%s318 + $0x38] sm:$0xff]
        %v336 = vld [vmem:[%s318 + $0x40] sm:$0xff]
        %v337 = vld [vmem:[%s318 + $0x48] sm:$0xff]
        %v338 = vld [vmem:[%s318 + $0x50] sm:$0xff]
        %v339 = vld [vmem:[%s318 + $0x58] sm:$0xff]
        %v340 = vld [vmem:[%s318 + $0x60] sm:$0xff]
        %v341 = vld [vmem:[%s318 + $0x68] sm:$0xff]
        %v342 = vld [vmem:[%s318 + $0x70] sm:$0xff]
        %v343 = vld [vmem:[%s318 + $0x78] sm:$0xff]
        %v344 = vld [vmem:[%s318 + $0x80] sm:$0xff]
        %v345 = vld [vmem:[%s318 + $0x88] sm:$0xff]
        %v346 = vld [vmem:[%s318 + $0x90] sm:$0xff]
        %v347 = vld [vmem:[%s318 + $0x98] sm:$0xff]
        %v348 = vld [vmem:[%s318 + $0xa0] sm:$0xff]
        %v349 = vld [vmem:[%s318 + $0xa8] sm:$0xff]
        %v350 = vld [vmem:[%s318 + $0xb0] sm:$0xff]
        %v351 = vld [vmem:[%s318 + $0xb8] sm:$0xff]
        %v352 = vld [vmem:[%s318 + $0xc0] sm:$0xff]
        %v353 = vld [vmem:[%s318 + $0xc8] sm:$0xff]
        %v354 = vld [vmem:[%s318 + $0xd0] sm:$0xff]
        %v355 = vld [vmem:[%s318 + $0xd8] sm:$0xff]
        %v356 = vld [vmem:[%s318 + $0xe0] sm:$0xff]
        %v357 = vld [vmem:[%s318 + $0xe8] sm:$0xff]
        %v358 = vld [vmem:[%s318 + $0xf0] sm:$0xff]
        %v359 = vld [vmem:[%s318 + $0xf8] sm:$0xff]
        %v360 = vld [vmem:[%s268] sm:$0xff]
        %v361 = vld [vmem:[%s268 + $0x8] sm:$0xff]
        %v362 = vld [vmem:[%s268 + $0x10] sm:$0xff]
        %v363 = vld [vmem:[%s268 + $0x18] sm:$0xff]
        %vm364 = vcmask 130048
        %v366 = vsel %vm364, %v328, 0
        %v369 = vsel %vm364, %v329, 0
        %v372 = vsel %vm364, %v330, 0
        %v375 = vsel %vm364, %v331, 0
        %v378 = vsel %vm364, %v332, 0
        %v381 = vsel %vm364, %v333, 0
        %v384 = vsel %vm364, %v334, 0
        %v387 = vsel %vm364, %v335, 0
        %v390 = vsel %vm364, %v336, 0
        %v393 = vsel %vm364, %v337, 0
        %v396 = vsel %vm364, %v338, 0
        %v399 = vsel %vm364, %v339, 0
        %v402 = vsel %vm364, %v340, 0
        %v405 = vsel %vm364, %v341, 0
        %v408 = vsel %vm364, %v342, 0
        %v411 = vsel %vm364, %v343, 0
        %v414 = vsel %vm364, %v344, 0
        %v417 = vsel %vm364, %v345, 0
        %v420 = vsel %vm364, %v346, 0
        %v423 = vsel %vm364, %v347, 0
        %v426 = vsel %vm364, %v348, 0
        %v429 = vsel %vm364, %v349, 0
        %v432 = vsel %vm364, %v350, 0
        %v435 = vsel %vm364, %v351, 0
        %v438 = vsel %vm364, %v352, 0
        %v441 = vsel %vm364, %v353, 0
        %v444 = vsel %vm364, %v354, 0
        %v447 = vsel %vm364, %v355, 0
        %v450 = vsel %vm364, %v356, 0
        %v453 = vsel %vm364, %v357, 0
        %v456 = vsel %vm364, %v358, 0
        %v459 = vsel %vm364, %v359, 0
        %461 = vmatprep.subr.mxu0 %v361
        %462 = vmatpush1.msra.mxu0 %v360
        %463 = vmatprep.subr.mxu0 %v363
        %464 = vmatpush1.msra.mxu0 %v362
        %465 = vmatprep.subr.mxu0 0.0
        %466 = vmatpush1.msra.mxu0 0.0
        %467 = vmatprep.subr.mxu0 0.0
        %468 = vmatpush1.msra.mxu0 0.0
        %469 = vmatprep.subr.mxu0 0.0
        %470 = vmatpush1.msra.mxu0 0.0
        %471 = vmatprep.subr.mxu0 0.0
        %472 = vmatpush1.msra.mxu0 0.0
        %473 = vmatprep.subr.mxu0 0.0
        %474 = vmatpush1.msra.mxu0 0.0
        %475 = vmatprep.subr.mxu0 0.0
        %476 = vmatpush1.msra.mxu0 0.0
        %477 = vmatprep.subr.mxu0 0.0
        %478 = vmatpush1.msra.mxu0 0.0
        %479 = vmatprep.subr.mxu0 0.0
        %480 = vmatpush1.msra.mxu0 0.0
        %481 = vmatprep.subr.mxu0 0.0
        %482 = vmatpush1.msra.mxu0 0.0
        %483 = vmatprep.subr.mxu0 0.0
        %484 = vmatpush1.msra.mxu0 0.0
        %485 = vmatprep.subr.mxu0 0.0
        %486 = vmatpush1.msra.mxu0 0.0
        %487 = vmatprep.subr.mxu0 0.0
        %488 = vmatpush1.msra.mxu0 0.0
        %489 = vmatprep.subr.mxu0 0.0
        %490 = vmatpush1.msra.mxu0 0.0
        %491 = vmatprep.subr.mxu0 0.0
        %492 = vmatpush1.msra.mxu0 0.0
        %493 = vmatprep.subr.mxu0 0.0
        %494 = vmatpush1.msra.mxu0 0.0
        %495 = vmatprep.subr.mxu0 0.0
        %496 = vmatpush1.msra.mxu0 0.0
        %497 = vmatprep.subr.mxu0 0.0
        %498 = vmatpush1.msra.mxu0 0.0
        %499 = vmatprep.subr.mxu0 0.0
        %500 = vmatpush1.msra.mxu0 0.0
        %501 = vmatprep.subr.mxu0 0.0
        %502 = vmatpush1.msra.mxu0 0.0
        %503 = vmatprep.subr.mxu0 0.0
        %504 = vmatpush1.msra.mxu0 0.0
        %505 = vmatprep.subr.mxu0 0.0
        %506 = vmatpush1.msra.mxu0 0.0
        %507 = vmatprep.subr.mxu0 0.0
        %508 = vmatpush1.msra.mxu0 0.0
        %509 = vmatprep.subr.mxu0 0.0
        %510 = vmatpush1.msra.mxu0 0.0
        %511 = vmatprep.subr.mxu0 0.0
        %512 = vmatpush1.msra.mxu0 0.0
        %513 = vmatprep.subr.mxu0 0.0
        %514 = vmatpush1.msra.mxu0 0.0
        %515 = vmatprep.subr.mxu0 0.0
        %516 = vmatpush1.msra.mxu0 0.0
        %517 = vmatprep.subr.mxu0 0.0
        %518 = vmatpush1.msra.mxu0 0.0
        %519 = vmatprep.subr.mxu0 0.0
        %520 = vmatpush1.msra.mxu0 0.0
        %521 = vmatprep.subr.mxu0 0.0
        %522 = vmatpush1.msra.mxu0 0.0
        %523 = vmatprep.subr.mxu0 0.0
        %524 = vmatpush1.msra.mxu0 0.0
        %525 = vmatprep.mubr.f32.mxu0 0.0
        %526 = vmatmul.mubr.f32.gmra.mrb[0].mxu0 %v366
        %v527 = vpop.f32.mrb[0].mxu0
        %v528 = vadd.f32 0.0, %v527
        %v529 = vpop.f32.mrb[0].mxu0
        %v530 = vadd.f32 0.0, %v529
        %531 = vmatprep.mubr.f32.mxu0 0.0
        %532 = vmatmul.mubr.f32.gmra.mrb[0].mxu0 %v369
        %v533 = vpop.f32.mrb[0].mxu0
        %v534 = vadd.f32 0.0, %v533
        %v535 = vpop.f32.mrb[0].mxu0
        %v536 = vadd.f32 0.0, %v535
        %537 = vmatprep.mubr.f32.mxu0 0.0
        %538 = vmatmul.mubr.f32.gmra.mrb[0].mxu0 %v372
        %v539 = vpop.f32.mrb[0].mxu0
        %v540 = vadd.f32 0.0, %v539
        %v541 = vpop.f32.mrb[0].mxu0
        %v542 = vadd.f32 0.0, %v541
        %543 = vmatprep.mubr.f32.mxu0 0.0
        %544 = vmatmul.mubr.f32.gmra.mrb[0].mxu0 %v375
        %v545 = vpop.f32.mrb[0].mxu0
        %v546 = vadd.f32 0.0, %v545
        %v547 = vpop.f32.mrb[0].mxu0
        %v548 = vadd.f32 0.0, %v547
        %549 = vmatprep.mubr.f32.mxu0 0.0
        %550 = vmatmul.mubr.f32.gmra.mrb[0].mxu0 %v378
        %v551 = vpop.f32.mrb[0].mxu0
        %v552 = vadd.f32 0.0, %v551
        %v553 = vpop.f32.mrb[0].mxu0
        %v554 = vadd.f32 0.0, %v553
        %555 = vmatprep.mubr.f32.mxu0 0.0
        %556 = vmatmul.mubr.f32.gmra.mrb[0].mxu0 %v381
        %v557 = vpop.f32.mrb[0].mxu0
        %v558 = vadd.f32 0.0, %v557
        %v559 = vpop.f32.mrb[0].mxu0
        %v560 = vadd.f32 0.0, %v559
        %561 = vmatprep.mubr.f32.mxu0 0.0
        %562 = vmatmul.mubr.f32.gmra.mrb[0].mxu0 %v384
        %v563 = vpop.f32.mrb[0].mxu0
        %v564 = vadd.f32 0.0, %v563
        %v565 = vpop.f32.mrb[0].mxu0
        %v566 = vadd.f32 0.0, %v565
        %567 = vmatprep.mubr.f32.mxu0 0.0
        %568 = vmatmul.mubr.f32.gmra.mrb[0].mxu0 %v387
        %v569 = vpop.f32.mrb[0].mxu0
        %v570 = vadd.f32 0.0, %v569
        %v571 = vpop.f32.mrb[0].mxu0
        %v572 = vadd.f32 0.0, %v571
        %573 = vmatprep.mubr.f32.mxu0 0.0
        %574 = vmatmul.mubr.f32.gmra.mrb[0].mxu0 %v390
        %v575 = vpop.f32.mrb[0].mxu0
        %v576 = vadd.f32 0.0, %v575
        %v577 = vpop.f32.mrb[0].mxu0
        %v578 = vadd.f32 0.0, %v577
        %579 = vmatprep.mubr.f32.mxu0 0.0
        %580 = vmatmul.mubr.f32.gmra.mrb[0].mxu0 %v393
        %v581 = vpop.f32.mrb[0].mxu0
        %v582 = vadd.f32 0.0, %v581
        %v583 = vpop.f32.mrb[0].mxu0
        %v584 = vadd.f32 0.0, %v583
        %585 = vmatprep.mubr.f32.mxu0 0.0
        %586 = vmatmul.mubr.f32.gmra.mrb[0].mxu0 %v396
        %v587 = vpop.f32.mrb[0].mxu0
        %v588 = vadd.f32 0.0, %v587
        %v589 = vpop.f32.mrb[0].mxu0
        %v590 = vadd.f32 0.0, %v589
        %591 = vmatprep.mubr.f32.mxu0 0.0
        %592 = vmatmul.mubr.f32.gmra.mrb[0].mxu0 %v399
        %v593 = vpop.f32.mrb[0].mxu0
        %v594 = vadd.f32 0.0, %v593
        %v595 = vpop.f32.mrb[0].mxu0
        %v596 = vadd.f32 0.0, %v595
        %597 = vmatprep.mubr.f32.mxu0 0.0
        %598 = vmatmul.mubr.f32.gmra.mrb[0].mxu0 %v402
        %v599 = vpop.f32.mrb[0].mxu0
        %v600 = vadd.f32 0.0, %v599
        %v601 = vpop.f32.mrb[0].mxu0
        %v602 = vadd.f32 0.0, %v601
        %603 = vmatprep.mubr.f32.mxu0 0.0
        %604 = vmatmul.mubr.f32.gmra.mrb[0].mxu0 %v405
        %v605 = vpop.f32.mrb[0].mxu0
        %v606 = vadd.f32 0.0, %v605
        %v607 = vpop.f32.mrb[0].mxu0
        %v608 = vadd.f32 0.0, %v607
        %609 = vmatprep.mubr.f32.mxu0 0.0
        %610 = vmatmul.mubr.f32.gmra.mrb[0].mxu0 %v408
        %v611 = vpop.f32.mrb[0].mxu0
        %v612 = vadd.f32 0.0, %v611
        %v613 = vpop.f32.mrb[0].mxu0
        %v614 = vadd.f32 0.0, %v613
        %615 = vmatprep.mubr.f32.mxu0 0.0
        %616 = vmatmul.mubr.f32.gmra.mrb[0].mxu0 %v411
        %v617 = vpop.f32.mrb[0].mxu0
        %v618 = vadd.f32 0.0, %v617
        %v619 = vpop.f32.mrb[0].mxu0
        %v620 = vadd.f32 0.0, %v619
        %621 = vmatprep.mubr.f32.mxu0 0.0
        %622 = vmatmul.mubr.f32.gmra.mrb[0].mxu0 %v414
        %v623 = vpop.f32.mrb[0].mxu0
        %v624 = vadd.f32 0.0, %v623
        %v625 = vpop.f32.mrb[0].mxu0
        %v626 = vadd.f32 0.0, %v625
        %627 = vmatprep.mubr.f32.mxu0 0.0
        %628 = vmatmul.mubr.f32.gmra.mrb[0].mxu0 %v417
        %v629 = vpop.f32.mrb[0].mxu0
        %v630 = vadd.f32 0.0, %v629
        %v631 = vpop.f32.mrb[0].mxu0
        %v632 = vadd.f32 0.0, %v631
        %633 = vmatprep.mubr.f32.mxu0 0.0
        %634 = vmatmul.mubr.f32.gmra.mrb[0].mxu0 %v420
        %v635 = vpop.f32.mrb[0].mxu0
        %v636 = vadd.f32 0.0, %v635
        %v637 = vpop.f32.mrb[0].mxu0
        %v638 = vadd.f32 0.0, %v637
        %639 = vmatprep.mubr.f32.mxu0 0.0
        %640 = vmatmul.mubr.f32.gmra.mrb[0].mxu0 %v423
        %v641 = vpop.f32.mrb[0].mxu0
        %v642 = vadd.f32 0.0, %v641
        %v643 = vpop.f32.mrb[0].mxu0
        %v644 = vadd.f32 0.0, %v643
        %645 = vmatprep.mubr.f32.mxu0 0.0
        %646 = vmatmul.mubr.f32.gmra.mrb[0].mxu0 %v426
        %v647 = vpop.f32.mrb[0].mxu0
        %v648 = vadd.f32 0.0, %v647
        %v649 = vpop.f32.mrb[0].mxu0
        %v650 = vadd.f32 0.0, %v649
        %651 = vmatprep.mubr.f32.mxu0 0.0
        %652 = vmatmul.mubr.f32.gmra.mrb[0].mxu0 %v429
        %v653 = vpop.f32.mrb[0].mxu0
        %v654 = vadd.f32 0.0, %v653
        %v655 = vpop.f32.mrb[0].mxu0
        %v656 = vadd.f32 0.0, %v655
        %657 = vmatprep.mubr.f32.mxu0 0.0
        %658 = vmatmul.mubr.f32.gmra.mrb[0].mxu0 %v432
        %v659 = vpop.f32.mrb[0].mxu0
        %v660 = vadd.f32 0.0, %v659
        %v661 = vpop.f32.mrb[0].mxu0
        %v662 = vadd.f32 0.0, %v661
        %663 = vmatprep.mubr.f32.mxu0 0.0
        %664 = vmatmul.mubr.f32.gmra.mrb[0].mxu0 %v435
        %v665 = vpop.f32.mrb[0].mxu0
        %v666 = vadd.f32 0.0, %v665
        %v667 = vpop.f32.mrb[0].mxu0
        %v668 = vadd.f32 0.0, %v667
        %669 = vmatprep.mubr.f32.mxu0 0.0
        %670 = vmatmul.mubr.f32.gmra.mrb[0].mxu0 %v438
        %v671 = vpop.f32.mrb[0].mxu0
        %v672 = vadd.f32 0.0, %v671
        %v673 = vpop.f32.mrb[0].mxu0
        %v674 = vadd.f32 0.0, %v673
        %675 = vmatprep.mubr.f32.mxu0 0.0
        %676 = vmatmul.mubr.f32.gmra.mrb[0].mxu0 %v441
        %v677 = vpop.f32.mrb[0].mxu0
        %v678 = vadd.f32 0.0, %v677
        %v679 = vpop.f32.mrb[0].mxu0
        %v680 = vadd.f32 0.0, %v679
        %681 = vmatprep.mubr.f32.mxu0 0.0
        %682 = vmatmul.mubr.f32.gmra.mrb[0].mxu0 %v444
        %v683 = vpop.f32.mrb[0].mxu0
        %v684 = vadd.f32 0.0, %v683
        %v685 = vpop.f32.mrb[0].mxu0
        %v686 = vadd.f32 0.0, %v685
        %687 = vmatprep.mubr.f32.mxu0 0.0
        %688 = vmatmul.mubr.f32.gmra.mrb[0].mxu0 %v447
        %v689 = vpop.f32.mrb[0].mxu0
        %v690 = vadd.f32 0.0, %v689
        %v691 = vpop.f32.mrb[0].mxu0
        %v692 = vadd.f32 0.0, %v691
        %693 = vmatprep.mubr.f32.mxu0 0.0
        %694 = vmatmul.mubr.f32.gmra.mrb[0].mxu0 %v450
        %v695 = vpop.f32.mrb[0].mxu0
        %v696 = vadd.f32 0.0, %v695
        %v697 = vpop.f32.mrb[0].mxu0
        %v698 = vadd.f32 0.0, %v697
        %699 = vmatprep.mubr.f32.mxu0 0.0
        %700 = vmatmul.mubr.f32.gmra.mrb[0].mxu0 %v453
        %v701 = vpop.f32.mrb[0].mxu0
        %v702 = vadd.f32 0.0, %v701
        %v703 = vpop.f32.mrb[0].mxu0
        %v704 = vadd.f32 0.0, %v703
        %705 = vmatprep.mubr.f32.mxu0 0.0
        %706 = vmatmul.mubr.f32.gmra.mrb[0].mxu0 %v456
        %v707 = vpop.f32.mrb[0].mxu0
        %v708 = vadd.f32 0.0, %v707
        %v709 = vpop.f32.mrb[0].mxu0
        %v710 = vadd.f32 0.0, %v709
        %711 = vmatprep.mubr.f32.mxu0 0.0
        %712 = vmatmul.mubr.f32.gmra.mrb[0].mxu0 %v459
        %v713 = vpop.f32.mrb[0].mxu0
        %v714 = vadd.f32 0.0, %v713
        %v715 = vpop.f32.mrb[0].mxu0
        %v716 = vadd.f32 0.0, %v715
        %717 = vdwg.mxu0
        %v718 = vmul.f32 %v528, 1.442695
        %v719 = vpow.pop %v718
        %v720 = vmul.f32 %v530, 1.442695
        %v721 = vpow.pop %v720
        %v722 = vmul.f32 %v534, 1.442695
        %v723 = vpow.pop %v722
        %v724 = vmul.f32 %v536, 1.442695
        %v725 = vpow.pop %v724
        %v726 = vmul.f32 %v540, 1.442695
        %v727 = vpow.pop %v726
        %v728 = vmul.f32 %v542, 1.442695
        %v729 = vpow.pop %v728
        %v730 = vmul.f32 %v546, 1.442695
        %v731 = vpow.pop %v730
        %v732 = vmul.f32 %v548, 1.442695
        %v733 = vpow.pop %v732
        %v734 = vmul.f32 %v552, 1.442695
        %v735 = vpow.pop %v734
        %v736 = vmul.f32 %v554, 1.442695
        %v737 = vpow.pop %v736
        %v738 = vmul.f32 %v558, 1.442695
        %v739 = vpow.pop %v738
        %v740 = vmul.f32 %v560, 1.442695
        %v741 = vpow.pop %v740
        %v742 = vmul.f32 %v564, 1.442695
        %v743 = vpow.pop %v742
        %v744 = vmul.f32 %v566, 1.442695
        %v745 = vpow.pop %v744
        %v746 = vmul.f32 %v570, 1.442695
        %v747 = vpow.pop %v746
        %v748 = vmul.f32 %v572, 1.442695
        %v749 = vpow.pop %v748
        %v750 = vmul.f32 %v576, 1.442695
        %v751 = vpow.pop %v750
        %v752 = vmul.f32 %v578, 1.442695
        %v753 = vpow.pop %v752
        %v754 = vmul.f32 %v582, 1.442695
        %v755 = vpow.pop %v754
        %v756 = vmul.f32 %v584, 1.442695
        %v757 = vpow.pop %v756
        %v758 = vmul.f32 %v588, 1.442695
        %v759 = vpow.pop %v758
        %v760 = vmul.f32 %v590, 1.442695
        %v761 = vpow.pop %v760
        %v762 = vmul.f32 %v594, 1.442695
        %v763 = vpow.pop %v762
        %v764 = vmul.f32 %v596, 1.442695
        %v765 = vpow.pop %v764
        %v766 = vmul.f32 %v600, 1.442695
        %v767 = vpow.pop %v766
        %v768 = vmul.f32 %v602, 1.442695
        %v769 = vpow.pop %v768
        %v770 = vmul.f32 %v606, 1.442695
        %v771 = vpow.pop %v770
        %v772 = vmul.f32 %v608, 1.442695
        %v773 = vpow.pop %v772
        %v774 = vmul.f32 %v612, 1.442695
        %v775 = vpow.pop %v774
        %v776 = vmul.f32 %v614, 1.442695
        %v777 = vpow.pop %v776
        %v778 = vmul.f32 %v618, 1.442695
        %v779 = vpow.pop %v778
        %v780 = vmul.f32 %v620, 1.442695
        %v781 = vpow.pop %v780
        %v782 = vmul.f32 %v624, 1.442695
        %v783 = vpow.pop %v782
        %v784 = vmul.f32 %v626, 1.442695
        %v785 = vpow.pop %v784
        %v786 = vmul.f32 %v630, 1.442695
        %v787 = vpow.pop %v786
        %v788 = vmul.f32 %v632, 1.442695
        %v789 = vpow.pop %v788
        %v790 = vmul.f32 %v636, 1.442695
        %v791 = vpow.pop %v790
        %v792 = vmul.f32 %v638, 1.442695
        %v793 = vpow.pop %v792
        %v794 = vmul.f32 %v642, 1.442695
        %v795 = vpow.pop %v794
        %v796 = vmul.f32 %v644, 1.442695
        %v797 = vpow.pop %v796
        %v798 = vmul.f32 %v648, 1.442695
        %v799 = vpow.pop %v798
        %v800 = vmul.f32 %v650, 1.442695
        %v801 = vpow.pop %v800
        %v802 = vmul.f32 %v654, 1.442695
        %v803 = vpow.pop %v802
        %v804 = vmul.f32 %v656, 1.442695
        %v805 = vpow.pop %v804
        %v806 = vmul.f32 %v660, 1.442695
        %v807 = vpow.pop %v806
        %v808 = vmul.f32 %v662, 1.442695
        %v809 = vpow.pop %v808
        %v810 = vmul.f32 %v666, 1.442695
        %v811 = vpow.pop %v810
        %v812 = vmul.f32 %v668, 1.442695
        %v813 = vpow.pop %v812
        %v814 = vmul.f32 %v672, 1.442695
        %v815 = vpow.pop %v814
        %v816 = vmul.f32 %v674, 1.442695
        %v817 = vpow.pop %v816
        %v818 = vmul.f32 %v678, 1.442695
        %v819 = vpow.pop %v818
        %v820 = vmul.f32 %v680, 1.442695
        %v821 = vpow.pop %v820
        %v822 = vmul.f32 %v684, 1.442695
        %v823 = vpow.pop %v822
        %v824 = vmul.f32 %v686, 1.442695
        %v825 = vpow.pop %v824
        %v826 = vmul.f32 %v690, 1.442695
        %v827 = vpow.pop %v826
        %v828 = vmul.f32 %v692, 1.442695
        %v829 = vpow.pop %v828
        %v830 = vmul.f32 %v696, 1.442695
        %v831 = vpow.pop %v830
        %v832 = vmul.f32 %v698, 1.442695
        %v833 = vpow.pop %v832
        %v834 = vmul.f32 %v702, 1.442695
        %v835 = vpow.pop %v834
        %v836 = vmul.f32 %v704, 1.442695
        %v837 = vpow.pop %v836
        %v838 = vmul.f32 %v708, 1.442695
        %v839 = vpow.pop %v838
        %v840 = vmul.f32 %v710, 1.442695
        %v841 = vpow.pop %v840
        %v842 = vmul.f32 %v714, 1.442695
        %v843 = vpow.pop %v842
        %v844 = vmul.f32 %v716, 1.442695
        %v845 = vpow.pop %v844
        %v846 = vld [vmem:[%s0] sm:$0xff]
        %v847 = vld [vmem:[%s0 + $0x8] sm:$0xff]
        %v848 = vld [vmem:[%s0 + $0x10] sm:$0xff]
        %v849 = vld [vmem:[%s0 + $0x18] sm:$0xff]
        %850 = vmatprep.subr.mxu0 %v847
        %851 = vmatpush1.xpose.msra.mxu0 %v846
        %852 = vmatprep.subr.mxu0 %v849
        %853 = vmatpush1.xpose.msra.mxu0 %v848
        %854 = vmatprep.subr.mxu0 0.0
        %855 = vmatpush1.xpose.msra.mxu0 0.0
        %856 = vmatprep.subr.mxu0 0.0
        %857 = vmatpush1.xpose.msra.mxu0 0.0
        %858 = vmatprep.subr.mxu0 0.0
        %859 = vmatpush1.xpose.msra.mxu0 0.0
        %860 = vmatprep.subr.mxu0 0.0
        %861 = vmatpush1.xpose.msra.mxu0 0.0
        %862 = vmatprep.subr.mxu0 0.0
        %863 = vmatpush1.xpose.msra.mxu0 0.0
        %864 = vmatprep.subr.mxu0 0.0
        %865 = vmatpush1.xpose.msra.mxu0 0.0
        %866 = vmatprep.subr.mxu0 0.0
        %867 = vmatpush1.xpose.msra.mxu0 0.0
        %868 = vmatprep.subr.mxu0 0.0
        %869 = vmatpush1.xpose.msra.mxu0 0.0
        %870 = vmatprep.subr.mxu0 0.0
        %871 = vmatpush1.xpose.msra.mxu0 0.0
        %872 = vmatprep.subr.mxu0 0.0
        %873 = vmatpush1.xpose.msra.mxu0 0.0
        %874 = vmatprep.subr.mxu0 0.0
        %875 = vmatpush1.xpose.msra.mxu0 0.0
        %876 = vmatprep.subr.mxu0 0.0
        %877 = vmatpush1.xpose.msra.mxu0 0.0
        %878 = vmatprep.subr.mxu0 0.0
        %879 = vmatpush1.xpose.msra.mxu0 0.0
        %880 = vmatprep.subr.mxu0 0.0
        %881 = vmatpush1.xpose.msra.mxu0 0.0
        %882 = vmatprep.subr.mxu0 0.0
        %883 = vmatpush1.xpose.msra.mxu0 0.0
        %884 = vmatprep.subr.mxu0 0.0
        %885 = vmatpush1.xpose.msra.mxu0 0.0
        %886 = vmatprep.subr.mxu0 0.0
        %887 = vmatpush1.xpose.msra.mxu0 0.0
        %888 = vmatprep.subr.mxu0 0.0
        %889 = vmatpush1.xpose.msra.mxu0 0.0
        %890 = vmatprep.subr.mxu0 0.0
        %891 = vmatpush1.xpose.msra.mxu0 0.0
        %892 = vmatprep.subr.mxu0 0.0
        %893 = vmatpush1.xpose.msra.mxu0 0.0
        %894 = vmatprep.subr.mxu0 0.0
        %895 = vmatpush1.xpose.msra.mxu0 0.0
        %896 = vmatprep.subr.mxu0 0.0
        %897 = vmatpush1.xpose.msra.mxu0 0.0
        %898 = vmatprep.subr.mxu0 0.0
        %899 = vmatpush1.xpose.msra.mxu0 0.0
        %900 = vmatprep.subr.mxu0 0.0
        %901 = vmatpush1.xpose.msra.mxu0 0.0
        %902 = vmatprep.subr.mxu0 0.0
        %903 = vmatpush1.xpose.msra.mxu0 0.0
        %904 = vmatprep.subr.mxu0 0.0
        %905 = vmatpush1.xpose.msra.mxu0 0.0
        %906 = vmatprep.subr.mxu0 0.0
        %907 = vmatpush1.xpose.msra.mxu0 0.0
        %908 = vmatprep.subr.mxu0 0.0
        %909 = vmatpush1.xpose.msra.mxu0 0.0
        %910 = vmatprep.subr.mxu0 0.0
        %911 = vmatpush1.xpose.msra.mxu0 0.0
        %912 = vmatprep.subr.mxu0 0.0
        %913 = vmatpush1.xpose.msra.mxu0 0.0
        %914 = vmatprep.mubr.f32.mxu0 %v721
        %915 = vmatmul.mubr.f32.gmra.mrb[0].mxu0 %v719
        %v916 = vpop.f32.mrb[0].mxu0
        %v917 = vadd.f32 0.0, %v916
        %v918 = vpop.f32.mrb[0].mxu0
        %919 = vmatprep.mubr.f32.mxu0 %v725
        %920 = vmatmul.mubr.f32.gmra.mrb[0].mxu0 %v723
        %v921 = vpop.f32.mrb[0].mxu0
        %v922 = vadd.f32 0.0, %v921
        %v923 = vpop.f32.mrb[0].mxu0
        %924 = vmatprep.mubr.f32.mxu0 %v729
        %925 = vmatmul.mubr.f32.gmra.mrb[0].mxu0 %v727
        %v926 = vpop.f32.mrb[0].mxu0
        %v927 = vadd.f32 0.0, %v926
        %v928 = vpop.f32.mrb[0].mxu0
        %929 = vmatprep.mubr.f32.mxu0 %v733
        %930 = vmatmul.mubr.f32.gmra.mrb[0].mxu0 %v731
        %v931 = vpop.f32.mrb[0].mxu0
        %v932 = vadd.f32 0.0, %v931
        %v933 = vpop.f32.mrb[0].mxu0
        %934 = vmatprep.mubr.f32.mxu0 %v737
        %935 = vmatmul.mubr.f32.gmra.mrb[0].mxu0 %v735
        %v936 = vpop.f32.mrb[0].mxu0
        %v937 = vadd.f32 0.0, %v936
        %v938 = vpop.f32.mrb[0].mxu0
        %939 = vmatprep.mubr.f32.mxu0 %v741
        %940 = vmatmul.mubr.f32.gmra.mrb[0].mxu0 %v739
        %v941 = vpop.f32.mrb[0].mxu0
        %v942 = vadd.f32 0.0, %v941
        %v943 = vpop.f32.mrb[0].mxu0
        %944 = vmatprep.mubr.f32.mxu0 %v745
        %945 = vmatmul.mubr.f32.gmra.mrb[0].mxu0 %v743
        %v946 = vpop.f32.mrb[0].mxu0
        %v947 = vadd.f32 0.0, %v946
        %v948 = vpop.f32.mrb[0].mxu0
        %949 = vmatprep.mubr.f32.mxu0 %v749
        %950 = vmatmul.mubr.f32.gmra.mrb[0].mxu0 %v747
        %v951 = vpop.f32.mrb[0].mxu0
        %v952 = vadd.f32 0.0, %v951
        %v953 = vpop.f32.mrb[0].mxu0
        %954 = vmatprep.mubr.f32.mxu0 %v753
        %955 = vmatmul.mubr.f32.gmra.mrb[0].mxu0 %v751
        %v956 = vpop.f32.mrb[0].mxu0
        %v957 = vadd.f32 0.0, %v956
        %v958 = vpop.f32.mrb[0].mxu0
        %959 = vmatprep.mubr.f32.mxu0 %v757
        %960 = vmatmul.mubr.f32.gmra.mrb[0].mxu0 %v755
        %v961 = vpop.f32.mrb[0].mxu0
        %v962 = vadd.f32 0.0, %v961
        %v963 = vpop.f32.mrb[0].mxu0
        %964 = vmatprep.mubr.f32.mxu0 %v761
        %965 = vmatmul.mubr.f32.gmra.mrb[0].mxu0 %v759
        %v966 = vpop.f32.mrb[0].mxu0
        %v967 = vadd.f32 0.0, %v966
        %v968 = vpop.f32.mrb[0].mxu0
        %969 = vmatprep.mubr.f32.mxu0 %v765
        %970 = vmatmul.mubr.f32.gmra.mrb[0].mxu0 %v763
        %v971 = vpop.f32.mrb[0].mxu0
        %v972 = vadd.f32 0.0, %v971
        %v973 = vpop.f32.mrb[0].mxu0
        %974 = vmatprep.mubr.f32.mxu0 %v769
        %975 = vmatmul.mubr.f32.gmra.mrb[0].mxu0 %v767
        %v976 = vpop.f32.mrb[0].mxu0
        %v977 = vadd.f32 0.0, %v976
        %v978 = vpop.f32.mrb[0].mxu0
        %979 = vmatprep.mubr.f32.mxu0 %v773
        %980 = vmatmul.mubr.f32.gmra.mrb[0].mxu0 %v771
        %v981 = vpop.f32.mrb[0].mxu0
        %v982 = vadd.f32 0.0, %v981
        %v983 = vpop.f32.mrb[0].mxu0
        %984 = vmatprep.mubr.f32.mxu0 %v777
        %985 = vmatmul.mubr.f32.gmra.mrb[0].mxu0 %v775
        %v986 = vpop.f32.mrb[0].mxu0
        %v987 = vadd.f32 0.0, %v986
        %v988 = vpop.f32.mrb[0].mxu0
        %989 = vmatprep.mubr.f32.mxu0 %v781
        %990 = vmatmul.mubr.f32.gmra.mrb[0].mxu0 %v779
        %v991 = vpop.f32.mrb[0].mxu0
        %v992 = vadd.f32 0.0, %v991
        %v993 = vpop.f32.mrb[0].mxu0
        %994 = vmatprep.mubr.f32.mxu0 %v785
        %995 = vmatmul.mubr.f32.gmra.mrb[0].mxu0 %v783
        %v996 = vpop.f32.mrb[0].mxu0
        %v997 = vadd.f32 0.0, %v996
        %v998 = vpop.f32.mrb[0].mxu0
        %999 = vmatprep.mubr.f32.mxu0 %v789
        %1000 = vmatmul.mubr.f32.gmra.mrb[0].mxu0 %v787
        %v1001 = vpop.f32.mrb[0].mxu0
        %v1002 = vadd.f32 0.0, %v1001
        %v1003 = vpop.f32.mrb[0].mxu0
        %1004 = vmatprep.mubr.f32.mxu0 %v793
        %1005 = vmatmul.mubr.f32.gmra.mrb[0].mxu0 %v791
        %v1006 = vpop.f32.mrb[0].mxu0
        %v1007 = vadd.f32 0.0, %v1006
        %v1008 = vpop.f32.mrb[0].mxu0
        %1009 = vmatprep.mubr.f32.mxu0 %v797
        %1010 = vmatmul.mubr.f32.gmra.mrb[0].mxu0 %v795
        %v1011 = vpop.f32.mrb[0].mxu0
        %v1012 = vadd.f32 0.0, %v1011
        %v1013 = vpop.f32.mrb[0].mxu0
        %1014 = vmatprep.mubr.f32.mxu0 %v801
        %1015 = vmatmul.mubr.f32.gmra.mrb[0].mxu0 %v799
        %v1016 = vpop.f32.mrb[0].mxu0
        %v1017 = vadd.f32 0.0, %v1016
        %v1018 = vpop.f32.mrb[0].mxu0
        %1019 = vmatprep.mubr.f32.mxu0 %v805
        %1020 = vmatmul.mubr.f32.gmra.mrb[0].mxu0 %v803
        %v1021 = vpop.f32.mrb[0].mxu0
        %v1022 = vadd.f32 0.0, %v1021
        %v1023 = vpop.f32.mrb[0].mxu0
        %1024 = vmatprep.mubr.f32.mxu0 %v809
        %1025 = vmatmul.mubr.f32.gmra.mrb[0].mxu0 %v807
        %v1026 = vpop.f32.mrb[0].mxu0
        %v1027 = vadd.f32 0.0, %v1026
        %v1028 = vpop.f32.mrb[0].mxu0
        %1029 = vmatprep.mubr.f32.mxu0 %v813
        %1030 = vmatmul.mubr.f32.gmra.mrb[0].mxu0 %v811
        %v1031 = vpop.f32.mrb[0].mxu0
        %v1032 = vadd.f32 0.0, %v1031
        %v1033 = vpop.f32.mrb[0].mxu0
        %1034 = vmatprep.mubr.f32.mxu0 %v817
        %1035 = vmatmul.mubr.f32.gmra.mrb[0].mxu0 %v815
        %v1036 = vpop.f32.mrb[0].mxu0
        %v1037 = vadd.f32 0.0, %v1036
        %v1038 = vpop.f32.mrb[0].mxu0
        %1039 = vmatprep.mubr.f32.mxu0 %v821
        %1040 = vmatmul.mubr.f32.gmra.mrb[0].mxu0 %v819
        %v1041 = vpop.f32.mrb[0].mxu0
        %v1042 = vadd.f32 0.0, %v1041
        %v1043 = vpop.f32.mrb[0].mxu0
        %1044 = vmatprep.mubr.f32.mxu0 %v825
        %1045 = vmatmul.mubr.f32.gmra.mrb[0].mxu0 %v823
        %v1046 = vpop.f32.mrb[0].mxu0
        %v1047 = vadd.f32 0.0, %v1046
        %v1048 = vpop.f32.mrb[0].mxu0
        %1049 = vmatprep.mubr.f32.mxu0 %v829
        %1050 = vmatmul.mubr.f32.gmra.mrb[0].mxu0 %v827
        %v1051 = vpop.f32.mrb[0].mxu0
        %v1052 = vadd.f32 0.0, %v1051
        %v1053 = vpop.f32.mrb[0].mxu0
        %1054 = vmatprep.mubr.f32.mxu0 %v833
        %1055 = vmatmul.mubr.f32.gmra.mrb[0].mxu0 %v831
        %v1056 = vpop.f32.mrb[0].mxu0
        %v1057 = vadd.f32 0.0, %v1056
        %v1058 = vpop.f32.mrb[0].mxu0
        %1059 = vmatprep.mubr.f32.mxu0 %v837
        %1060 = vmatmul.mubr.f32.gmra.mrb[0].mxu0 %v835
        %v1061 = vpop.f32.mrb[0].mxu0
        %v1062 = vadd.f32 0.0, %v1061
        %v1063 = vpop.f32.mrb[0].mxu0
        %1064 = vmatprep.mubr.f32.mxu0 %v841
        %1065 = vmatmul.mubr.f32.gmra.mrb[0].mxu0 %v839
        %v1066 = vpop.f32.mrb[0].mxu0
        %v1067 = vadd.f32 0.0, %v1066
        %v1068 = vpop.f32.mrb[0].mxu0
        %1069 = vmatprep.mubr.f32.mxu0 %v845
        %1070 = vmatmul.mubr.f32.gmra.mrb[0].mxu0 %v843
        %v1071 = vpop.f32.mrb[0].mxu0
        %v1072 = vadd.f32 0.0, %v1071
        %v1073 = vpop.f32.mrb[0].mxu0
        %1074 = vdwg.mxu0
        %v1075 = vrcp.pop %v917
        %v1076 = vmul.f32 1.0, %v1075
        %v1077 = vrcp.pop %v922
        %v1078 = vmul.f32 1.0, %v1077
        %v1079 = vrcp.pop %v927
        %v1080 = vmul.f32 1.0, %v1079
        %v1081 = vrcp.pop %v932
        %v1082 = vmul.f32 1.0, %v1081
        %v1083 = vrcp.pop %v937
        %v1084 = vmul.f32 1.0, %v1083
        %v1085 = vrcp.pop %v942
        %v1086 = vmul.f32 1.0, %v1085
        %v1087 = vrcp.pop %v947
        %v1088 = vmul.f32 1.0, %v1087
        %v1089 = vrcp.pop %v952
        %v1090 = vmul.f32 1.0, %v1089
        %v1091 = vrcp.pop %v957
        %v1092 = vmul.f32 1.0, %v1091
        %v1093 = vrcp.pop %v962
        %v1094 = vmul.f32 1.0, %v1093
        %v1095 = vrcp.pop %v967
        %v1096 = vmul.f32 1.0, %v1095
        %v1097 = vrcp.pop %v972
        %v1098 = vmul.f32 1.0, %v1097
        %v1099 = vrcp.pop %v977
        %v1100 = vmul.f32 1.0, %v1099
        %v1101 = vrcp.pop %v982
        %v1102 = vmul.f32 1.0, %v1101
        %v1103 = vrcp.pop %v987
        %v1104 = vmul.f32 1.0, %v1103
        %v1105 = vrcp.pop %v992
        %v1106 = vmul.f32 1.0, %v1105
        %v1107 = vrcp.pop %v997
        %v1108 = vmul.f32 1.0, %v1107
        %v1109 = vrcp.pop %v1002
        %v1110 = vmul.f32 1.0, %v1109
        %v1111 = vrcp.pop %v1007
        %v1112 = vmul.f32 1.0, %v1111
        %v1113 = vrcp.pop %v1012
        %v1114 = vmul.f32 1.0, %v1113
        %v1115 = vrcp.pop %v1017
        %v1116 = vmul.f32 1.0, %v1115
        %v1117 = vrcp.pop %v1022
        %v1118 = vmul.f32 1.0, %v1117
        %v1119 = vrcp.pop %v1027
        %v1120 = vmul.f32 1.0, %v1119
        %v1121 = vrcp.pop %v1032
        %v1122 = vmul.f32 1.0, %v1121
        %v1123 = vrcp.pop %v1037
        %v1124 = vmul.f32 1.0, %v1123
        %v1125 = vrcp.pop %v1042
        %v1126 = vmul.f32 1.0, %v1125
        %v1127 = vrcp.pop %v1047
        %v1128 = vmul.f32 1.0, %v1127
        %v1129 = vrcp.pop %v1052
        %v1130 = vmul.f32 1.0, %v1129
        %v1131 = vrcp.pop %v1057
        %v1132 = vmul.f32 1.0, %v1131
        %v1133 = vrcp.pop %v1062
        %v1134 = vmul.f32 1.0, %v1133
        %v1135 = vrcp.pop %v1067
        %v1136 = vmul.f32 1.0, %v1135
        %v1137 = vrcp.pop %v1072
        %v1138 = vmul.f32 1.0, %v1137
        %v1140 = vsel %vm364, %v1076, 0
        %v1143 = vsel %vm364, %v1078, 0
        %v1146 = vsel %vm364, %v1080, 0
        %v1149 = vsel %vm364, %v1082, 0
        %v1152 = vsel %vm364, %v1084, 0
        %v1155 = vsel %vm364, %v1086, 0
        %v1158 = vsel %vm364, %v1088, 0
        %v1161 = vsel %vm364, %v1090, 0
        %v1164 = vsel %vm364, %v1092, 0
        %v1167 = vsel %vm364, %v1094, 0
        %v1170 = vsel %vm364, %v1096, 0
        %v1173 = vsel %vm364, %v1098, 0
        %v1176 = vsel %vm364, %v1100, 0
        %v1179 = vsel %vm364, %v1102, 0
        %v1182 = vsel %vm364, %v1104, 0
        %v1185 = vsel %vm364, %v1106, 0
        %v1188 = vsel %vm364, %v1108, 0
        %v1191 = vsel %vm364, %v1110, 0
        %v1194 = vsel %vm364, %v1112, 0
        %v1197 = vsel %vm364, %v1114, 0
        %v1200 = vsel %vm364, %v1116, 0
        %v1203 = vsel %vm364, %v1118, 0
        %v1206 = vsel %vm364, %v1120, 0
        %v1209 = vsel %vm364, %v1122, 0
        %v1212 = vsel %vm364, %v1124, 0
        %v1215 = vsel %vm364, %v1126, 0
        %v1218 = vsel %vm364, %v1128, 0
        %v1221 = vsel %vm364, %v1130, 0
        %v1224 = vsel %vm364, %v1132, 0
        %v1227 = vsel %vm364, %v1134, 0
        %v1230 = vsel %vm364, %v1136, 0
        %v1233 = vsel %vm364, %v1138, 0
        %1235 = vmatprep.subr.mxu0 %v847
        %1236 = vmatpush1.msra.mxu0 %v846
        %1237 = vmatprep.subr.mxu0 %v849
        %1238 = vmatpush1.msra.mxu0 %v848
        %1239 = vmatprep.subr.mxu0 0.0
        %1240 = vmatpush1.msra.mxu0 0.0
        %1241 = vmatprep.subr.mxu0 0.0
        %1242 = vmatpush1.msra.mxu0 0.0
        %1243 = vmatprep.subr.mxu0 0.0
        %1244 = vmatpush1.msra.mxu0 0.0
        %1245 = vmatprep.subr.mxu0 0.0
        %1246 = vmatpush1.msra.mxu0 0.0
        %1247 = vmatprep.subr.mxu0 0.0
        %1248 = vmatpush1.msra.mxu0 0.0
        %1249 = vmatprep.subr.mxu0 0.0
        %1250 = vmatpush1.msra.mxu0 0.0
        %1251 = vmatprep.subr.mxu0 0.0
        %1252 = vmatpush1.msra.mxu0 0.0
        %1253 = vmatprep.subr.mxu0 0.0
        %1254 = vmatpush1.msra.mxu0 0.0
        %1255 = vmatprep.subr.mxu0 0.0
        %1256 = vmatpush1.msra.mxu0 0.0
        %1257 = vmatprep.subr.mxu0 0.0
        %1258 = vmatpush1.msra.mxu0 0.0
        %1259 = vmatprep.subr.mxu0 0.0
        %1260 = vmatpush1.msra.mxu0 0.0
        %1261 = vmatprep.subr.mxu0 0.0
        %1262 = vmatpush1.msra.mxu0 0.0
        %1263 = vmatprep.subr.mxu0 0.0
        %1264 = vmatpush1.msra.mxu0 0.0
        %1265 = vmatprep.subr.mxu0 0.0
        %1266 = vmatpush1.msra.mxu0 0.0
        %1267 = vmatprep.subr.mxu0 0.0
        %1268 = vmatpush1.msra.mxu0 0.0
        %1269 = vmatprep.subr.mxu0 0.0
        %1270 = vmatpush1.msra.mxu0 0.0
        %1271 = vmatprep.subr.mxu0 0.0
        %1272 = vmatpush1.msra.mxu0 0.0
        %1273 = vmatprep.subr.mxu0 0.0
        %1274 = vmatpush1.msra.mxu0 0.0
        %1275 = vmatprep.subr.mxu0 0.0
        %1276 = vmatpush1.msra.mxu0 0.0
        %1277 = vmatprep.subr.mxu0 0.0
        %1278 = vmatpush1.msra.mxu0 0.0
        %1279 = vmatprep.subr.mxu0 0.0
        %1280 = vmatpush1.msra.mxu0 0.0
        %1281 = vmatprep.subr.mxu0 0.0
        %1282 = vmatpush1.msra.mxu0 0.0
        %1283 = vmatprep.subr.mxu0 0.0
        %1284 = vmatpush1.msra.mxu0 0.0
        %1285 = vmatprep.subr.mxu0 0.0
        %1286 = vmatpush1.msra.mxu0 0.0
        %1287 = vmatprep.subr.mxu0 0.0
        %1288 = vmatpush1.msra.mxu0 0.0
        %1289 = vmatprep.subr.mxu0 0.0
        %1290 = vmatpush1.msra.mxu0 0.0
        %1291 = vmatprep.subr.mxu0 0.0
        %1292 = vmatpush1.msra.mxu0 0.0
        %1293 = vmatprep.subr.mxu0 0.0
        %1294 = vmatpush1.msra.mxu0 0.0
        %1295 = vmatprep.subr.mxu0 0.0
        %1296 = vmatpush1.msra.mxu0 0.0
        %1297 = vmatprep.subr.mxu0 0.0
        %1298 = vmatpush1.msra.mxu0 0.0
        %1299 = vmatprep.mubr.f32.mxu0 0.0
        %1300 = vmatmul.mubr.f32.gmra.mrb[0].mxu0 %v1140
        %v1301 = vpop.f32.mrb[0].mxu0
        %v1302 = vadd.f32 0.0, %v1301
        %v1303 = vpop.f32.mrb[0].mxu0
        %v1304 = vadd.f32 0.0, %v1303
        %1305 = vmatprep.mubr.f32.mxu0 0.0
        %1306 = vmatmul.mubr.f32.gmra.mrb[0].mxu0 %v1143
        %v1307 = vpop.f32.mrb[0].mxu0
        %v1308 = vadd.f32 0.0, %v1307
        %v1309 = vpop.f32.mrb[0].mxu0
        %v1310 = vadd.f32 0.0, %v1309
        %1311 = vmatprep.mubr.f32.mxu0 0.0
        %1312 = vmatmul.mubr.f32.gmra.mrb[0].mxu0 %v1146
        %v1313 = vpop.f32.mrb[0].mxu0
        %v1314 = vadd.f32 0.0, %v1313
        %v1315 = vpop.f32.mrb[0].mxu0
        %v1316 = vadd.f32 0.0, %v1315
        %1317 = vmatprep.mubr.f32.mxu0 0.0
        %1318 = vmatmul.mubr.f32.gmra.mrb[0].mxu0 %v1149
        %v1319 = vpop.f32.mrb[0].mxu0
        %v1320 = vadd.f32 0.0, %v1319
        %v1321 = vpop.f32.mrb[0].mxu0
        %v1322 = vadd.f32 0.0, %v1321
        %1323 = vmatprep.mubr.f32.mxu0 0.0
        %1324 = vmatmul.mubr.f32.gmra.mrb[0].mxu0 %v1152
        %v1325 = vpop.f32.mrb[0].mxu0
        %v1326 = vadd.f32 0.0, %v1325
        %v1327 = vpop.f32.mrb[0].mxu0
        %v1328 = vadd.f32 0.0, %v1327
        %1329 = vmatprep.mubr.f32.mxu0 0.0
        %1330 = vmatmul.mubr.f32.gmra.mrb[0].mxu0 %v1155
        %v1331 = vpop.f32.mrb[0].mxu0
        %v1332 = vadd.f32 0.0, %v1331
        %v1333 = vpop.f32.mrb[0].mxu0
        %v1334 = vadd.f32 0.0, %v1333
        %1335 = vmatprep.mubr.f32.mxu0 0.0
        %1336 = vmatmul.mubr.f32.gmra.mrb[0].mxu0 %v1158
        %v1337 = vpop.f32.mrb[0].mxu0
        %v1338 = vadd.f32 0.0, %v1337
        %v1339 = vpop.f32.mrb[0].mxu0
        %v1340 = vadd.f32 0.0, %v1339
        %1341 = vmatprep.mubr.f32.mxu0 0.0
        %1342 = vmatmul.mubr.f32.gmra.mrb[0].mxu0 %v1161
        %v1343 = vpop.f32.mrb[0].mxu0
        %v1344 = vadd.f32 0.0, %v1343
        %v1345 = vpop.f32.mrb[0].mxu0
        %v1346 = vadd.f32 0.0, %v1345
        %1347 = vmatprep.mubr.f32.mxu0 0.0
        %1348 = vmatmul.mubr.f32.gmra.mrb[0].mxu0 %v1164
        %v1349 = vpop.f32.mrb[0].mxu0
        %v1350 = vadd.f32 0.0, %v1349
        %v1351 = vpop.f32.mrb[0].mxu0
        %v1352 = vadd.f32 0.0, %v1351
        %1353 = vmatprep.mubr.f32.mxu0 0.0
        %1354 = vmatmul.mubr.f32.gmra.mrb[0].mxu0 %v1167
        %v1355 = vpop.f32.mrb[0].mxu0
        %v1356 = vadd.f32 0.0, %v1355
        %v1357 = vpop.f32.mrb[0].mxu0
        %v1358 = vadd.f32 0.0, %v1357
        %1359 = vmatprep.mubr.f32.mxu0 0.0
        %1360 = vmatmul.mubr.f32.gmra.mrb[0].mxu0 %v1170
        %v1361 = vpop.f32.mrb[0].mxu0
        %v1362 = vadd.f32 0.0, %v1361
        %v1363 = vpop.f32.mrb[0].mxu0
        %v1364 = vadd.f32 0.0, %v1363
        %1365 = vmatprep.mubr.f32.mxu0 0.0
        %1366 = vmatmul.mubr.f32.gmra.mrb[0].mxu0 %v1173
        %v1367 = vpop.f32.mrb[0].mxu0
        %v1368 = vadd.f32 0.0, %v1367
        %v1369 = vpop.f32.mrb[0].mxu0
        %v1370 = vadd.f32 0.0, %v1369
        %1371 = vmatprep.mubr.f32.mxu0 0.0
        %1372 = vmatmul.mubr.f32.gmra.mrb[0].mxu0 %v1176
        %v1373 = vpop.f32.mrb[0].mxu0
        %v1374 = vadd.f32 0.0, %v1373
        %v1375 = vpop.f32.mrb[0].mxu0
        %v1376 = vadd.f32 0.0, %v1375
        %1377 = vmatprep.mubr.f32.mxu0 0.0
        %1378 = vmatmul.mubr.f32.gmra.mrb[0].mxu0 %v1179
        %v1379 = vpop.f32.mrb[0].mxu0
        %v1380 = vadd.f32 0.0, %v1379
        %v1381 = vpop.f32.mrb[0].mxu0
        %v1382 = vadd.f32 0.0, %v1381
        %1383 = vmatprep.mubr.f32.mxu0 0.0
        %1384 = vmatmul.mubr.f32.gmra.mrb[0].mxu0 %v1182
        %v1385 = vpop.f32.mrb[0].mxu0
        %v1386 = vadd.f32 0.0, %v1385
        %v1387 = vpop.f32.mrb[0].mxu0
        %v1388 = vadd.f32 0.0, %v1387
        %1389 = vmatprep.mubr.f32.mxu0 0.0
        %1390 = vmatmul.mubr.f32.gmra.mrb[0].mxu0 %v1185
        %v1391 = vpop.f32.mrb[0].mxu0
        %v1392 = vadd.f32 0.0, %v1391
        %v1393 = vpop.f32.mrb[0].mxu0
        %v1394 = vadd.f32 0.0, %v1393
        %1395 = vmatprep.mubr.f32.mxu0 0.0
        %1396 = vmatmul.mubr.f32.gmra.mrb[0].mxu0 %v1188
        %v1397 = vpop.f32.mrb[0].mxu0
        %v1398 = vadd.f32 0.0, %v1397
        %v1399 = vpop.f32.mrb[0].mxu0
        %v1400 = vadd.f32 0.0, %v1399
        %1401 = vmatprep.mubr.f32.mxu0 0.0
        %1402 = vmatmul.mubr.f32.gmra.mrb[0].mxu0 %v1191
        %v1403 = vpop.f32.mrb[0].mxu0
        %v1404 = vadd.f32 0.0, %v1403
        %v1405 = vpop.f32.mrb[0].mxu0
        %v1406 = vadd.f32 0.0, %v1405
        %1407 = vmatprep.mubr.f32.mxu0 0.0
        %1408 = vmatmul.mubr.f32.gmra.mrb[0].mxu0 %v1194
        %v1409 = vpop.f32.mrb[0].mxu0
        %v1410 = vadd.f32 0.0, %v1409
        %v1411 = vpop.f32.mrb[0].mxu0
        %v1412 = vadd.f32 0.0, %v1411
        %1413 = vmatprep.mubr.f32.mxu0 0.0
        %1414 = vmatmul.mubr.f32.gmra.mrb[0].mxu0 %v1197
        %v1415 = vpop.f32.mrb[0].mxu0
        %v1416 = vadd.f32 0.0, %v1415
        %v1417 = vpop.f32.mrb[0].mxu0
        %v1418 = vadd.f32 0.0, %v1417
        %1419 = vmatprep.mubr.f32.mxu0 0.0
        %1420 = vmatmul.mubr.f32.gmra.mrb[0].mxu0 %v1200
        %v1421 = vpop.f32.mrb[0].mxu0
        %v1422 = vadd.f32 0.0, %v1421
        %v1423 = vpop.f32.mrb[0].mxu0
        %v1424 = vadd.f32 0.0, %v1423
        %1425 = vmatprep.mubr.f32.mxu0 0.0
        %1426 = vmatmul.mubr.f32.gmra.mrb[0].mxu0 %v1203
        %v1427 = vpop.f32.mrb[0].mxu0
        %v1428 = vadd.f32 0.0, %v1427
        %v1429 = vpop.f32.mrb[0].mxu0
        %v1430 = vadd.f32 0.0, %v1429
        %1431 = vmatprep.mubr.f32.mxu0 0.0
        %1432 = vmatmul.mubr.f32.gmra.mrb[0].mxu0 %v1206
        %v1433 = vpop.f32.mrb[0].mxu0
        %v1434 = vadd.f32 0.0, %v1433
        %v1435 = vpop.f32.mrb[0].mxu0
        %v1436 = vadd.f32 0.0, %v1435
        %1437 = vmatprep.mubr.f32.mxu0 0.0
        %1438 = vmatmul.mubr.f32.gmra.mrb[0].mxu0 %v1209
        %v1439 = vpop.f32.mrb[0].mxu0
        %v1440 = vadd.f32 0.0, %v1439
        %v1441 = vpop.f32.mrb[0].mxu0
        %v1442 = vadd.f32 0.0, %v1441
        %1443 = vmatprep.mubr.f32.mxu0 0.0
        %1444 = vmatmul.mubr.f32.gmra.mrb[0].mxu0 %v1212
        %v1445 = vpop.f32.mrb[0].mxu0
        %v1446 = vadd.f32 0.0, %v1445
        %v1447 = vpop.f32.mrb[0].mxu0
        %v1448 = vadd.f32 0.0, %v1447
        %1449 = vmatprep.mubr.f32.mxu0 0.0
        %1450 = vmatmul.mubr.f32.gmra.mrb[0].mxu0 %v1215
        %v1451 = vpop.f32.mrb[0].mxu0
        %v1452 = vadd.f32 0.0, %v1451
        %v1453 = vpop.f32.mrb[0].mxu0
        %v1454 = vadd.f32 0.0, %v1453
        %1455 = vmatprep.mubr.f32.mxu0 0.0
        %1456 = vmatmul.mubr.f32.gmra.mrb[0].mxu0 %v1218
        %v1457 = vpop.f32.mrb[0].mxu0
        %v1458 = vadd.f32 0.0, %v1457
        %v1459 = vpop.f32.mrb[0].mxu0
        %v1460 = vadd.f32 0.0, %v1459
        %1461 = vmatprep.mubr.f32.mxu0 0.0
        %1462 = vmatmul.mubr.f32.gmra.mrb[0].mxu0 %v1221
        %v1463 = vpop.f32.mrb[0].mxu0
        %v1464 = vadd.f32 0.0, %v1463
        %v1465 = vpop.f32.mrb[0].mxu0
        %v1466 = vadd.f32 0.0, %v1465
        %1467 = vmatprep.mubr.f32.mxu0 0.0
        %1468 = vmatmul.mubr.f32.gmra.mrb[0].mxu0 %v1224
        %v1469 = vpop.f32.mrb[0].mxu0
        %v1470 = vadd.f32 0.0, %v1469
        %v1471 = vpop.f32.mrb[0].mxu0
        %v1472 = vadd.f32 0.0, %v1471
        %1473 = vmatprep.mubr.f32.mxu0 0.0
        %1474 = vmatmul.mubr.f32.gmra.mrb[0].mxu0 %v1227
        %v1475 = vpop.f32.mrb[0].mxu0
        %v1476 = vadd.f32 0.0, %v1475
        %v1477 = vpop.f32.mrb[0].mxu0
        %v1478 = vadd.f32 0.0, %v1477
        %1479 = vmatprep.mubr.f32.mxu0 0.0
        %1480 = vmatmul.mubr.f32.gmra.mrb[0].mxu0 %v1230
        %v1481 = vpop.f32.mrb[0].mxu0
        %v1482 = vadd.f32 0.0, %v1481
        %v1483 = vpop.f32.mrb[0].mxu0
        %v1484 = vadd.f32 0.0, %v1483
        %1485 = vmatprep.mubr.f32.mxu0 0.0
        %1486 = vmatmul.mubr.f32.gmra.mrb[0].mxu0 %v1233
        %v1487 = vpop.f32.mrb[0].mxu0
        %v1488 = vadd.f32 0.0, %v1487
        %v1489 = vpop.f32.mrb[0].mxu0
        %v1490 = vadd.f32 0.0, %v1489
        %1491 = vdwg.mxu0
        %v1492 = vmul.f32 %v719, %v1302
        %v1493 = vmul.f32 %v721, %v1304
        %v1494 = vmul.f32 %v723, %v1308
        %v1495 = vmul.f32 %v725, %v1310
        %v1496 = vmul.f32 %v727, %v1314
        %v1497 = vmul.f32 %v729, %v1316
        %v1498 = vmul.f32 %v731, %v1320
        %v1499 = vmul.f32 %v733, %v1322
        %v1500 = vmul.f32 %v735, %v1326
        %v1501 = vmul.f32 %v737, %v1328
        %v1502 = vmul.f32 %v739, %v1332
        %v1503 = vmul.f32 %v741, %v1334
        %v1504 = vmul.f32 %v743, %v1338
        %v1505 = vmul.f32 %v745, %v1340
        %v1506 = vmul.f32 %v747, %v1344
        %v1507 = vmul.f32 %v749, %v1346
        %v1508 = vmul.f32 %v751, %v1350
        %v1509 = vmul.f32 %v753, %v1352
        %v1510 = vmul.f32 %v755, %v1356
        %v1511 = vmul.f32 %v757, %v1358
        %v1512 = vmul.f32 %v759, %v1362
        %v1513 = vmul.f32 %v761, %v1364
        %v1514 = vmul.f32 %v763, %v1368
        %v1515 = vmul.f32 %v765, %v1370
        %v1516 = vmul.f32 %v767, %v1374
        %v1517 = vmul.f32 %v769, %v1376
        %v1518 = vmul.f32 %v771, %v1380
        %v1519 = vmul.f32 %v773, %v1382
        %v1520 = vmul.f32 %v775, %v1386
        %v1521 = vmul.f32 %v777, %v1388
        %v1522 = vmul.f32 %v779, %v1392
        %v1523 = vmul.f32 %v781, %v1394
        %v1524 = vmul.f32 %v783, %v1398
        %v1525 = vmul.f32 %v785, %v1400
        %v1526 = vmul.f32 %v787, %v1404
        %v1527 = vmul.f32 %v789, %v1406
        %v1528 = vmul.f32 %v791, %v1410
        %v1529 = vmul.f32 %v793, %v1412
        %v1530 = vmul.f32 %v795, %v1416
        %v1531 = vmul.f32 %v797, %v1418
        %v1532 = vmul.f32 %v799, %v1422
        %v1533 = vmul.f32 %v801, %v1424
        %v1534 = vmul.f32 %v803, %v1428
        %v1535 = vmul.f32 %v805, %v1430
        %v1536 = vmul.f32 %v807, %v1434
        %v1537 = vmul.f32 %v809, %v1436
        %v1538 = vmul.f32 %v811, %v1440
        %v1539 = vmul.f32 %v813, %v1442
        %v1540 = vmul.f32 %v815, %v1446
        %v1541 = vmul.f32 %v817, %v1448
        %v1542 = vmul.f32 %v819, %v1452
        %v1543 = vmul.f32 %v821, %v1454
        %v1544 = vmul.f32 %v823, %v1458
        %v1545 = vmul.f32 %v825, %v1460
        %v1546 = vmul.f32 %v827, %v1464
        %v1547 = vmul.f32 %v829, %v1466
        %v1548 = vmul.f32 %v831, %v1470
        %v1549 = vmul.f32 %v833, %v1472
        %v1550 = vmul.f32 %v835, %v1476
        %v1551 = vmul.f32 %v837, %v1478
        %v1552 = vmul.f32 %v839, %v1482
        %v1553 = vmul.f32 %v841, %v1484
        %v1554 = vmul.f32 %v843, %v1488
        %v1555 = vmul.f32 %v845, %v1490
        %v1556 = vadd.f32 %v1492, %v1494
        %v1557 = vrot.slane %v1556, 4
        %v1558 = vadd.f32 %v1556, %v1557
        %v1559 = vrot.slane %v1558, 2
        %v1560 = vadd.f32 %v1558, %v1559
        %v1561 = vrot.slane %v1560, 1
        %v1562 = vadd.f32 %v1560, %v1561
        %v1563 = vadd.f32 %v1493, %v1495
        %v1564 = vrot.slane %v1563, 4
        %v1565 = vadd.f32 %v1563, %v1564
        %v1566 = vrot.slane %v1565, 2
        %v1567 = vadd.f32 %v1565, %v1566
        %v1568 = vrot.slane %v1567, 1
        %v1569 = vadd.f32 %v1567, %v1568
        %v1570 = vadd.f32 %v1496, %v1498
        %v1571 = vrot.slane %v1570, 4
        %v1572 = vadd.f32 %v1570, %v1571
        %v1573 = vrot.slane %v1572, 2
        %v1574 = vadd.f32 %v1572, %v1573
        %v1575 = vrot.slane %v1574, 1
        %v1576 = vadd.f32 %v1574, %v1575
        %v1577 = vadd.f32 %v1497, %v1499
        %v1578 = vrot.slane %v1577, 4
        %v1579 = vadd.f32 %v1577, %v1578
        %v1580 = vrot.slane %v1579, 2
        %v1581 = vadd.f32 %v1579, %v1580
        %v1582 = vrot.slane %v1581, 1
        %v1583 = vadd.f32 %v1581, %v1582
        %v1584 = vadd.f32 %v1500, %v1502
        %v1585 = vrot.slane %v1584, 4
        %v1586 = vadd.f32 %v1584, %v1585
        %v1587 = vrot.slane %v1586, 2
        %v1588 = vadd.f32 %v1586, %v1587
        %v1589 = vrot.slane %v1588, 1
        %v1590 = vadd.f32 %v1588, %v1589
        %v1591 = vadd.f32 %v1501, %v1503
        %v1592 = vrot.slane %v1591, 4
        %v1593 = vadd.f32 %v1591, %v1592
        %v1594 = vrot.slane %v1593, 2
        %v1595 = vadd.f32 %v1593, %v1594
        %v1596 = vrot.slane %v1595, 1
        %v1597 = vadd.f32 %v1595, %v1596
        %v1598 = vadd.f32 %v1504, %v1506
        %v1599 = vrot.slane %v1598, 4
        %v1600 = vadd.f32 %v1598, %v1599
        %v1601 = vrot.slane %v1600, 2
        %v1602 = vadd.f32 %v1600, %v1601
        %v1603 = vrot.slane %v1602, 1
        %v1604 = vadd.f32 %v1602, %v1603
        %v1605 = vadd.f32 %v1505, %v1507
        %v1606 = vrot.slane %v1605, 4
        %v1607 = vadd.f32 %v1605, %v1606
        %v1608 = vrot.slane %v1607, 2
        %v1609 = vadd.f32 %v1607, %v1608
        %v1610 = vrot.slane %v1609, 1
        %v1611 = vadd.f32 %v1609, %v1610
        %v1612 = vadd.f32 %v1508, %v1510
        %v1613 = vrot.slane %v1612, 4
        %v1614 = vadd.f32 %v1612, %v1613
        %v1615 = vrot.slane %v1614, 2
        %v1616 = vadd.f32 %v1614, %v1615
        %v1617 = vrot.slane %v1616, 1
        %v1618 = vadd.f32 %v1616, %v1617
        %v1619 = vadd.f32 %v1509, %v1511
        %v1620 = vrot.slane %v1619, 4
        %v1621 = vadd.f32 %v1619, %v1620
        %v1622 = vrot.slane %v1621, 2
        %v1623 = vadd.f32 %v1621, %v1622
        %v1624 = vrot.slane %v1623, 1
        %v1625 = vadd.f32 %v1623, %v1624
        %v1626 = vadd.f32 %v1512, %v1514
        %v1627 = vrot.slane %v1626, 4
        %v1628 = vadd.f32 %v1626, %v1627
        %v1629 = vrot.slane %v1628, 2
        %v1630 = vadd.f32 %v1628, %v1629
        %v1631 = vrot.slane %v1630, 1
        %v1632 = vadd.f32 %v1630, %v1631
        %v1633 = vadd.f32 %v1513, %v1515
        %v1634 = vrot.slane %v1633, 4
        %v1635 = vadd.f32 %v1633, %v1634
        %v1636 = vrot.slane %v1635, 2
        %v1637 = vadd.f32 %v1635, %v1636
        %v1638 = vrot.slane %v1637, 1
        %v1639 = vadd.f32 %v1637, %v1638
        %v1640 = vadd.f32 %v1516, %v1518
        %v1641 = vrot.slane %v1640, 4
        %v1642 = vadd.f32 %v1640, %v1641
        %v1643 = vrot.slane %v1642, 2
        %v1644 = vadd.f32 %v1642, %v1643
        %v1645 = vrot.slane %v1644, 1
        %v1646 = vadd.f32 %v1644, %v1645
        %v1647 = vadd.f32 %v1517, %v1519
        %v1648 = vrot.slane %v1647, 4
        %v1649 = vadd.f32 %v1647, %v1648
        %v1650 = vrot.slane %v1649, 2
        %v1651 = vadd.f32 %v1649, %v1650
        %v1652 = vrot.slane %v1651, 1
        %v1653 = vadd.f32 %v1651, %v1652
        %v1654 = vadd.f32 %v1520, %v1522
        %v1655 = vrot.slane %v1654, 4
        %v1656 = vadd.f32 %v1654, %v1655
        %v1657 = vrot.slane %v1656, 2
        %v1658 = vadd.f32 %v1656, %v1657
        %v1659 = vrot.slane %v1658, 1
        %v1660 = vadd.f32 %v1658, %v1659
        %v1661 = vadd.f32 %v1521, %v1523
        %v1662 = vrot.slane %v1661, 4
        %v1663 = vadd.f32 %v1661, %v1662
        %v1664 = vrot.slane %v1663, 2
        %v1665 = vadd.f32 %v1663, %v1664
        %v1666 = vrot.slane %v1665, 1
        %v1667 = vadd.f32 %v1665, %v1666
        %v1668 = vadd.f32 %v1524, %v1526
        %v1669 = vrot.slane %v1668, 4
        %v1670 = vadd.f32 %v1668, %v1669
        %v1671 = vrot.slane %v1670, 2
        %v1672 = vadd.f32 %v1670, %v1671
        %v1673 = vrot.slane %v1672, 1
        %v1674 = vadd.f32 %v1672, %v1673
        %v1675 = vadd.f32 %v1525, %v1527
        %v1676 = vrot.slane %v1675, 4
        %v1677 = vadd.f32 %v1675, %v1676
        %v1678 = vrot.slane %v1677, 2
        %v1679 = vadd.f32 %v1677, %v1678
        %v1680 = vrot.slane %v1679, 1
        %v1681 = vadd.f32 %v1679, %v1680
        %v1682 = vadd.f32 %v1528, %v1530
        %v1683 = vrot.slane %v1682, 4
        %v1684 = vadd.f32 %v1682, %v1683
        %v1685 = vrot.slane %v1684, 2
        %v1686 = vadd.f32 %v1684, %v1685
        %v1687 = vrot.slane %v1686, 1
        %v1688 = vadd.f32 %v1686, %v1687
        %v1689 = vadd.f32 %v1529, %v1531
        %v1690 = vrot.slane %v1689, 4
        %v1691 = vadd.f32 %v1689, %v1690
        %v1692 = vrot.slane %v1691, 2
        %v1693 = vadd.f32 %v1691, %v1692
        %v1694 = vrot.slane %v1693, 1
        %v1695 = vadd.f32 %v1693, %v1694
        %v1696 = vadd.f32 %v1532, %v1534
        %v1697 = vrot.slane %v1696, 4
        %v1698 = vadd.f32 %v1696, %v1697
        %v1699 = vrot.slane %v1698, 2
        %v1700 = vadd.f32 %v1698, %v1699
        %v1701 = vrot.slane %v1700, 1
        %v1702 = vadd.f32 %v1700, %v1701
        %v1703 = vadd.f32 %v1533, %v1535
        %v1704 = vrot.slane %v1703, 4
        %v1705 = vadd.f32 %v1703, %v1704
        %v1706 = vrot.slane %v1705, 2
        %v1707 = vadd.f32 %v1705, %v1706
        %v1708 = vrot.slane %v1707, 1
        %v1709 = vadd.f32 %v1707, %v1708
        %v1710 = vadd.f32 %v1536, %v1538
        %v1711 = vrot.slane %v1710, 4
        %v1712 = vadd.f32 %v1710, %v1711
        %v1713 = vrot.slane %v1712, 2
        %v1714 = vadd.f32 %v1712, %v1713
        %v1715 = vrot.slane %v1714, 1
        %v1716 = vadd.f32 %v1714, %v1715
        %v1717 = vadd.f32 %v1537, %v1539
        %v1718 = vrot.slane %v1717, 4
        %v1719 = vadd.f32 %v1717, %v1718
        %v1720 = vrot.slane %v1719, 2
        %v1721 = vadd.f32 %v1719, %v1720
        %v1722 = vrot.slane %v1721, 1
        %v1723 = vadd.f32 %v1721, %v1722
        %v1724 = vadd.f32 %v1540, %v1542
        %v1725 = vrot.slane %v1724, 4
        %v1726 = vadd.f32 %v1724, %v1725
        %v1727 = vrot.slane %v1726, 2
        %v1728 = vadd.f32 %v1726, %v1727
        %v1729 = vrot.slane %v1728, 1
        %v1730 = vadd.f32 %v1728, %v1729
        %v1731 = vadd.f32 %v1541, %v1543
        %v1732 = vrot.slane %v1731, 4
        %v1733 = vadd.f32 %v1731, %v1732
        %v1734 = vrot.slane %v1733, 2
        %v1735 = vadd.f32 %v1733, %v1734
        %v1736 = vrot.slane %v1735, 1
        %v1737 = vadd.f32 %v1735, %v1736
        %v1738 = vadd.f32 %v1544, %v1546
        %v1739 = vrot.slane %v1738, 4
        %v1740 = vadd.f32 %v1738, %v1739
        %v1741 = vrot.slane %v1740, 2
        %v1742 = vadd.f32 %v1740, %v1741
        %v1743 = vrot.slane %v1742, 1
        %v1744 = vadd.f32 %v1742, %v1743
        %v1745 = vadd.f32 %v1545, %v1547
        %v1746 = vrot.slane %v1745, 4
        %v1747 = vadd.f32 %v1745, %v1746
        %v1748 = vrot.slane %v1747, 2
        %v1749 = vadd.f32 %v1747, %v1748
        %v1750 = vrot.slane %v1749, 1
        %v1751 = vadd.f32 %v1749, %v1750
        %v1752 = vadd.f32 %v1548, %v1550
        %v1753 = vrot.slane %v1752, 4
        %v1754 = vadd.f32 %v1752, %v1753
        %v1755 = vrot.slane %v1754, 2
        %v1756 = vadd.f32 %v1754, %v1755
        %v1757 = vrot.slane %v1756, 1
        %v1758 = vadd.f32 %v1756, %v1757
        %v1759 = vadd.f32 %v1549, %v1551
        %v1760 = vrot.slane %v1759, 4
        %v1761 = vadd.f32 %v1759, %v1760
        %v1762 = vrot.slane %v1761, 2
        %v1763 = vadd.f32 %v1761, %v1762
        %v1764 = vrot.slane %v1763, 1
        %v1765 = vadd.f32 %v1763, %v1764
        %v1766 = vadd.f32 %v1552, %v1554
        %v1767 = vrot.slane %v1766, 4
        %v1768 = vadd.f32 %v1766, %v1767
        %v1769 = vrot.slane %v1768, 2
        %v1770 = vadd.f32 %v1768, %v1769
        %v1771 = vrot.slane %v1770, 1
        %v1772 = vadd.f32 %v1770, %v1771
        %v1773 = vadd.f32 %v1553, %v1555
        %v1774 = vrot.slane %v1773, 4
        %v1775 = vadd.f32 %v1773, %v1774
        %v1776 = vrot.slane %v1775, 2
        %v1777 = vadd.f32 %v1775, %v1776
        %v1778 = vrot.slane %v1777, 1
        %v1779 = vadd.f32 %v1777, %v1778
        %v1780 = vmul.f32 %v1562, 0.0625
        %v1781 = vmul.f32 %v1569, 0.0625
        %v1782 = vmul.f32 %v1576, 0.0625
        %v1783 = vmul.f32 %v1583, 0.0625
        %v1784 = vmul.f32 %v1590, 0.0625
        %v1785 = vmul.f32 %v1597, 0.0625
        %v1786 = vmul.f32 %v1604, 0.0625
        %v1787 = vmul.f32 %v1611, 0.0625
        %v1788 = vmul.f32 %v1618, 0.0625
        %v1789 = vmul.f32 %v1625, 0.0625
        %v1790 = vmul.f32 %v1632, 0.0625
        %v1791 = vmul.f32 %v1639, 0.0625
        %v1792 = vmul.f32 %v1646, 0.0625
        %v1793 = vmul.f32 %v1653, 0.0625
        %v1794 = vmul.f32 %v1660, 0.0625
        %v1795 = vmul.f32 %v1667, 0.0625
        %v1796 = vmul.f32 %v1674, 0.0625
        %v1797 = vmul.f32 %v1681, 0.0625
        %v1798 = vmul.f32 %v1688, 0.0625
        %v1799 = vmul.f32 %v1695, 0.0625
        %v1800 = vmul.f32 %v1702, 0.0625
        %v1801 = vmul.f32 %v1709, 0.0625
        %v1802 = vmul.f32 %v1716, 0.0625
        %v1803 = vmul.f32 %v1723, 0.0625
        %v1804 = vmul.f32 %v1730, 0.0625
        %v1805 = vmul.f32 %v1737, 0.0625
        %v1806 = vmul.f32 %v1744, 0.0625
        %v1807 = vmul.f32 %v1751, 0.0625
        %v1808 = vmul.f32 %v1758, 0.0625
        %v1809 = vmul.f32 %v1765, 0.0625
        %v1810 = vmul.f32 %v1772, 0.0625
        %v1811 = vmul.f32 %v1779, 0.0625
        %vm1844 = vcmask 1041409
        %v1845 = vsel %vm1844, %v1782, %v1780
        %vm1846 = vcmask 1042434
        %v1847 = vsel %vm1846, %v1784, %v1845
        %vm1848 = vcmask 1043459
        %v1849 = vsel %vm1848, %v1786, %v1847
        %vm1850 = vcmask 1044484
        %v1851 = vsel %vm1850, %v1788, %v1849
        %vm1852 = vcmask 1045509
        %v1853 = vsel %vm1852, %v1790, %v1851
        %vm1854 = vcmask 1046534
        %v1855 = vsel %vm1854, %v1792, %v1853
        %vm1856 = vcmask 1047559
        %v1857 = vsel %vm1856, %v1794, %v1855
        %v1858 = vsel %vm1844, %v1783, %v1781
        %v1859 = vsel %vm1846, %v1785, %v1858
        %v1860 = vsel %vm1848, %v1787, %v1859
        %v1861 = vsel %vm1850, %v1789, %v1860
        %v1862 = vsel %vm1852, %v1791, %v1861
        %v1863 = vsel %vm1854, %v1793, %v1862
        %v1864 = vsel %vm1856, %v1795, %v1863
        %v1865 = vsel %vm1844, %v1798, %v1796
        %v1866 = vsel %vm1846, %v1800, %v1865
        %v1867 = vsel %vm1848, %v1802, %v1866
        %v1868 = vsel %vm1850, %v1804, %v1867
        %v1869 = vsel %vm1852, %v1806, %v1868
        %v1870 = vsel %vm1854, %v1808, %v1869
        %v1871 = vsel %vm1856, %v1810, %v1870
        %v1872 = vsel %vm1844, %v1799, %v1797
        %v1873 = vsel %vm1846, %v1801, %v1872
        %v1874 = vsel %vm1848, %v1803, %v1873
        %v1875 = vsel %vm1850, %v1805, %v1874
        %v1876 = vsel %vm1852, %v1807, %v1875
        %v1877 = vsel %vm1854, %v1809, %v1876
        %v1878 = vsel %vm1856, %v1811, %v1877
        %1883 = vst [vmem:[#allocation2] sm:$0xff] %v1857
        %1884 = vst [vmem:[#allocation2 + $0x8] sm:$0xff] %v1864
        %1885 = vst [vmem:[#allocation2 + $0x10] sm:$0xff] %v1871
        %1886 = vst [vmem:[#allocation2 + $0x18] sm:$0xff] %v1878
        %v1887 = vld [vmem:[%s324] sm:$0xff]
        %v1888 = vld [vmem:[%s324 + $0x8] sm:$0xff]
        %v1889 = vld [vmem:[#allocation2] sm:$0xff]
        %v1890 = vld [vmem:[#allocation2 + $0x10] sm:$0xff]
        %v1891 = vld [vmem:[%s312] sm:$0xff]
        %v1892 = vld [vmem:[%s312 + $0x8] sm:$0xff]
        %v1894 = vsel %vm364, %v1889, 0
        %v1897 = vsel %vm364, %v1890, 0
        %1899 = vmatprep.subr.mxu0 0.0
        %1900 = vmatpush1.msra.mxu0 %v1891
        %1901 = vmatprep.subr.mxu0 0.0
        %1902 = vmatpush1.msra.mxu0 %v1892
        %1903 = vmatprep.subr.mxu0 0.0
        %1904 = vmatpush1.msra.mxu0 0.0
        %1905 = vmatprep.subr.mxu0 0.0
        %1906 = vmatpush1.msra.mxu0 0.0
        %1907 = vmatprep.subr.mxu0 0.0
        %1908 = vmatpush1.msra.mxu0 0.0
        %1909 = vmatprep.subr.mxu0 0.0
        %1910 = vmatpush1.msra.mxu0 0.0
        %1911 = vmatprep.subr.mxu0 0.0
        %1912 = vmatpush1.msra.mxu0 0.0
        %1913 = vmatprep.subr.mxu0 0.0
        %1914 = vmatpush1.msra.mxu0 0.0
        %1915 = vmatprep.subr.mxu0 0.0
        %1916 = vmatpush1.msra.mxu0 0.0
        %1917 = vmatprep.subr.mxu0 0.0
        %1918 = vmatpush1.msra.mxu0 0.0
        %1919 = vmatprep.subr.mxu0 0.0
        %1920 = vmatpush1.msra.mxu0 0.0
        %1921 = vmatprep.subr.mxu0 0.0
        %1922 = vmatpush1.msra.mxu0 0.0
        %1923 = vmatprep.subr.mxu0 0.0
        %1924 = vmatpush1.msra.mxu0 0.0
        %1925 = vmatprep.subr.mxu0 0.0
        %1926 = vmatpush1.msra.mxu0 0.0
        %1927 = vmatprep.subr.mxu0 0.0
        %1928 = vmatpush1.msra.mxu0 0.0
        %1929 = vmatprep.subr.mxu0 0.0
        %1930 = vmatpush1.msra.mxu0 0.0
        %1931 = vmatprep.subr.mxu0 0.0
        %1932 = vmatpush1.msra.mxu0 0.0
        %1933 = vmatprep.subr.mxu0 0.0
        %1934 = vmatpush1.msra.mxu0 0.0
        %1935 = vmatprep.subr.mxu0 0.0
        %1936 = vmatpush1.msra.mxu0 0.0
        %1937 = vmatprep.subr.mxu0 0.0
        %1938 = vmatpush1.msra.mxu0 0.0
        %1939 = vmatprep.subr.mxu0 0.0
        %1940 = vmatpush1.msra.mxu0 0.0
        %1941 = vmatprep.subr.mxu0 0.0
        %1942 = vmatpush1.msra.mxu0 0.0
        %1943 = vmatprep.subr.mxu0 0.0
        %1944 = vmatpush1.msra.mxu0 0.0
        %1945 = vmatprep.subr.mxu0 0.0
        %1946 = vmatpush1.msra.mxu0 0.0
        %1947 = vmatprep.subr.mxu0 0.0
        %1948 = vmatpush1.msra.mxu0 0.0
        %1949 = vmatprep.subr.mxu0 0.0
        %1950 = vmatpush1.msra.mxu0 0.0
        %1951 = vmatprep.subr.mxu0 0.0
        %1952 = vmatpush1.msra.mxu0 0.0
        %1953 = vmatprep.subr.mxu0 0.0
        %1954 = vmatpush1.msra.mxu0 0.0
        %1955 = vmatprep.subr.mxu0 0.0
        %1956 = vmatpush1.msra.mxu0 0.0
        %1957 = vmatprep.subr.mxu0 0.0
        %1958 = vmatpush1.msra.mxu0 0.0
        %1959 = vmatprep.subr.mxu0 0.0
        %1960 = vmatpush1.msra.mxu0 0.0
        %1961 = vmatprep.subr.mxu0 0.0
        %1962 = vmatpush1.msra.mxu0 0.0
        %1963 = vmatprep.mubr.f32.mxu0 0.0
        %1964 = vmatmul.mubr.f32.gmra.mrb[0].mxu0 %v1894
        %v1965 = vpop.f32.mrb[0].mxu0
        %v1966 = vadd.f32 0.0, %v1965
        %v1967 = vpop.f32.mrb[0].mxu0
        %1968 = vmatprep.mubr.f32.mxu0 0.0
        %1969 = vmatmul.mubr.f32.gmra.mrb[0].mxu0 %v1897
        %v1970 = vpop.f32.mrb[0].mxu0
        %v1971 = vadd.f32 0.0, %v1970
        %v1972 = vpop.f32.mrb[0].mxu0
        %1973 = vdwg.mxu0
        %v1974 = vsub.f32 %v1966, %v1887
        %v1975 = vsub.f32 %v1971, %v1888
        %v1976 = vmul.f32 %v1974, %v1974
        %v1977 = vmul.f32 %v1975, %v1975
        %1978 = vst.msk [vmem:[%s306] sm:$0xff] %vm364, %v1976
        %1979 = vst.msk [vmem:[%s306 + $0x8] sm:$0xff] %vm364, %v1977
        %v1980 = vld [vmem:[#allocation2] sm:$0xff]
        %v1981 = vld [vmem:[#allocation2 + $0x10] sm:$0xff]
        %v1982 = vld [vmem:[%s312 + $0x10] sm:$0xff]
        %v1983 = vld [vmem:[%s312 + $0x18] sm:$0xff]
        %1986 = vrot.lane.b32.xlu0 %v1980, 112
        %v1987 = vpop.permute.xlu0 %1986
        %1988 = vrot.lane.b32.xlu0 %v1981, 112
        %v1989 = vpop.permute.xlu0 %1988
        %v1990 = vsel %vm364, %v1987, 0
        %v1992 = vsel %vm364, %v1989, 0
        %1994 = vmatprep.subr.mxu0 0.0
        %1995 = vmatpush1.msra.mxu0 %v1982
        %1996 = vmatprep.subr.mxu0 0.0
        %1997 = vmatpush1.msra.mxu0 %v1983
        %1998 = vmatprep.subr.mxu0 0.0
        %1999 = vmatpush1.msra.mxu0 0.0
        %2000 = vmatprep.subr.mxu0 0.0
        %2001 = vmatpush1.msra.mxu0 0.0
        %2002 = vmatprep.subr.mxu0 0.0
        %2003 = vmatpush1.msra.mxu0 0.0
        %2004 = vmatprep.subr.mxu0 0.0
        %2005 = vmatpush1.msra.mxu0 0.0
        %2006 = vmatprep.subr.mxu0 0.0
        %2007 = vmatpush1.msra.mxu0 0.0
        %2008 = vmatprep.subr.mxu0 0.0
        %2009 = vmatpush1.msra.mxu0 0.0
        %2010 = vmatprep.subr.mxu0 0.0
        %2011 = vmatpush1.msra.mxu0 0.0
        %2012 = vmatprep.subr.mxu0 0.0
        %2013 = vmatpush1.msra.mxu0 0.0
        %2014 = vmatprep.subr.mxu0 0.0
        %2015 = vmatpush1.msra.mxu0 0.0
        %2016 = vmatprep.subr.mxu0 0.0
        %2017 = vmatpush1.msra.mxu0 0.0
        %2018 = vmatprep.subr.mxu0 0.0
        %2019 = vmatpush1.msra.mxu0 0.0
        %2020 = vmatprep.subr.mxu0 0.0
        %2021 = vmatpush1.msra.mxu0 0.0
        %2022 = vmatprep.subr.mxu0 0.0
        %2023 = vmatpush1.msra.mxu0 0.0
        %2024 = vmatprep.subr.mxu0 0.0
        %2025 = vmatpush1.msra.mxu0 0.0
        %2026 = vmatprep.subr.mxu0 0.0
        %2027 = vmatpush1.msra.mxu0 0.0
        %2028 = vmatprep.subr.mxu0 0.0
        %2029 = vmatpush1.msra.mxu0 0.0
        %2030 = vmatprep.subr.mxu0 0.0
        %2031 = vmatpush1.msra.mxu0 0.0
        %2032 = vmatprep.subr.mxu0 0.0
        %2033 = vmatpush1.msra.mxu0 0.0
        %2034 = vmatprep.subr.mxu0 0.0
        %2035 = vmatpush1.msra.mxu0 0.0
        %2036 = vmatprep.subr.mxu0 0.0
        %2037 = vmatpush1.msra.mxu0 0.0
        %2038 = vmatprep.subr.mxu0 0.0
        %2039 = vmatpush1.msra.mxu0 0.0
        %2040 = vmatprep.subr.mxu0 0.0
        %2041 = vmatpush1.msra.mxu0 0.0
        %2042 = vmatprep.subr.mxu0 0.0
        %2043 = vmatpush1.msra.mxu0 0.0
        %2044 = vmatprep.subr.mxu0 0.0
        %2045 = vmatpush1.msra.mxu0 0.0
        %2046 = vmatprep.subr.mxu0 0.0
        %2047 = vmatpush1.msra.mxu0 0.0
        %2048 = vmatprep.subr.mxu0 0.0
        %2049 = vmatpush1.msra.mxu0 0.0
        %2050 = vmatprep.subr.mxu0 0.0
        %2051 = vmatpush1.msra.mxu0 0.0
        %2052 = vmatprep.subr.mxu0 0.0
        %2053 = vmatpush1.msra.mxu0 0.0
        %2054 = vmatprep.subr.mxu0 0.0
        %2055 = vmatpush1.msra.mxu0 0.0
        %2056 = vmatprep.subr.mxu0 0.0
        %2057 = vmatpush1.msra.mxu0 0.0
        %2058 = vmatprep.mubr.f32.mxu0 0.0
        %2059 = vmatmul.mubr.f32.gmra.mrb[0].mxu0 %v1990
        %v2060 = vpop.f32.mrb[0].mxu0
        %v2061 = vadd.f32 0.0, %v2060
        %v2062 = vpop.f32.mrb[0].mxu0
        %2063 = vmatprep.mubr.f32.mxu0 0.0
        %2064 = vmatmul.mubr.f32.gmra.mrb[0].mxu0 %v1992
        %v2065 = vpop.f32.mrb[0].mxu0
        %v2066 = vadd.f32 0.0, %v2065
        %v2067 = vpop.f32.mrb[0].mxu0
        %2068 = vdwg.mxu0
        %v2069 = vsub.f32 %v2061, %v1887
        %v2070 = vsub.f32 %v2066, %v1888
        %v2071 = vmul.f32 %v2069, %v2069
        %v2072 = vmul.f32 %v2070, %v2070
        %s2073 = scalar_lea.vmem %s306, 16 [#allocation4]
        %2074 = vst.msk [vmem:[%s2073] sm:$0xff] %vm364, %v2071
        %2075 = vst.msk [vmem:[%s2073 + $0x8] sm:$0xff] %vm364, %v2072
        %v2076 = vld [vmem:[#allocation2] sm:$0xff]
        %v2077 = vld [vmem:[#allocation2 + $0x10] sm:$0xff]
        %v2078 = vld [vmem:[%s312 + $0x20] sm:$0xff]
        %v2079 = vld [vmem:[%s312 + $0x28] sm:$0xff]
        %2082 = vrot.lane.b32.xlu0 %v2076, 96
        %v2083 = vpop.permute.xlu0 %2082
        %2084 = vrot.lane.b32.xlu0 %v2077, 96
        %v2085 = vpop.permute.xlu0 %2084
        %v2086 = vsel %vm364, %v2083, 0
        %v2088 = vsel %vm364, %v2085, 0
        %2090 = vmatprep.subr.mxu0 0.0
        %2091 = vmatpush1.msra.mxu0 %v2078
        %2092 = vmatprep.subr.mxu0 0.0
        %2093 = vmatpush1.msra.mxu0 %v2079
        %2094 = vmatprep.subr.mxu0 0.0
        %2095 = vmatpush1.msra.mxu0 0.0
        %2096 = vmatprep.subr.mxu0 0.0
        %2097 = vmatpush1.msra.mxu0 0.0
        %2098 = vmatprep.subr.mxu0 0.0
        %2099 = vmatpush1.msra.mxu0 0.0
        %2100 = vmatprep.subr.mxu0 0.0
        %2101 = vmatpush1.msra.mxu0 0.0
        %2102 = vmatprep.subr.mxu0 0.0
        %2103 = vmatpush1.msra.mxu0 0.0
        %2104 = vmatprep.subr.mxu0 0.0
        %2105 = vmatpush1.msra.mxu0 0.0
        %2106 = vmatprep.subr.mxu0 0.0
        %2107 = vmatpush1.msra.mxu0 0.0
        %2108 = vmatprep.subr.mxu0 0.0
        %2109 = vmatpush1.msra.mxu0 0.0
        %2110 = vmatprep.subr.mxu0 0.0
        %2111 = vmatpush1.msra.mxu0 0.0
        %2112 = vmatprep.subr.mxu0 0.0
        %2113 = vmatpush1.msra.mxu0 0.0
        %2114 = vmatprep.subr.mxu0 0.0
        %2115 = vmatpush1.msra.mxu0 0.0
        %2116 = vmatprep.subr.mxu0 0.0
        %2117 = vmatpush1.msra.mxu0 0.0
        %2118 = vmatprep.subr.mxu0 0.0
        %2119 = vmatpush1.msra.mxu0 0.0
        %2120 = vmatprep.subr.mxu0 0.0
        %2121 = vmatpush1.msra.mxu0 0.0
        %2122 = vmatprep.subr.mxu0 0.0
        %2123 = vmatpush1.msra.mxu0 0.0
        %2124 = vmatprep.subr.mxu0 0.0
        %2125 = vmatpush1.msra.mxu0 0.0
        %2126 = vmatprep.subr.mxu0 0.0
        %2127 = vmatpush1.msra.mxu0 0.0
        %2128 = vmatprep.subr.mxu0 0.0
        %2129 = vmatpush1.msra.mxu0 0.0
        %2130 = vmatprep.subr.mxu0 0.0
        %2131 = vmatpush1.msra.mxu0 0.0
        %2132 = vmatprep.subr.mxu0 0.0
        %2133 = vmatpush1.msra.mxu0 0.0
        %2134 = vmatprep.subr.mxu0 0.0
        %2135 = vmatpush1.msra.mxu0 0.0
        %2136 = vmatprep.subr.mxu0 0.0
        %2137 = vmatpush1.msra.mxu0 0.0
        %2138 = vmatprep.subr.mxu0 0.0
        %2139 = vmatpush1.msra.mxu0 0.0
        %2140 = vmatprep.subr.mxu0 0.0
        %2141 = vmatpush1.msra.mxu0 0.0
        %2142 = vmatprep.subr.mxu0 0.0
        %2143 = vmatpush1.msra.mxu0 0.0
        %2144 = vmatprep.subr.mxu0 0.0
        %2145 = vmatpush1.msra.mxu0 0.0
        %2146 = vmatprep.subr.mxu0 0.0
        %2147 = vmatpush1.msra.mxu0 0.0
        %2148 = vmatprep.subr.mxu0 0.0
        %2149 = vmatpush1.msra.mxu0 0.0
        %2150 = vmatprep.subr.mxu0 0.0
        %2151 = vmatpush1.msra.mxu0 0.0
        %2152 = vmatprep.subr.mxu0 0.0
        %2153 = vmatpush1.msra.mxu0 0.0
        %2154 = vmatprep.mubr.f32.mxu0 0.0
        %2155 = vmatmul.mubr.f32.gmra.mrb[0].mxu0 %v2086
        %v2156 = vpop.f32.mrb[0].mxu0
        %v2157 = vadd.f32 0.0, %v2156
        %v2158 = vpop.f32.mrb[0].mxu0
        %2159 = vmatprep.mubr.f32.mxu0 0.0
        %2160 = vmatmul.mubr.f32.gmra.mrb[0].mxu0 %v2088
        %v2161 = vpop.f32.mrb[0].mxu0
        %v2162 = vadd.f32 0.0, %v2161
        %v2163 = vpop.f32.mrb[0].mxu0
        %2164 = vdwg.mxu0
        %v2165 = vsub.f32 %v2157, %v1887
        %v2166 = vsub.f32 %v2162, %v1888
        %v2167 = vmul.f32 %v2165, %v2165
        %v2168 = vmul.f32 %v2166, %v2166
        %s2169 = scalar_lea.vmem %s306, 32 [#allocation4]
        %2170 = vst.msk [vmem:[%s2169] sm:$0xff] %vm364, %v2167
        %2171 = vst.msk [vmem:[%s2169 + $0x8] sm:$0xff] %vm364, %v2168
        %v2172 = vld [vmem:[#allocation2] sm:$0xff]
        %v2173 = vld [vmem:[#allocation2 + $0x10] sm:$0xff]
        %v2174 = vld [vmem:[%s312 + $0x30] sm:$0xff]
        %v2175 = vld [vmem:[%s312 + $0x38] sm:$0xff]
        %2178 = vrot.lane.b32.xlu0 %v2172, 80
        %v2179 = vpop.permute.xlu0 %2178
        %2180 = vrot.lane.b32.xlu0 %v2173, 80
        %v2181 = vpop.permute.xlu0 %2180
        %v2182 = vsel %vm364, %v2179, 0
        %v2184 = vsel %vm364, %v2181, 0
        %2186 = vmatprep.subr.mxu0 0.0
        %2187 = vmatpush1.msra.mxu0 %v2174
        %2188 = vmatprep.subr.mxu0 0.0
        %2189 = vmatpush1.msra.mxu0 %v2175
        %2190 = vmatprep.subr.mxu0 0.0
        %2191 = vmatpush1.msra.mxu0 0.0
        %2192 = vmatprep.subr.mxu0 0.0
        %2193 = vmatpush1.msra.mxu0 0.0
        %2194 = vmatprep.subr.mxu0 0.0
        %2195 = vmatpush1.msra.mxu0 0.0
        %2196 = vmatprep.subr.mxu0 0.0
        %2197 = vmatpush1.msra.mxu0 0.0
        %2198 = vmatprep.subr.mxu0 0.0
        %2199 = vmatpush1.msra.mxu0 0.0
        %2200 = vmatprep.subr.mxu0 0.0
        %2201 = vmatpush1.msra.mxu0 0.0
        %2202 = vmatprep.subr.mxu0 0.0
        %2203 = vmatpush1.msra.mxu0 0.0
        %2204 = vmatprep.subr.mxu0 0.0
        %2205 = vmatpush1.msra.mxu0 0.0
        %2206 = vmatprep.subr.mxu0 0.0
        %2207 = vmatpush1.msra.mxu0 0.0
        %2208 = vmatprep.subr.mxu0 0.0
        %2209 = vmatpush1.msra.mxu0 0.0
        %2210 = vmatprep.subr.mxu0 0.0
        %2211 = vmatpush1.msra.mxu0 0.0
        %2212 = vmatprep.subr.mxu0 0.0
        %2213 = vmatpush1.msra.mxu0 0.0
        %2214 = vmatprep.subr.mxu0 0.0
        %2215 = vmatpush1.msra.mxu0 0.0
        %2216 = vmatprep.subr.mxu0 0.0
        %2217 = vmatpush1.msra.mxu0 0.0
        %2218 = vmatprep.subr.mxu0 0.0
        %2219 = vmatpush1.msra.mxu0 0.0
        %2220 = vmatprep.subr.mxu0 0.0
        %2221 = vmatpush1.msra.mxu0 0.0
        %2222 = vmatprep.subr.mxu0 0.0
        %2223 = vmatpush1.msra.mxu0 0.0
        %2224 = vmatprep.subr.mxu0 0.0
        %2225 = vmatpush1.msra.mxu0 0.0
        %2226 = vmatprep.subr.mxu0 0.0
        %2227 = vmatpush1.msra.mxu0 0.0
        %2228 = vmatprep.subr.mxu0 0.0
        %2229 = vmatpush1.msra.mxu0 0.0
        %2230 = vmatprep.subr.mxu0 0.0
        %2231 = vmatpush1.msra.mxu0 0.0
        %2232 = vmatprep.subr.mxu0 0.0
        %2233 = vmatpush1.msra.mxu0 0.0
        %2234 = vmatprep.subr.mxu0 0.0
        %2235 = vmatpush1.msra.mxu0 0.0
        %2236 = vmatprep.subr.mxu0 0.0
        %2237 = vmatpush1.msra.mxu0 0.0
        %2238 = vmatprep.subr.mxu0 0.0
        %2239 = vmatpush1.msra.mxu0 0.0
        %2240 = vmatprep.subr.mxu0 0.0
        %2241 = vmatpush1.msra.mxu0 0.0
        %2242 = vmatprep.subr.mxu0 0.0
        %2243 = vmatpush1.msra.mxu0 0.0
        %2244 = vmatprep.subr.mxu0 0.0
        %2245 = vmatpush1.msra.mxu0 0.0
        %2246 = vmatprep.subr.mxu0 0.0
        %2247 = vmatpush1.msra.mxu0 0.0
        %2248 = vmatprep.subr.mxu0 0.0
        %2249 = vmatpush1.msra.mxu0 0.0
        %2250 = vmatprep.mubr.f32.mxu0 0.0
        %2251 = vmatmul.mubr.f32.gmra.mrb[0].mxu0 %v2182
        %v2252 = vpop.f32.mrb[0].mxu0
        %v2253 = vadd.f32 0.0, %v2252
        %v2254 = vpop.f32.mrb[0].mxu0
        %2255 = vmatprep.mubr.f32.mxu0 0.0
        %2256 = vmatmul.mubr.f32.gmra.mrb[0].mxu0 %v2184
        %v2257 = vpop.f32.mrb[0].mxu0
        %v2258 = vadd.f32 0.0, %v2257
        %v2259 = vpop.f32.mrb[0].mxu0
        %2260 = vdwg.mxu0
        %v2261 = vsub.f32 %v2253, %v1887
        %v2262 = vsub.f32 %v2258, %v1888
        %v2263 = vmul.f32 %v2261, %v2261
        %v2264 = vmul.f32 %v2262, %v2262
        %s2265 = scalar_lea.vmem %s306, 48 [#allocation4]
        %2266 = vst.msk [vmem:[%s2265] sm:$0xff] %vm364, %v2263
        %2267 = vst.msk [vmem:[%s2265 + $0x8] sm:$0xff] %vm364, %v2264
        %v2268 = vld [vmem:[#allocation2] sm:$0xff]
        %v2269 = vld [vmem:[#allocation2 + $0x10] sm:$0xff]
        %v2270 = vld [vmem:[%s312 + $0x40] sm:$0xff]
        %v2271 = vld [vmem:[%s312 + $0x48] sm:$0xff]
        %2274 = vrot.lane.b32.xlu0 %v2268, 64
        %v2275 = vpop.permute.xlu0 %2274
        %2276 = vrot.lane.b32.xlu0 %v2269, 64
        %v2277 = vpop.permute.xlu0 %2276
        %v2278 = vsel %vm364, %v2275, 0
        %v2280 = vsel %vm364, %v2277, 0
        %2282 = vmatprep.subr.mxu0 0.0
        %2283 = vmatpush1.msra.mxu0 %v2270
        %2284 = vmatprep.subr.mxu0 0.0
        %2285 = vmatpush1.msra.mxu0 %v2271
        %2286 = vmatprep.subr.mxu0 0.0
        %2287 = vmatpush1.msra.mxu0 0.0
        %2288 = vmatprep.subr.mxu0 0.0
        %2289 = vmatpush1.msra.mxu0 0.0
        %2290 = vmatprep.subr.mxu0 0.0
        %2291 = vmatpush1.msra.mxu0 0.0
        %2292 = vmatprep.subr.mxu0 0.0
        %2293 = vmatpush1.msra.mxu0 0.0
        %2294 = vmatprep.subr.mxu0 0.0
        %2295 = vmatpush1.msra.mxu0 0.0
        %2296 = vmatprep.subr.mxu0 0.0
        %2297 = vmatpush1.msra.mxu0 0.0
        %2298 = vmatprep.subr.mxu0 0.0
        %2299 = vmatpush1.msra.mxu0 0.0
        %2300 = vmatprep.subr.mxu0 0.0
        %2301 = vmatpush1.msra.mxu0 0.0
        %2302 = vmatprep.subr.mxu0 0.0
        %2303 = vmatpush1.msra.mxu0 0.0
        %2304 = vmatprep.subr.mxu0 0.0
        %2305 = vmatpush1.msra.mxu0 0.0
        %2306 = vmatprep.subr.mxu0 0.0
        %2307 = vmatpush1.msra.mxu0 0.0
        %2308 = vmatprep.subr.mxu0 0.0
        %2309 = vmatpush1.msra.mxu0 0.0
        %2310 = vmatprep.subr.mxu0 0.0
        %2311 = vmatpush1.msra.mxu0 0.0
        %2312 = vmatprep.subr.mxu0 0.0
        %2313 = vmatpush1.msra.mxu0 0.0
        %2314 = vmatprep.subr.mxu0 0.0
        %2315 = vmatpush1.msra.mxu0 0.0
        %2316 = vmatprep.subr.mxu0 0.0
        %2317 = vmatpush1.msra.mxu0 0.0
        %2318 = vmatprep.subr.mxu0 0.0
        %2319 = vmatpush1.msra.mxu0 0.0
        %2320 = vmatprep.subr.mxu0 0.0
        %2321 = vmatpush1.msra.mxu0 0.0
        %2322 = vmatprep.subr.mxu0 0.0
        %2323 = vmatpush1.msra.mxu0 0.0
        %2324 = vmatprep.subr.mxu0 0.0
        %2325 = vmatpush1.msra.mxu0 0.0
        %2326 = vmatprep.subr.mxu0 0.0
        %2327 = vmatpush1.msra.mxu0 0.0
        %2328 = vmatprep.subr.mxu0 0.0
        %2329 = vmatpush1.msra.mxu0 0.0
        %2330 = vmatprep.subr.mxu0 0.0
        %2331 = vmatpush1.msra.mxu0 0.0
        %2332 = vmatprep.subr.mxu0 0.0
        %2333 = vmatpush1.msra.mxu0 0.0
        %2334 = vmatprep.subr.mxu0 0.0
        %2335 = vmatpush1.msra.mxu0 0.0
        %2336 = vmatprep.subr.mxu0 0.0
        %2337 = vmatpush1.msra.mxu0 0.0
        %2338 = vmatprep.subr.mxu0 0.0
        %2339 = vmatpush1.msra.mxu0 0.0
        %2340 = vmatprep.subr.mxu0 0.0
        %2341 = vmatpush1.msra.mxu0 0.0
        %2342 = vmatprep.subr.mxu0 0.0
        %2343 = vmatpush1.msra.mxu0 0.0
        %2344 = vmatprep.subr.mxu0 0.0
        %2345 = vmatpush1.msra.mxu0 0.0
        %2346 = vmatprep.mubr.f32.mxu0 0.0
        %2347 = vmatmul.mubr.f32.gmra.mrb[0].mxu0 %v2278
        %v2348 = vpop.f32.mrb[0].mxu0
        %v2349 = vadd.f32 0.0, %v2348
        %v2350 = vpop.f32.mrb[0].mxu0
        %2351 = vmatprep.mubr.f32.mxu0 0.0
        %2352 = vmatmul.mubr.f32.gmra.mrb[0].mxu0 %v2280
        %v2353 = vpop.f32.mrb[0].mxu0
        %v2354 = vadd.f32 0.0, %v2353
        %v2355 = vpop.f32.mrb[0].mxu0
        %2356 = vdwg.mxu0
        %v2357 = vsub.f32 %v2349, %v1887
        %v2358 = vsub.f32 %v2354, %v1888
        %v2359 = vmul.f32 %v2357, %v2357
        %v2360 = vmul.f32 %v2358, %v2358
        %s2361 = scalar_lea.vmem %s306, 64 [#allocation4]
        %2362 = vst.msk [vmem:[%s2361] sm:$0xff] %vm364, %v2359
        %2363 = vst.msk [vmem:[%s2361 + $0x8] sm:$0xff] %vm364, %v2360
        %v2364 = vld [vmem:[#allocation2] sm:$0xff]
        %v2365 = vld [vmem:[#allocation2 + $0x10] sm:$0xff]
        %v2366 = vld [vmem:[%s312 + $0x50] sm:$0xff]
        %v2367 = vld [vmem:[%s312 + $0x58] sm:$0xff]
        %2370 = vrot.lane.b32.xlu0 %v2364, 48
        %v2371 = vpop.permute.xlu0 %2370
        %2372 = vrot.lane.b32.xlu0 %v2365, 48
        %v2373 = vpop.permute.xlu0 %2372
        %v2374 = vsel %vm364, %v2371, 0
        %v2376 = vsel %vm364, %v2373, 0
        %2378 = vmatprep.subr.mxu0 0.0
        %2379 = vmatpush1.msra.mxu0 %v2366
        %2380 = vmatprep.subr.mxu0 0.0
        %2381 = vmatpush1.msra.mxu0 %v2367
        %2382 = vmatprep.subr.mxu0 0.0
        %2383 = vmatpush1.msra.mxu0 0.0
        %2384 = vmatprep.subr.mxu0 0.0
        %2385 = vmatpush1.msra.mxu0 0.0
        %2386 = vmatprep.subr.mxu0 0.0
        %2387 = vmatpush1.msra.mxu0 0.0
        %2388 = vmatprep.subr.mxu0 0.0
        %2389 = vmatpush1.msra.mxu0 0.0
        %2390 = vmatprep.subr.mxu0 0.0
        %2391 = vmatpush1.msra.mxu0 0.0
        %2392 = vmatprep.subr.mxu0 0.0
        %2393 = vmatpush1.msra.mxu0 0.0
        %2394 = vmatprep.subr.mxu0 0.0
        %2395 = vmatpush1.msra.mxu0 0.0
        %2396 = vmatprep.subr.mxu0 0.0
        %2397 = vmatpush1.msra.mxu0 0.0
        %2398 = vmatprep.subr.mxu0 0.0
        %2399 = vmatpush1.msra.mxu0 0.0
        %2400 = vmatprep.subr.mxu0 0.0
        %2401 = vmatpush1.msra.mxu0 0.0
        %2402 = vmatprep.subr.mxu0 0.0
        %2403 = vmatpush1.msra.mxu0 0.0
        %2404 = vmatprep.subr.mxu0 0.0
        %2405 = vmatpush1.msra.mxu0 0.0
        %2406 = vmatprep.subr.mxu0 0.0
        %2407 = vmatpush1.msra.mxu0 0.0
        %2408 = vmatprep.subr.mxu0 0.0
        %2409 = vmatpush1.msra.mxu0 0.0
        %2410 = vmatprep.subr.mxu0 0.0
        %2411 = vmatpush1.msra.mxu0 0.0
        %2412 = vmatprep.subr.mxu0 0.0
        %2413 = vmatpush1.msra.mxu0 0.0
        %2414 = vmatprep.subr.mxu0 0.0
        %2415 = vmatpush1.msra.mxu0 0.0
        %2416 = vmatprep.subr.mxu0 0.0
        %2417 = vmatpush1.msra.mxu0 0.0
        %2418 = vmatprep.subr.mxu0 0.0
        %2419 = vmatpush1.msra.mxu0 0.0
        %2420 = vmatprep.subr.mxu0 0.0
        %2421 = vmatpush1.msra.mxu0 0.0
        %2422 = vmatprep.subr.mxu0 0.0
        %2423 = vmatpush1.msra.mxu0 0.0
        %2424 = vmatprep.subr.mxu0 0.0
        %2425 = vmatpush1.msra.mxu0 0.0
        %2426 = vmatprep.subr.mxu0 0.0
        %2427 = vmatpush1.msra.mxu0 0.0
        %2428 = vmatprep.subr.mxu0 0.0
        %2429 = vmatpush1.msra.mxu0 0.0
        %2430 = vmatprep.subr.mxu0 0.0
        %2431 = vmatpush1.msra.mxu0 0.0
        %2432 = vmatprep.subr.mxu0 0.0
        %2433 = vmatpush1.msra.mxu0 0.0
        %2434 = vmatprep.subr.mxu0 0.0
        %2435 = vmatpush1.msra.mxu0 0.0
        %2436 = vmatprep.subr.mxu0 0.0
        %2437 = vmatpush1.msra.mxu0 0.0
        %2438 = vmatprep.subr.mxu0 0.0
        %2439 = vmatpush1.msra.mxu0 0.0
        %2440 = vmatprep.subr.mxu0 0.0
        %2441 = vmatpush1.msra.mxu0 0.0
        %2442 = vmatprep.mubr.f32.mxu0 0.0
        %2443 = vmatmul.mubr.f32.gmra.mrb[0].mxu0 %v2374
        %v2444 = vpop.f32.mrb[0].mxu0
        %v2445 = vadd.f32 0.0, %v2444
        %v2446 = vpop.f32.mrb[0].mxu0
        %2447 = vmatprep.mubr.f32.mxu0 0.0
        %2448 = vmatmul.mubr.f32.gmra.mrb[0].mxu0 %v2376
        %v2449 = vpop.f32.mrb[0].mxu0
        %v2450 = vadd.f32 0.0, %v2449
        %v2451 = vpop.f32.mrb[0].mxu0
        %2452 = vdwg.mxu0
        %v2453 = vsub.f32 %v2445, %v1887
        %v2454 = vsub.f32 %v2450, %v1888
        %v2455 = vmul.f32 %v2453, %v2453
        %v2456 = vmul.f32 %v2454, %v2454
        %s2457 = scalar_lea.vmem %s306, 80 [#allocation4]
        %2458 = vst.msk [vmem:[%s2457] sm:$0xff] %vm364, %v2455
        %2459 = vst.msk [vmem:[%s2457 + $0x8] sm:$0xff] %vm364, %v2456
        %v2460 = vld [vmem:[#allocation2] sm:$0xff]
        %v2461 = vld [vmem:[#allocation2 + $0x10] sm:$0xff]
        %v2462 = vld [vmem:[%s312 + $0x60] sm:$0xff]
        %v2463 = vld [vmem:[%s312 + $0x68] sm:$0xff]
        %2466 = vrot.lane.b32.xlu0 %v2460, 32
        %v2467 = vpop.permute.xlu0 %2466
        %2468 = vrot.lane.b32.xlu0 %v2461, 32
        %v2469 = vpop.permute.xlu0 %2468
        %v2470 = vsel %vm364, %v2467, 0
        %v2472 = vsel %vm364, %v2469, 0
        %2474 = vmatprep.subr.mxu0 0.0
        %2475 = vmatpush1.msra.mxu0 %v2462
        %2476 = vmatprep.subr.mxu0 0.0
        %2477 = vmatpush1.msra.mxu0 %v2463
        %2478 = vmatprep.subr.mxu0 0.0
        %2479 = vmatpush1.msra.mxu0 0.0
        %2480 = vmatprep.subr.mxu0 0.0
        %2481 = vmatpush1.msra.mxu0 0.0
        %2482 = vmatprep.subr.mxu0 0.0
        %2483 = vmatpush1.msra.mxu0 0.0
        %2484 = vmatprep.subr.mxu0 0.0
        %2485 = vmatpush1.msra.mxu0 0.0
        %2486 = vmatprep.subr.mxu0 0.0
        %2487 = vmatpush1.msra.mxu0 0.0
        %2488 = vmatprep.subr.mxu0 0.0
        %2489 = vmatpush1.msra.mxu0 0.0
        %2490 = vmatprep.subr.mxu0 0.0
        %2491 = vmatpush1.msra.mxu0 0.0
        %2492 = vmatprep.subr.mxu0 0.0
        %2493 = vmatpush1.msra.mxu0 0.0
        %2494 = vmatprep.subr.mxu0 0.0
        %2495 = vmatpush1.msra.mxu0 0.0
        %2496 = vmatprep.subr.mxu0 0.0
        %2497 = vmatpush1.msra.mxu0 0.0
        %2498 = vmatprep.subr.mxu0 0.0
        %2499 = vmatpush1.msra.mxu0 0.0
        %2500 = vmatprep.subr.mxu0 0.0
        %2501 = vmatpush1.msra.mxu0 0.0
        %2502 = vmatprep.subr.mxu0 0.0
        %2503 = vmatpush1.msra.mxu0 0.0
        %2504 = vmatprep.subr.mxu0 0.0
        %2505 = vmatpush1.msra.mxu0 0.0
        %2506 = vmatprep.subr.mxu0 0.0
        %2507 = vmatpush1.msra.mxu0 0.0
        %2508 = vmatprep.subr.mxu0 0.0
        %2509 = vmatpush1.msra.mxu0 0.0
        %2510 = vmatprep.subr.mxu0 0.0
        %2511 = vmatpush1.msra.mxu0 0.0
        %2512 = vmatprep.subr.mxu0 0.0
        %2513 = vmatpush1.msra.mxu0 0.0
        %2514 = vmatprep.subr.mxu0 0.0
        %2515 = vmatpush1.msra.mxu0 0.0
        %2516 = vmatprep.subr.mxu0 0.0
        %2517 = vmatpush1.msra.mxu0 0.0
        %2518 = vmatprep.subr.mxu0 0.0
        %2519 = vmatpush1.msra.mxu0 0.0
        %2520 = vmatprep.subr.mxu0 0.0
        %2521 = vmatpush1.msra.mxu0 0.0
        %2522 = vmatprep.subr.mxu0 0.0
        %2523 = vmatpush1.msra.mxu0 0.0
        %2524 = vmatprep.subr.mxu0 0.0
        %2525 = vmatpush1.msra.mxu0 0.0
        %2526 = vmatprep.subr.mxu0 0.0
        %2527 = vmatpush1.msra.mxu0 0.0
        %2528 = vmatprep.subr.mxu0 0.0
        %2529 = vmatpush1.msra.mxu0 0.0
        %2530 = vmatprep.subr.mxu0 0.0
        %2531 = vmatpush1.msra.mxu0 0.0
        %2532 = vmatprep.subr.mxu0 0.0
        %2533 = vmatpush1.msra.mxu0 0.0
        %2534 = vmatprep.subr.mxu0 0.0
        %2535 = vmatpush1.msra.mxu0 0.0
        %2536 = vmatprep.subr.mxu0 0.0
        %2537 = vmatpush1.msra.mxu0 0.0
        %2538 = vmatprep.mubr.f32.mxu0 0.0
        %2539 = vmatmul.mubr.f32.gmra.mrb[0].mxu0 %v2470
        %v2540 = vpop.f32.mrb[0].mxu0
        %v2541 = vadd.f32 0.0, %v2540
        %v2542 = vpop.f32.mrb[0].mxu0
        %2543 = vmatprep.mubr.f32.mxu0 0.0
        %2544 = vmatmul.mubr.f32.gmra.mrb[0].mxu0 %v2472
        %v2545 = vpop.f32.mrb[0].mxu0
        %v2546 = vadd.f32 0.0, %v2545
        %v2547 = vpop.f32.mrb[0].mxu0
        %2548 = vdwg.mxu0
        %v2549 = vsub.f32 %v2541, %v1887
        %v2550 = vsub.f32 %v2546, %v1888
        %v2551 = vmul.f32 %v2549, %v2549
        %v2552 = vmul.f32 %v2550, %v2550
        %s2553 = scalar_lea.vmem %s306, 96 [#allocation4]
        %2554 = vst.msk [vmem:[%s2553] sm:$0xff] %vm364, %v2551
        %2555 = vst.msk [vmem:[%s2553 + $0x8] sm:$0xff] %vm364, %v2552
        %v2556 = vld [vmem:[#allocation2] sm:$0xff]
        %v2557 = vld [vmem:[#allocation2 + $0x10] sm:$0xff]
        %v2558 = vld [vmem:[%s312 + $0x70] sm:$0xff]
        %v2559 = vld [vmem:[%s312 + $0x78] sm:$0xff]
        %2562 = vrot.lane.b32.xlu0 %v2556, 16
        %v2563 = vpop.permute.xlu0 %2562
        %2564 = vrot.lane.b32.xlu0 %v2557, 16
        %v2565 = vpop.permute.xlu0 %2564
        %v2566 = vsel %vm364, %v2563, 0
        %v2568 = vsel %vm364, %v2565, 0
        %2570 = vmatprep.subr.mxu0 0.0
        %2571 = vmatpush1.msra.mxu0 %v2558
        %2572 = vmatprep.subr.mxu0 0.0
        %2573 = vmatpush1.msra.mxu0 %v2559
        %2574 = vmatprep.subr.mxu0 0.0
        %2575 = vmatpush1.msra.mxu0 0.0
        %2576 = vmatprep.subr.mxu0 0.0
        %2577 = vmatpush1.msra.mxu0 0.0
        %2578 = vmatprep.subr.mxu0 0.0
        %2579 = vmatpush1.msra.mxu0 0.0
        %2580 = vmatprep.subr.mxu0 0.0
        %2581 = vmatpush1.msra.mxu0 0.0
        %2582 = vmatprep.subr.mxu0 0.0
        %2583 = vmatpush1.msra.mxu0 0.0
        %2584 = vmatprep.subr.mxu0 0.0
        %2585 = vmatpush1.msra.mxu0 0.0
        %2586 = vmatprep.subr.mxu0 0.0
        %2587 = vmatpush1.msra.mxu0 0.0
        %2588 = vmatprep.subr.mxu0 0.0
        %2589 = vmatpush1.msra.mxu0 0.0
        %2590 = vmatprep.subr.mxu0 0.0
        %2591 = vmatpush1.msra.mxu0 0.0
        %2592 = vmatprep.subr.mxu0 0.0
        %2593 = vmatpush1.msra.mxu0 0.0
        %2594 = vmatprep.subr.mxu0 0.0
        %2595 = vmatpush1.msra.mxu0 0.0
        %2596 = vmatprep.subr.mxu0 0.0
        %2597 = vmatpush1.msra.mxu0 0.0
        %2598 = vmatprep.subr.mxu0 0.0
        %2599 = vmatpush1.msra.mxu0 0.0
        %2600 = vmatprep.subr.mxu0 0.0
        %2601 = vmatpush1.msra.mxu0 0.0
        %2602 = vmatprep.subr.mxu0 0.0
        %2603 = vmatpush1.msra.mxu0 0.0
        %2604 = vmatprep.subr.mxu0 0.0
        %2605 = vmatpush1.msra.mxu0 0.0
        %2606 = vmatprep.subr.mxu0 0.0
        %2607 = vmatpush1.msra.mxu0 0.0
        %2608 = vmatprep.subr.mxu0 0.0
        %2609 = vmatpush1.msra.mxu0 0.0
        %2610 = vmatprep.subr.mxu0 0.0
        %2611 = vmatpush1.msra.mxu0 0.0
        %2612 = vmatprep.subr.mxu0 0.0
        %2613 = vmatpush1.msra.mxu0 0.0
        %2614 = vmatprep.subr.mxu0 0.0
        %2615 = vmatpush1.msra.mxu0 0.0
        %2616 = vmatprep.subr.mxu0 0.0
        %2617 = vmatpush1.msra.mxu0 0.0
        %2618 = vmatprep.subr.mxu0 0.0
        %2619 = vmatpush1.msra.mxu0 0.0
        %2620 = vmatprep.subr.mxu0 0.0
        %2621 = vmatpush1.msra.mxu0 0.0
        %2622 = vmatprep.subr.mxu0 0.0
        %2623 = vmatpush1.msra.mxu0 0.0
        %2624 = vmatprep.subr.mxu0 0.0
        %2625 = vmatpush1.msra.mxu0 0.0
        %2626 = vmatprep.subr.mxu0 0.0
        %2627 = vmatpush1.msra.mxu0 0.0
        %2628 = vmatprep.subr.mxu0 0.0
        %2629 = vmatpush1.msra.mxu0 0.0
        %2630 = vmatprep.subr.mxu0 0.0
        %2631 = vmatpush1.msra.mxu0 0.0
        %2632 = vmatprep.subr.mxu0 0.0
        %2633 = vmatpush1.msra.mxu0 0.0
        %2634 = vmatprep.mubr.f32.mxu0 0.0
        %2635 = vmatmul.mubr.f32.gmra.mrb[0].mxu0 %v2566
        %v2636 = vpop.f32.mrb[0].mxu0
        %v2637 = vadd.f32 0.0, %v2636
        %v2638 = vpop.f32.mrb[0].mxu0
        %2639 = vmatprep.mubr.f32.mxu0 0.0
        %2640 = vmatmul.mubr.f32.gmra.mrb[0].mxu0 %v2568
        %v2641 = vpop.f32.mrb[0].mxu0
        %v2642 = vadd.f32 0.0, %v2641
        %v2643 = vpop.f32.mrb[0].mxu0
        %2644 = vdwg.mxu0
        %v2645 = vsub.f32 %v2637, %v1887
        %v2646 = vsub.f32 %v2642, %v1888
        %v2647 = vmul.f32 %v2645, %v2645
        %v2648 = vmul.f32 %v2646, %v2646
        %s2649 = scalar_lea.vmem %s306, 112 [#allocation4]
        %2650 = vst.msk [vmem:[%s2649] sm:$0xff] %vm364, %v2647
        %2651 = vst.msk [vmem:[%s2649 + $0x8] sm:$0xff] %vm364, %v2648
        %v2652 = vld [vmem:[#allocation2 + $0x8] sm:$0xff]
        %v2653 = vld [vmem:[#allocation2 + $0x18] sm:$0xff]
        %v2654 = vld [vmem:[%s312 + $0x80] sm:$0xff]
        %v2655 = vld [vmem:[%s312 + $0x88] sm:$0xff]
        %v2657 = vsel %vm364, %v2652, 0
        %v2660 = vsel %vm364, %v2653, 0
        %2662 = vmatprep.subr.mxu0 0.0
        %2663 = vmatpush1.msra.mxu0 %v2654
        %2664 = vmatprep.subr.mxu0 0.0
        %2665 = vmatpush1.msra.mxu0 %v2655
        %2666 = vmatprep.subr.mxu0 0.0
        %2667 = vmatpush1.msra.mxu0 0.0
        %2668 = vmatprep.subr.mxu0 0.0
        %2669 = vmatpush1.msra.mxu0 0.0
        %2670 = vmatprep.subr.mxu0 0.0
        %2671 = vmatpush1.msra.mxu0 0.0
        %2672 = vmatprep.subr.mxu0 0.0
        %2673 = vmatpush1.msra.mxu0 0.0
        %2674 = vmatprep.subr.mxu0 0.0
        %2675 = vmatpush1.msra.mxu0 0.0
        %2676 = vmatprep.subr.mxu0 0.0
        %2677 = vmatpush1.msra.mxu0 0.0
        %2678 = vmatprep.subr.mxu0 0.0
        %2679 = vmatpush1.msra.mxu0 0.0
        %2680 = vmatprep.subr.mxu0 0.0
        %2681 = vmatpush1.msra.mxu0 0.0
        %2682 = vmatprep.subr.mxu0 0.0
        %2683 = vmatpush1.msra.mxu0 0.0
        %2684 = vmatprep.subr.mxu0 0.0
        %2685 = vmatpush1.msra.mxu0 0.0
        %2686 = vmatprep.subr.mxu0 0.0
        %2687 = vmatpush1.msra.mxu0 0.0
        %2688 = vmatprep.subr.mxu0 0.0
        %2689 = vmatpush1.msra.mxu0 0.0
        %2690 = vmatprep.subr.mxu0 0.0
        %2691 = vmatpush1.msra.mxu0 0.0
        %2692 = vmatprep.subr.mxu0 0.0
        %2693 = vmatpush1.msra.mxu0 0.0
        %2694 = vmatprep.subr.mxu0 0.0
        %2695 = vmatpush1.msra.mxu0 0.0
        %2696 = vmatprep.subr.mxu0 0.0
        %2697 = vmatpush1.msra.mxu0 0.0
        %2698 = vmatprep.subr.mxu0 0.0
        %2699 = vmatpush1.msra.mxu0 0.0
        %2700 = vmatprep.subr.mxu0 0.0
        %2701 = vmatpush1.msra.mxu0 0.0
        %2702 = vmatprep.subr.mxu0 0.0
        %2703 = vmatpush1.msra.mxu0 0.0
        %2704 = vmatprep.subr.mxu0 0.0
        %2705 = vmatpush1.msra.mxu0 0.0
        %2706 = vmatprep.subr.mxu0 0.0
        %2707 = vmatpush1.msra.mxu0 0.0
        %2708 = vmatprep.subr.mxu0 0.0
        %2709 = vmatpush1.msra.mxu0 0.0
        %2710 = vmatprep.subr.mxu0 0.0
        %2711 = vmatpush1.msra.mxu0 0.0
        %2712 = vmatprep.subr.mxu0 0.0
        %2713 = vmatpush1.msra.mxu0 0.0
        %2714 = vmatprep.subr.mxu0 0.0
        %2715 = vmatpush1.msra.mxu0 0.0
        %2716 = vmatprep.subr.mxu0 0.0
        %2717 = vmatpush1.msra.mxu0 0.0
        %2718 = vmatprep.subr.mxu0 0.0
        %2719 = vmatpush1.msra.mxu0 0.0
        %2720 = vmatprep.subr.mxu0 0.0
        %2721 = vmatpush1.msra.mxu0 0.0
        %2722 = vmatprep.subr.mxu0 0.0
        %2723 = vmatpush1.msra.mxu0 0.0
        %2724 = vmatprep.subr.mxu0 0.0
        %2725 = vmatpush1.msra.mxu0 0.0
        %2726 = vmatprep.mubr.f32.mxu0 0.0
        %2727 = vmatmul.mubr.f32.gmra.mrb[0].mxu0 %v2657
        %v2728 = vpop.f32.mrb[0].mxu0
        %v2729 = vadd.f32 0.0, %v2728
        %v2730 = vpop.f32.mrb[0].mxu0
        %2731 = vmatprep.mubr.f32.mxu0 0.0
        %2732 = vmatmul.mubr.f32.gmra.mrb[0].mxu0 %v2660
        %v2733 = vpop.f32.mrb[0].mxu0
        %v2734 = vadd.f32 0.0, %v2733
        %v2735 = vpop.f32.mrb[0].mxu0
        %2736 = vdwg.mxu0
        %v2737 = vsub.f32 %v2729, %v1887
        %v2738 = vsub.f32 %v2734, %v1888
        %v2739 = vmul.f32 %v2737, %v2737
        %v2740 = vmul.f32 %v2738, %v2738
        %s2741 = scalar_lea.vmem %s306, 128 [#allocation4]
        %2742 = vst.msk [vmem:[%s2741] sm:$0xff] %vm364, %v2739
        %2743 = vst.msk [vmem:[%s2741 + $0x8] sm:$0xff] %vm364, %v2740
        %v2744 = vld [vmem:[#allocation2 + $0x8] sm:$0xff]
        %v2745 = vld [vmem:[#allocation2 + $0x18] sm:$0xff]
        %v2746 = vld [vmem:[%s312 + $0x90] sm:$0xff]
        %v2747 = vld [vmem:[%s312 + $0x98] sm:$0xff]
        %2750 = vrot.lane.b32.xlu0 %v2744, 112
        %v2751 = vpop.permute.xlu0 %2750
        %2752 = vrot.lane.b32.xlu0 %v2745, 112
        %v2753 = vpop.permute.xlu0 %2752
        %v2754 = vsel %vm364, %v2751, 0
        %v2756 = vsel %vm364, %v2753, 0
        %2758 = vmatprep.subr.mxu0 0.0
        %2759 = vmatpush1.msra.mxu0 %v2746
        %2760 = vmatprep.subr.mxu0 0.0
        %2761 = vmatpush1.msra.mxu0 %v2747
        %2762 = vmatprep.subr.mxu0 0.0
        %2763 = vmatpush1.msra.mxu0 0.0
        %2764 = vmatprep.subr.mxu0 0.0
        %2765 = vmatpush1.msra.mxu0 0.0
        %2766 = vmatprep.subr.mxu0 0.0
        %2767 = vmatpush1.msra.mxu0 0.0
        %2768 = vmatprep.subr.mxu0 0.0
        %2769 = vmatpush1.msra.mxu0 0.0
        %2770 = vmatprep.subr.mxu0 0.0
        %2771 = vmatpush1.msra.mxu0 0.0
        %2772 = vmatprep.subr.mxu0 0.0
        %2773 = vmatpush1.msra.mxu0 0.0
        %2774 = vmatprep.subr.mxu0 0.0
        %2775 = vmatpush1.msra.mxu0 0.0
        %2776 = vmatprep.subr.mxu0 0.0
        %2777 = vmatpush1.msra.mxu0 0.0
        %2778 = vmatprep.subr.mxu0 0.0
        %2779 = vmatpush1.msra.mxu0 0.0
        %2780 = vmatprep.subr.mxu0 0.0
        %2781 = vmatpush1.msra.mxu0 0.0
        %2782 = vmatprep.subr.mxu0 0.0
        %2783 = vmatpush1.msra.mxu0 0.0
        %2784 = vmatprep.subr.mxu0 0.0
        %2785 = vmatpush1.msra.mxu0 0.0
        %2786 = vmatprep.subr.mxu0 0.0
        %2787 = vmatpush1.msra.mxu0 0.0
        %2788 = vmatprep.subr.mxu0 0.0
        %2789 = vmatpush1.msra.mxu0 0.0
        %2790 = vmatprep.subr.mxu0 0.0
        %2791 = vmatpush1.msra.mxu0 0.0
        %2792 = vmatprep.subr.mxu0 0.0
        %2793 = vmatpush1.msra.mxu0 0.0
        %2794 = vmatprep.subr.mxu0 0.0
        %2795 = vmatpush1.msra.mxu0 0.0
        %2796 = vmatprep.subr.mxu0 0.0
        %2797 = vmatpush1.msra.mxu0 0.0
        %2798 = vmatprep.subr.mxu0 0.0
        %2799 = vmatpush1.msra.mxu0 0.0
        %2800 = vmatprep.subr.mxu0 0.0
        %2801 = vmatpush1.msra.mxu0 0.0
        %2802 = vmatprep.subr.mxu0 0.0
        %2803 = vmatpush1.msra.mxu0 0.0
        %2804 = vmatprep.subr.mxu0 0.0
        %2805 = vmatpush1.msra.mxu0 0.0
        %2806 = vmatprep.subr.mxu0 0.0
        %2807 = vmatpush1.msra.mxu0 0.0
        %2808 = vmatprep.subr.mxu0 0.0
        %2809 = vmatpush1.msra.mxu0 0.0
        %2810 = vmatprep.subr.mxu0 0.0
        %2811 = vmatpush1.msra.mxu0 0.0
        %2812 = vmatprep.subr.mxu0 0.0
        %2813 = vmatpush1.msra.mxu0 0.0
        %2814 = vmatprep.subr.mxu0 0.0
        %2815 = vmatpush1.msra.mxu0 0.0
        %2816 = vmatprep.subr.mxu0 0.0
        %2817 = vmatpush1.msra.mxu0 0.0
        %2818 = vmatprep.subr.mxu0 0.0
        %2819 = vmatpush1.msra.mxu0 0.0
        %2820 = vmatprep.subr.mxu0 0.0
        %2821 = vmatpush1.msra.mxu0 0.0
        %2822 = vmatprep.mubr.f32.mxu0 0.0
        %2823 = vmatmul.mubr.f32.gmra.mrb[0].mxu0 %v2754
        %v2824 = vpop.f32.mrb[0].mxu0
        %v2825 = vadd.f32 0.0, %v2824
        %v2826 = vpop.f32.mrb[0].mxu0
        %2827 = vmatprep.mubr.f32.mxu0 0.0
        %2828 = vmatmul.mubr.f32.gmra.mrb[0].mxu0 %v2756
        %v2829 = vpop.f32.mrb[0].mxu0
        %v2830 = vadd.f32 0.0, %v2829
        %v2831 = vpop.f32.mrb[0].mxu0
        %2832 = vdwg.mxu0
        %v2833 = vsub.f32 %v2825, %v1887
        %v2834 = vsub.f32 %v2830, %v1888
        %v2835 = vmul.f32 %v2833, %v2833
        %v2836 = vmul.f32 %v2834, %v2834
        %s2837 = scalar_lea.vmem %s306, 144 [#allocation4]
        %2838 = vst.msk [vmem:[%s2837] sm:$0xff] %vm364, %v2835
        %2839 = vst.msk [vmem:[%s2837 + $0x8] sm:$0xff] %vm364, %v2836
        %v2840 = vld [vmem:[#allocation2 + $0x8] sm:$0xff]
        %v2841 = vld [vmem:[#allocation2 + $0x18] sm:$0xff]
        %v2842 = vld [vmem:[%s312 + $0xa0] sm:$0xff]
        %v2843 = vld [vmem:[%s312 + $0xa8] sm:$0xff]
        %2846 = vrot.lane.b32.xlu0 %v2840, 96
        %v2847 = vpop.permute.xlu0 %2846
        %2848 = vrot.lane.b32.xlu0 %v2841, 96
        %v2849 = vpop.permute.xlu0 %2848
        %v2850 = vsel %vm364, %v2847, 0
        %v2852 = vsel %vm364, %v2849, 0
        %2854 = vmatprep.subr.mxu0 0.0
        %2855 = vmatpush1.msra.mxu0 %v2842
        %2856 = vmatprep.subr.mxu0 0.0
        %2857 = vmatpush1.msra.mxu0 %v2843
        %2858 = vmatprep.subr.mxu0 0.0
        %2859 = vmatpush1.msra.mxu0 0.0
        %2860 = vmatprep.subr.mxu0 0.0
        %2861 = vmatpush1.msra.mxu0 0.0
        %2862 = vmatprep.subr.mxu0 0.0
        %2863 = vmatpush1.msra.mxu0 0.0
        %2864 = vmatprep.subr.mxu0 0.0
        %2865 = vmatpush1.msra.mxu0 0.0
        %2866 = vmatprep.subr.mxu0 0.0
        %2867 = vmatpush1.msra.mxu0 0.0
        %2868 = vmatprep.subr.mxu0 0.0
        %2869 = vmatpush1.msra.mxu0 0.0
        %2870 = vmatprep.subr.mxu0 0.0
        %2871 = vmatpush1.msra.mxu0 0.0
        %2872 = vmatprep.subr.mxu0 0.0
        %2873 = vmatpush1.msra.mxu0 0.0
        %2874 = vmatprep.subr.mxu0 0.0
        %2875 = vmatpush1.msra.mxu0 0.0
        %2876 = vmatprep.subr.mxu0 0.0
        %2877 = vmatpush1.msra.mxu0 0.0
        %2878 = vmatprep.subr.mxu0 0.0
        %2879 = vmatpush1.msra.mxu0 0.0
        %2880 = vmatprep.subr.mxu0 0.0
        %2881 = vmatpush1.msra.mxu0 0.0
        %2882 = vmatprep.subr.mxu0 0.0
        %2883 = vmatpush1.msra.mxu0 0.0
        %2884 = vmatprep.subr.mxu0 0.0
        %2885 = vmatpush1.msra.mxu0 0.0
        %2886 = vmatprep.subr.mxu0 0.0
        %2887 = vmatpush1.msra.mxu0 0.0
        %2888 = vmatprep.subr.mxu0 0.0
        %2889 = vmatpush1.msra.mxu0 0.0
        %2890 = vmatprep.subr.mxu0 0.0
        %2891 = vmatpush1.msra.mxu0 0.0
        %2892 = vmatprep.subr.mxu0 0.0
        %2893 = vmatpush1.msra.mxu0 0.0
        %2894 = vmatprep.subr.mxu0 0.0
        %2895 = vmatpush1.msra.mxu0 0.0
        %2896 = vmatprep.subr.mxu0 0.0
        %2897 = vmatpush1.msra.mxu0 0.0
        %2898 = vmatprep.subr.mxu0 0.0
        %2899 = vmatpush1.msra.mxu0 0.0
        %2900 = vmatprep.subr.mxu0 0.0
        %2901 = vmatpush1.msra.mxu0 0.0
        %2902 = vmatprep.subr.mxu0 0.0
        %2903 = vmatpush1.msra.mxu0 0.0
        %2904 = vmatprep.subr.mxu0 0.0
        %2905 = vmatpush1.msra.mxu0 0.0
        %2906 = vmatprep.subr.mxu0 0.0
        %2907 = vmatpush1.msra.mxu0 0.0
        %2908 = vmatprep.subr.mxu0 0.0
        %2909 = vmatpush1.msra.mxu0 0.0
        %2910 = vmatprep.subr.mxu0 0.0
        %2911 = vmatpush1.msra.mxu0 0.0
        %2912 = vmatprep.subr.mxu0 0.0
        %2913 = vmatpush1.msra.mxu0 0.0
        %2914 = vmatprep.subr.mxu0 0.0
        %2915 = vmatpush1.msra.mxu0 0.0
        %2916 = vmatprep.subr.mxu0 0.0
        %2917 = vmatpush1.msra.mxu0 0.0
        %2918 = vmatprep.mubr.f32.mxu0 0.0
        %2919 = vmatmul.mubr.f32.gmra.mrb[0].mxu0 %v2850
        %v2920 = vpop.f32.mrb[0].mxu0
        %v2921 = vadd.f32 0.0, %v2920
        %v2922 = vpop.f32.mrb[0].mxu0
        %2923 = vmatprep.mubr.f32.mxu0 0.0
        %2924 = vmatmul.mubr.f32.gmra.mrb[0].mxu0 %v2852
        %v2925 = vpop.f32.mrb[0].mxu0
        %v2926 = vadd.f32 0.0, %v2925
        %v2927 = vpop.f32.mrb[0].mxu0
        %2928 = vdwg.mxu0
        %v2929 = vsub.f32 %v2921, %v1887
        %v2930 = vsub.f32 %v2926, %v1888
        %v2931 = vmul.f32 %v2929, %v2929
        %v2932 = vmul.f32 %v2930, %v2930
        %s2933 = scalar_lea.vmem %s306, 160 [#allocation4]
        %2934 = vst.msk [vmem:[%s2933] sm:$0xff] %vm364, %v2931
        %2935 = vst.msk [vmem:[%s2933 + $0x8] sm:$0xff] %vm364, %v2932
        %v2936 = vld [vmem:[#allocation2 + $0x8] sm:$0xff]
        %v2937 = vld [vmem:[#allocation2 + $0x18] sm:$0xff]
        %v2938 = vld [vmem:[%s312 + $0xb0] sm:$0xff]
        %v2939 = vld [vmem:[%s312 + $0xb8] sm:$0xff]
        %2942 = vrot.lane.b32.xlu0 %v2936, 80
        %v2943 = vpop.permute.xlu0 %2942
        %2944 = vrot.lane.b32.xlu0 %v2937, 80
        %v2945 = vpop.permute.xlu0 %2944
        %v2946 = vsel %vm364, %v2943, 0
        %v2948 = vsel %vm364, %v2945, 0
        %2950 = vmatprep.subr.mxu0 0.0
        %2951 = vmatpush1.msra.mxu0 %v2938
        %2952 = vmatprep.subr.mxu0 0.0
        %2953 = vmatpush1.msra.mxu0 %v2939
        %2954 = vmatprep.subr.mxu0 0.0
        %2955 = vmatpush1.msra.mxu0 0.0
        %2956 = vmatprep.subr.mxu0 0.0
        %2957 = vmatpush1.msra.mxu0 0.0
        %2958 = vmatprep.subr.mxu0 0.0
        %2959 = vmatpush1.msra.mxu0 0.0
        %2960 = vmatprep.subr.mxu0 0.0
        %2961 = vmatpush1.msra.mxu0 0.0
        %2962 = vmatprep.subr.mxu0 0.0
        %2963 = vmatpush1.msra.mxu0 0.0
        %2964 = vmatprep.subr.mxu0 0.0
        %2965 = vmatpush1.msra.mxu0 0.0
        %2966 = vmatprep.subr.mxu0 0.0
        %2967 = vmatpush1.msra.mxu0 0.0
        %2968 = vmatprep.subr.mxu0 0.0
        %2969 = vmatpush1.msra.mxu0 0.0
        %2970 = vmatprep.subr.mxu0 0.0
        %2971 = vmatpush1.msra.mxu0 0.0
        %2972 = vmatprep.subr.mxu0 0.0
        %2973 = vmatpush1.msra.mxu0 0.0
        %2974 = vmatprep.subr.mxu0 0.0
        %2975 = vmatpush1.msra.mxu0 0.0
        %2976 = vmatprep.subr.mxu0 0.0
        %2977 = vmatpush1.msra.mxu0 0.0
        %2978 = vmatprep.subr.mxu0 0.0
        %2979 = vmatpush1.msra.mxu0 0.0
        %2980 = vmatprep.subr.mxu0 0.0
        %2981 = vmatpush1.msra.mxu0 0.0
        %2982 = vmatprep.subr.mxu0 0.0
        %2983 = vmatpush1.msra.mxu0 0.0
        %2984 = vmatprep.subr.mxu0 0.0
        %2985 = vmatpush1.msra.mxu0 0.0
        %2986 = vmatprep.subr.mxu0 0.0
        %2987 = vmatpush1.msra.mxu0 0.0
        %2988 = vmatprep.subr.mxu0 0.0
        %2989 = vmatpush1.msra.mxu0 0.0
        %2990 = vmatprep.subr.mxu0 0.0
        %2991 = vmatpush1.msra.mxu0 0.0
        %2992 = vmatprep.subr.mxu0 0.0
        %2993 = vmatpush1.msra.mxu0 0.0
        %2994 = vmatprep.subr.mxu0 0.0
        %2995 = vmatpush1.msra.mxu0 0.0
        %2996 = vmatprep.subr.mxu0 0.0
        %2997 = vmatpush1.msra.mxu0 0.0
        %2998 = vmatprep.subr.mxu0 0.0
        %2999 = vmatpush1.msra.mxu0 0.0
        %3000 = vmatprep.subr.mxu0 0.0
        %3001 = vmatpush1.msra.mxu0 0.0
        %3002 = vmatprep.subr.mxu0 0.0
        %3003 = vmatpush1.msra.mxu0 0.0
        %3004 = vmatprep.subr.mxu0 0.0
        %3005 = vmatpush1.msra.mxu0 0.0
        %3006 = vmatprep.subr.mxu0 0.0
        %3007 = vmatpush1.msra.mxu0 0.0
        %3008 = vmatprep.subr.mxu0 0.0
        %3009 = vmatpush1.msra.mxu0 0.0
        %3010 = vmatprep.subr.mxu0 0.0
        %3011 = vmatpush1.msra.mxu0 0.0
        %3012 = vmatprep.subr.mxu0 0.0
        %3013 = vmatpush1.msra.mxu0 0.0
        %3014 = vmatprep.mubr.f32.mxu0 0.0
        %3015 = vmatmul.mubr.f32.gmra.mrb[0].mxu0 %v2946
        %v3016 = vpop.f32.mrb[0].mxu0
        %v3017 = vadd.f32 0.0, %v3016
        %v3018 = vpop.f32.mrb[0].mxu0
        %3019 = vmatprep.mubr.f32.mxu0 0.0
        %3020 = vmatmul.mubr.f32.gmra.mrb[0].mxu0 %v2948
        %v3021 = vpop.f32.mrb[0].mxu0
        %v3022 = vadd.f32 0.0, %v3021
        %v3023 = vpop.f32.mrb[0].mxu0
        %3024 = vdwg.mxu0
        %v3025 = vsub.f32 %v3017, %v1887
        %v3026 = vsub.f32 %v3022, %v1888
        %v3027 = vmul.f32 %v3025, %v3025
        %v3028 = vmul.f32 %v3026, %v3026
        %s3029 = scalar_lea.vmem %s306, 176 [#allocation4]
        %3030 = vst.msk [vmem:[%s3029] sm:$0xff] %vm364, %v3027
        %3031 = vst.msk [vmem:[%s3029 + $0x8] sm:$0xff] %vm364, %v3028
        %v3032 = vld [vmem:[#allocation2 + $0x8] sm:$0xff]
        %v3033 = vld [vmem:[#allocation2 + $0x18] sm:$0xff]
        %v3034 = vld [vmem:[%s312 + $0xc0] sm:$0xff]
        %v3035 = vld [vmem:[%s312 + $0xc8] sm:$0xff]
        %3038 = vrot.lane.b32.xlu0 %v3032, 64
        %v3039 = vpop.permute.xlu0 %3038
        %3040 = vrot.lane.b32.xlu0 %v3033, 64
        %v3041 = vpop.permute.xlu0 %3040
        %v3042 = vsel %vm364, %v3039, 0
        %v3044 = vsel %vm364, %v3041, 0
        %3046 = vmatprep.subr.mxu0 0.0
        %3047 = vmatpush1.msra.mxu0 %v3034
        %3048 = vmatprep.subr.mxu0 0.0
        %3049 = vmatpush1.msra.mxu0 %v3035
        %3050 = vmatprep.subr.mxu0 0.0
        %3051 = vmatpush1.msra.mxu0 0.0
        %3052 = vmatprep.subr.mxu0 0.0
        %3053 = vmatpush1.msra.mxu0 0.0
        %3054 = vmatprep.subr.mxu0 0.0
        %3055 = vmatpush1.msra.mxu0 0.0
        %3056 = vmatprep.subr.mxu0 0.0
        %3057 = vmatpush1.msra.mxu0 0.0
        %3058 = vmatprep.subr.mxu0 0.0
        %3059 = vmatpush1.msra.mxu0 0.0
        %3060 = vmatprep.subr.mxu0 0.0
        %3061 = vmatpush1.msra.mxu0 0.0
        %3062 = vmatprep.subr.mxu0 0.0
        %3063 = vmatpush1.msra.mxu0 0.0
        %3064 = vmatprep.subr.mxu0 0.0
        %3065 = vmatpush1.msra.mxu0 0.0
        %3066 = vmatprep.subr.mxu0 0.0
        %3067 = vmatpush1.msra.mxu0 0.0
        %3068 = vmatprep.subr.mxu0 0.0
        %3069 = vmatpush1.msra.mxu0 0.0
        %3070 = vmatprep.subr.mxu0 0.0
        %3071 = vmatpush1.msra.mxu0 0.0
        %3072 = vmatprep.subr.mxu0 0.0
        %3073 = vmatpush1.msra.mxu0 0.0
        %3074 = vmatprep.subr.mxu0 0.0
        %3075 = vmatpush1.msra.mxu0 0.0
        %3076 = vmatprep.subr.mxu0 0.0
        %3077 = vmatpush1.msra.mxu0 0.0
        %3078 = vmatprep.subr.mxu0 0.0
        %3079 = vmatpush1.msra.mxu0 0.0
        %3080 = vmatprep.subr.mxu0 0.0
        %3081 = vmatpush1.msra.mxu0 0.0
        %3082 = vmatprep.subr.mxu0 0.0
        %3083 = vmatpush1.msra.mxu0 0.0
        %3084 = vmatprep.subr.mxu0 0.0
        %3085 = vmatpush1.msra.mxu0 0.0
        %3086 = vmatprep.subr.mxu0 0.0
        %3087 = vmatpush1.msra.mxu0 0.0
        %3088 = vmatprep.subr.mxu0 0.0
        %3089 = vmatpush1.msra.mxu0 0.0
        %3090 = vmatprep.subr.mxu0 0.0
        %3091 = vmatpush1.msra.mxu0 0.0
        %3092 = vmatprep.subr.mxu0 0.0
        %3093 = vmatpush1.msra.mxu0 0.0
        %3094 = vmatprep.subr.mxu0 0.0
        %3095 = vmatpush1.msra.mxu0 0.0
        %3096 = vmatprep.subr.mxu0 0.0
        %3097 = vmatpush1.msra.mxu0 0.0
        %3098 = vmatprep.subr.mxu0 0.0
        %3099 = vmatpush1.msra.mxu0 0.0
        %3100 = vmatprep.subr.mxu0 0.0
        %3101 = vmatpush1.msra.mxu0 0.0
        %3102 = vmatprep.subr.mxu0 0.0
        %3103 = vmatpush1.msra.mxu0 0.0
        %3104 = vmatprep.subr.mxu0 0.0
        %3105 = vmatpush1.msra.mxu0 0.0
        %3106 = vmatprep.subr.mxu0 0.0
        %3107 = vmatpush1.msra.mxu0 0.0
        %3108 = vmatprep.subr.mxu0 0.0
        %3109 = vmatpush1.msra.mxu0 0.0
        %3110 = vmatprep.mubr.f32.mxu0 0.0
        %3111 = vmatmul.mubr.f32.gmra.mrb[0].mxu0 %v3042
        %v3112 = vpop.f32.mrb[0].mxu0
        %v3113 = vadd.f32 0.0, %v3112
        %v3114 = vpop.f32.mrb[0].mxu0
        %3115 = vmatprep.mubr.f32.mxu0 0.0
        %3116 = vmatmul.mubr.f32.gmra.mrb[0].mxu0 %v3044
        %v3117 = vpop.f32.mrb[0].mxu0
        %v3118 = vadd.f32 0.0, %v3117
        %v3119 = vpop.f32.mrb[0].mxu0
        %3120 = vdwg.mxu0
        %v3121 = vsub.f32 %v3113, %v1887
        %v3122 = vsub.f32 %v3118, %v1888
        %v3123 = vmul.f32 %v3121, %v3121
        %v3124 = vmul.f32 %v3122, %v3122
        %s3125 = scalar_lea.vmem %s306, 192 [#allocation4]
        %3126 = vst.msk [vmem:[%s3125] sm:$0xff] %vm364, %v3123
        %3127 = vst.msk [vmem:[%s3125 + $0x8] sm:$0xff] %vm364, %v3124
        %v3128 = vld [vmem:[#allocation2 + $0x8] sm:$0xff]
        %v3129 = vld [vmem:[#allocation2 + $0x18] sm:$0xff]
        %v3130 = vld [vmem:[%s312 + $0xd0] sm:$0xff]
        %v3131 = vld [vmem:[%s312 + $0xd8] sm:$0xff]
        %3134 = vrot.lane.b32.xlu0 %v3128, 48
        %v3135 = vpop.permute.xlu0 %3134
        %3136 = vrot.lane.b32.xlu0 %v3129, 48
        %v3137 = vpop.permute.xlu0 %3136
        %v3138 = vsel %vm364, %v3135, 0
        %v3140 = vsel %vm364, %v3137, 0
        %3142 = vmatprep.subr.mxu0 0.0
        %3143 = vmatpush1.msra.mxu0 %v3130
        %3144 = vmatprep.subr.mxu0 0.0
        %3145 = vmatpush1.msra.mxu0 %v3131
        %3146 = vmatprep.subr.mxu0 0.0
        %3147 = vmatpush1.msra.mxu0 0.0
        %3148 = vmatprep.subr.mxu0 0.0
        %3149 = vmatpush1.msra.mxu0 0.0
        %3150 = vmatprep.subr.mxu0 0.0
        %3151 = vmatpush1.msra.mxu0 0.0
        %3152 = vmatprep.subr.mxu0 0.0
        %3153 = vmatpush1.msra.mxu0 0.0
        %3154 = vmatprep.subr.mxu0 0.0
        %3155 = vmatpush1.msra.mxu0 0.0
        %3156 = vmatprep.subr.mxu0 0.0
        %3157 = vmatpush1.msra.mxu0 0.0
        %3158 = vmatprep.subr.mxu0 0.0
        %3159 = vmatpush1.msra.mxu0 0.0
        %3160 = vmatprep.subr.mxu0 0.0
        %3161 = vmatpush1.msra.mxu0 0.0
        %3162 = vmatprep.subr.mxu0 0.0
        %3163 = vmatpush1.msra.mxu0 0.0
        %3164 = vmatprep.subr.mxu0 0.0
        %3165 = vmatpush1.msra.mxu0 0.0
        %3166 = vmatprep.subr.mxu0 0.0
        %3167 = vmatpush1.msra.mxu0 0.0
        %3168 = vmatprep.subr.mxu0 0.0
        %3169 = vmatpush1.msra.mxu0 0.0
        %3170 = vmatprep.subr.mxu0 0.0
        %3171 = vmatpush1.msra.mxu0 0.0
        %3172 = vmatprep.subr.mxu0 0.0
        %3173 = vmatpush1.msra.mxu0 0.0
        %3174 = vmatprep.subr.mxu0 0.0
        %3175 = vmatpush1.msra.mxu0 0.0
        %3176 = vmatprep.subr.mxu0 0.0
        %3177 = vmatpush1.msra.mxu0 0.0
        %3178 = vmatprep.subr.mxu0 0.0
        %3179 = vmatpush1.msra.mxu0 0.0
        %3180 = vmatprep.subr.mxu0 0.0
        %3181 = vmatpush1.msra.mxu0 0.0
        %3182 = vmatprep.subr.mxu0 0.0
        %3183 = vmatpush1.msra.mxu0 0.0
        %3184 = vmatprep.subr.mxu0 0.0
        %3185 = vmatpush1.msra.mxu0 0.0
        %3186 = vmatprep.subr.mxu0 0.0
        %3187 = vmatpush1.msra.mxu0 0.0
        %3188 = vmatprep.subr.mxu0 0.0
        %3189 = vmatpush1.msra.mxu0 0.0
        %3190 = vmatprep.subr.mxu0 0.0
        %3191 = vmatpush1.msra.mxu0 0.0
        %3192 = vmatprep.subr.mxu0 0.0
        %3193 = vmatpush1.msra.mxu0 0.0
        %3194 = vmatprep.subr.mxu0 0.0
        %3195 = vmatpush1.msra.mxu0 0.0
        %3196 = vmatprep.subr.mxu0 0.0
        %3197 = vmatpush1.msra.mxu0 0.0
        %3198 = vmatprep.subr.mxu0 0.0
        %3199 = vmatpush1.msra.mxu0 0.0
        %3200 = vmatprep.subr.mxu0 0.0
        %3201 = vmatpush1.msra.mxu0 0.0
        %3202 = vmatprep.subr.mxu0 0.0
        %3203 = vmatpush1.msra.mxu0 0.0
        %3204 = vmatprep.subr.mxu0 0.0
        %3205 = vmatpush1.msra.mxu0 0.0
        %3206 = vmatprep.mubr.f32.mxu0 0.0
        %3207 = vmatmul.mubr.f32.gmra.mrb[0].mxu0 %v3138
        %v3208 = vpop.f32.mrb[0].mxu0
        %v3209 = vadd.f32 0.0, %v3208
        %v3210 = vpop.f32.mrb[0].mxu0
        %3211 = vmatprep.mubr.f32.mxu0 0.0
        %3212 = vmatmul.mubr.f32.gmra.mrb[0].mxu0 %v3140
        %v3213 = vpop.f32.mrb[0].mxu0
        %v3214 = vadd.f32 0.0, %v3213
        %v3215 = vpop.f32.mrb[0].mxu0
        %3216 = vdwg.mxu0
        %v3217 = vsub.f32 %v3209, %v1887
        %v3218 = vsub.f32 %v3214, %v1888
        %v3219 = vmul.f32 %v3217, %v3217
        %v3220 = vmul.f32 %v3218, %v3218
        %s3221 = scalar_lea.vmem %s306, 208 [#allocation4]
        %3222 = vst.msk [vmem:[%s3221] sm:$0xff] %vm364, %v3219
        %3223 = vst.msk [vmem:[%s3221 + $0x8] sm:$0xff] %vm364, %v3220
        %v3224 = vld [vmem:[#allocation2 + $0x8] sm:$0xff]
        %v3225 = vld [vmem:[#allocation2 + $0x18] sm:$0xff]
        %v3226 = vld [vmem:[%s312 + $0xe0] sm:$0xff]
        %v3227 = vld [vmem:[%s312 + $0xe8] sm:$0xff]
        %3230 = vrot.lane.b32.xlu0 %v3224, 32
        %v3231 = vpop.permute.xlu0 %3230
        %3232 = vrot.lane.b32.xlu0 %v3225, 32
        %v3233 = vpop.permute.xlu0 %3232
        %v3234 = vsel %vm364, %v3231, 0
        %v3236 = vsel %vm364, %v3233, 0
        %3238 = vmatprep.subr.mxu0 0.0
        %3239 = vmatpush1.msra.mxu0 %v3226
        %3240 = vmatprep.subr.mxu0 0.0
        %3241 = vmatpush1.msra.mxu0 %v3227
        %3242 = vmatprep.subr.mxu0 0.0
        %3243 = vmatpush1.msra.mxu0 0.0
        %3244 = vmatprep.subr.mxu0 0.0
        %3245 = vmatpush1.msra.mxu0 0.0
        %3246 = vmatprep.subr.mxu0 0.0
        %3247 = vmatpush1.msra.mxu0 0.0
        %3248 = vmatprep.subr.mxu0 0.0
        %3249 = vmatpush1.msra.mxu0 0.0
        %3250 = vmatprep.subr.mxu0 0.0
        %3251 = vmatpush1.msra.mxu0 0.0
        %3252 = vmatprep.subr.mxu0 0.0
        %3253 = vmatpush1.msra.mxu0 0.0
        %3254 = vmatprep.subr.mxu0 0.0
        %3255 = vmatpush1.msra.mxu0 0.0
        %3256 = vmatprep.subr.mxu0 0.0
        %3257 = vmatpush1.msra.mxu0 0.0
        %3258 = vmatprep.subr.mxu0 0.0
        %3259 = vmatpush1.msra.mxu0 0.0
        %3260 = vmatprep.subr.mxu0 0.0
        %3261 = vmatpush1.msra.mxu0 0.0
        %3262 = vmatprep.subr.mxu0 0.0
        %3263 = vmatpush1.msra.mxu0 0.0
        %3264 = vmatprep.subr.mxu0 0.0
        %3265 = vmatpush1.msra.mxu0 0.0
        %3266 = vmatprep.subr.mxu0 0.0
        %3267 = vmatpush1.msra.mxu0 0.0
        %3268 = vmatprep.subr.mxu0 0.0
        %3269 = vmatpush1.msra.mxu0 0.0
        %3270 = vmatprep.subr.mxu0 0.0
        %3271 = vmatpush1.msra.mxu0 0.0
        %3272 = vmatprep.subr.mxu0 0.0
        %3273 = vmatpush1.msra.mxu0 0.0
        %3274 = vmatprep.subr.mxu0 0.0
        %3275 = vmatpush1.msra.mxu0 0.0
        %3276 = vmatprep.subr.mxu0 0.0
        %3277 = vmatpush1.msra.mxu0 0.0
        %3278 = vmatprep.subr.mxu0 0.0
        %3279 = vmatpush1.msra.mxu0 0.0
        %3280 = vmatprep.subr.mxu0 0.0
        %3281 = vmatpush1.msra.mxu0 0.0
        %3282 = vmatprep.subr.mxu0 0.0
        %3283 = vmatpush1.msra.mxu0 0.0
        %3284 = vmatprep.subr.mxu0 0.0
        %3285 = vmatpush1.msra.mxu0 0.0
        %3286 = vmatprep.subr.mxu0 0.0
        %3287 = vmatpush1.msra.mxu0 0.0
        %3288 = vmatprep.subr.mxu0 0.0
        %3289 = vmatpush1.msra.mxu0 0.0
        %3290 = vmatprep.subr.mxu0 0.0
        %3291 = vmatpush1.msra.mxu0 0.0
        %3292 = vmatprep.subr.mxu0 0.0
        %3293 = vmatpush1.msra.mxu0 0.0
        %3294 = vmatprep.subr.mxu0 0.0
        %3295 = vmatpush1.msra.mxu0 0.0
        %3296 = vmatprep.subr.mxu0 0.0
        %3297 = vmatpush1.msra.mxu0 0.0
        %3298 = vmatprep.subr.mxu0 0.0
        %3299 = vmatpush1.msra.mxu0 0.0
        %3300 = vmatprep.subr.mxu0 0.0
        %3301 = vmatpush1.msra.mxu0 0.0
        %3302 = vmatprep.mubr.f32.mxu0 0.0
        %3303 = vmatmul.mubr.f32.gmra.mrb[0].mxu0 %v3234
        %v3304 = vpop.f32.mrb[0].mxu0
        %v3305 = vadd.f32 0.0, %v3304
        %v3306 = vpop.f32.mrb[0].mxu0
        %3307 = vmatprep.mubr.f32.mxu0 0.0
        %3308 = vmatmul.mubr.f32.gmra.mrb[0].mxu0 %v3236
        %v3309 = vpop.f32.mrb[0].mxu0
        %v3310 = vadd.f32 0.0, %v3309
        %v3311 = vpop.f32.mrb[0].mxu0
        %3312 = vdwg.mxu0
        %v3313 = vsub.f32 %v3305, %v1887
        %v3314 = vsub.f32 %v3310, %v1888
        %v3315 = vmul.f32 %v3313, %v3313
        %v3316 = vmul.f32 %v3314, %v3314
        %s3317 = scalar_lea.vmem %s306, 224 [#allocation4]
        %3318 = vst.msk [vmem:[%s3317] sm:$0xff] %vm364, %v3315
        %3319 = vst.msk [vmem:[%s3317 + $0x8] sm:$0xff] %vm364, %v3316
        %v3320 = vld [vmem:[#allocation2 + $0x8] sm:$0xff]
        %v3321 = vld [vmem:[#allocation2 + $0x18] sm:$0xff]
        %v3322 = vld [vmem:[%s312 + $0xf0] sm:$0xff]
        %v3323 = vld [vmem:[%s312 + $0xf8] sm:$0xff]
        %3326 = vrot.lane.b32.xlu0 %v3320, 16
        %v3327 = vpop.permute.xlu0 %3326
        %3328 = vrot.lane.b32.xlu0 %v3321, 16
        %v3329 = vpop.permute.xlu0 %3328
        %v3330 = vsel %vm364, %v3327, 0
        %v3332 = vsel %vm364, %v3329, 0
        %3334 = vmatprep.subr.mxu0 0.0
        %3335 = vmatpush1.msra.mxu0 %v3322
        %3336 = vmatprep.subr.mxu0 0.0
        %3337 = vmatpush1.msra.mxu0 %v3323
        %3338 = vmatprep.subr.mxu0 0.0
        %3339 = vmatpush1.msra.mxu0 0.0
        %3340 = vmatprep.subr.mxu0 0.0
        %3341 = vmatpush1.msra.mxu0 0.0
        %3342 = vmatprep.subr.mxu0 0.0
        %3343 = vmatpush1.msra.mxu0 0.0
        %3344 = vmatprep.subr.mxu0 0.0
        %3345 = vmatpush1.msra.mxu0 0.0
        %3346 = vmatprep.subr.mxu0 0.0
        %3347 = vmatpush1.msra.mxu0 0.0
        %3348 = vmatprep.subr.mxu0 0.0
        %3349 = vmatpush1.msra.mxu0 0.0
        %3350 = vmatprep.subr.mxu0 0.0
        %3351 = vmatpush1.msra.mxu0 0.0
        %3352 = vmatprep.subr.mxu0 0.0
        %3353 = vmatpush1.msra.mxu0 0.0
        %3354 = vmatprep.subr.mxu0 0.0
        %3355 = vmatpush1.msra.mxu0 0.0
        %3356 = vmatprep.subr.mxu0 0.0
        %3357 = vmatpush1.msra.mxu0 0.0
        %3358 = vmatprep.subr.mxu0 0.0
        %3359 = vmatpush1.msra.mxu0 0.0
        %3360 = vmatprep.subr.mxu0 0.0
        %3361 = vmatpush1.msra.mxu0 0.0
        %3362 = vmatprep.subr.mxu0 0.0
        %3363 = vmatpush1.msra.mxu0 0.0
        %3364 = vmatprep.subr.mxu0 0.0
        %3365 = vmatpush1.msra.mxu0 0.0
        %3366 = vmatprep.subr.mxu0 0.0
        %3367 = vmatpush1.msra.mxu0 0.0
        %3368 = vmatprep.subr.mxu0 0.0
        %3369 = vmatpush1.msra.mxu0 0.0
        %3370 = vmatprep.subr.mxu0 0.0
        %3371 = vmatpush1.msra.mxu0 0.0
        %3372 = vmatprep.subr.mxu0 0.0
        %3373 = vmatpush1.msra.mxu0 0.0
        %3374 = vmatprep.subr.mxu0 0.0
        %3375 = vmatpush1.msra.mxu0 0.0
        %3376 = vmatprep.subr.mxu0 0.0
        %3377 = vmatpush1.msra.mxu0 0.0
        %3378 = vmatprep.subr.mxu0 0.0
        %3379 = vmatpush1.msra.mxu0 0.0
        %3380 = vmatprep.subr.mxu0 0.0
        %3381 = vmatpush1.msra.mxu0 0.0
        %3382 = vmatprep.subr.mxu0 0.0
        %3383 = vmatpush1.msra.mxu0 0.0
        %3384 = vmatprep.subr.mxu0 0.0
        %3385 = vmatpush1.msra.mxu0 0.0
        %3386 = vmatprep.subr.mxu0 0.0
        %3387 = vmatpush1.msra.mxu0 0.0
        %3388 = vmatprep.subr.mxu0 0.0
        %3389 = vmatpush1.msra.mxu0 0.0
        %3390 = vmatprep.subr.mxu0 0.0
        %3391 = vmatpush1.msra.mxu0 0.0
        %3392 = vmatprep.subr.mxu0 0.0
        %3393 = vmatpush1.msra.mxu0 0.0
        %3394 = vmatprep.subr.mxu0 0.0
        %3395 = vmatpush1.msra.mxu0 0.0
        %3396 = vmatprep.subr.mxu0 0.0
        %3397 = vmatpush1.msra.mxu0 0.0
        %3398 = vmatprep.mubr.f32.mxu0 0.0
        %3399 = vmatmul.mubr.f32.gmra.mrb[0].mxu0 %v3330
        %v3400 = vpop.f32.mrb[0].mxu0
        %v3401 = vadd.f32 0.0, %v3400
        %v3402 = vpop.f32.mrb[0].mxu0
        %3403 = vmatprep.mubr.f32.mxu0 0.0
        %3404 = vmatmul.mubr.f32.gmra.mrb[0].mxu0 %v3332
        %v3405 = vpop.f32.mrb[0].mxu0
        %v3406 = vadd.f32 0.0, %v3405
        %v3407 = vpop.f32.mrb[0].mxu0
        %3408 = vdwg.mxu0
        %v3409 = vsub.f32 %v3401, %v1887
        %v3410 = vsub.f32 %v3406, %v1888
        %v3411 = vmul.f32 %v3409, %v3409
        %v3412 = vmul.f32 %v3410, %v3410
        %s3413 = scalar_lea.vmem %s306, 240 [#allocation4]
        %3414 = vst.msk [vmem:[%s3413] sm:$0xff] %vm364, %v3411
        %3415 = vst.msk [vmem:[%s3413 + $0x8] sm:$0xff] %vm364, %v3412
        %s3416 = sand.u32 %s163, 1
        %s3417 = sand.u32 %s163, 1
        %s3418 = smul.addr %s3417, 256
        %s3419 = scalar_lea.vmem [#allocation4], %s3418
        // Predicated region
        $region64: #{random_walk_embed_p2g.1} parent=58 // pred_check
          %p3420 = pneg %p173
        $region65: #{random_walk_embed_p2g.1} parent=58 // pred_check_branch
          %3422 = sbr.rel (%p3420) target = $region67
        $region66: #{random_walk_embed_p2g.1} parent=58 // pred_region
          %s3423 = smul.u32 16, %s20
          %s3424 = smul.u32 2, %s21
          %s3425 = smul.addr %s3423, 4
          %s3426 = sadd.s32 %s3424, %s3425
          %s3427 = smul.addr %s3426, 8
          %s3428 = scalar_lea.vmem %s5, %s3427
          // Predicated region
          $region68: #{random_walk_embed_p2g.1} parent=66 // pred_check
            _
          $region69: #{random_walk_embed_p2g.1} parent=66 // pred_check_branch
            %3430 = sbr.rel (0) target = $region71
          $region70: #{random_walk_embed_p2g.1} parent=66 // pred_region
            // Predicated region
            $region72: #{random_walk_embed_p2g.1} parent=70 // pred_check
              _
            $region73: #{random_walk_embed_p2g.1} parent=70 // pred_check_branch
              %3432 = sbr.rel (0) target = $region75
            $region74: #{random_walk_embed_p2g.1} parent=70 // pred_region
              // Predicated region
              $region87: #{random_walk_embed_p2g.1} parent=74 // pred_check
                _
              $region88: #{random_walk_embed_p2g.1} parent=74 // pred_check_branch
                %3509 = sbr.rel (0) target = $region90
              $region89: #{random_walk_embed_p2g.1} parent=74 // pred_region
                loop: start=0, step=1, limit=1
                $region91: #{random_walk_embed_p2g.1} parent=89 // loop_pre_header
                  _
                $region92: #{random_walk_embed_p2g.1} parent=89 // loop_header
                  %s3511 = sphi 0, %s3515
                  %p3512 = scmp.ge.s32.totalorder %s3511, 1
                  %s3516 = sphi %s3419, %s3419
                  %s3517 = sphi %s3428, %s3428
                $region93: #{random_walk_embed_p2g.1} parent=89 // loop_header_branch
                  %3514 = sbr.rel (%p3512) target = $region97
                $region94: #{random_walk_embed_p2g.1} parent=89 // loop_body
                  %v3518 = vld [vmem:[%s3516] sm:$0xff]
                  %3519 = vst [vmem:[%s3517] sm:$0xff] %v3518
                  %v3520 = vld [vmem:[%s3516 + $0x8] sm:$0xff]
                  %3521 = vst [vmem:[%s3517 + $0x8] sm:$0xff] %v3520
                  %v3522 = vld [vmem:[%s3516 + $0x10] sm:$0xff]
                  %3523 = vst [vmem:[%s3517 + $0x20] sm:$0xff] %v3522
                  %v3524 = vld [vmem:[%s3516 + $0x18] sm:$0xff]
                  %3525 = vst [vmem:[%s3517 + $0x28] sm:$0xff] %v3524
                  %v3526 = vld [vmem:[%s3516 + $0x20] sm:$0xff]
                  %3527 = vst [vmem:[%s3517 + $0x40] sm:$0xff] %v3526
                  %v3528 = vld [vmem:[%s3516 + $0x28] sm:$0xff]
                  %3529 = vst [vmem:[%s3517 + $0x48] sm:$0xff] %v3528
                  %v3530 = vld [vmem:[%s3516 + $0x30] sm:$0xff]
                  %3531 = vst [vmem:[%s3517 + $0x60] sm:$0xff] %v3530
                  %v3532 = vld [vmem:[%s3516 + $0x38] sm:$0xff]
                  %3533 = vst [vmem:[%s3517 + $0x68] sm:$0xff] %v3532
                  %v3534 = vld [vmem:[%s3516 + $0x40] sm:$0xff]
                  %3535 = vst [vmem:[%s3517 + $0x80] sm:$0xff] %v3534
                  %v3536 = vld [vmem:[%s3516 + $0x48] sm:$0xff]
                  %3537 = vst [vmem:[%s3517 + $0x88] sm:$0xff] %v3536
                  %v3538 = vld [vmem:[%s3516 + $0x50] sm:$0xff]
                  %3539 = vst [vmem:[%s3517 + $0xa0] sm:$0xff] %v3538
                  %v3540 = vld [vmem:[%s3516 + $0x58] sm:$0xff]
                  %3541 = vst [vmem:[%s3517 + $0xa8] sm:$0xff] %v3540
                  %v3542 = vld [vmem:[%s3516 + $0x60] sm:$0xff]
                  %3543 = vst [vmem:[%s3517 + $0xc0] sm:$0xff] %v3542
                  %v3544 = vld [vmem:[%s3516 + $0x68] sm:$0xff]
                  %3545 = vst [vmem:[%s3517 + $0xc8] sm:$0xff] %v3544
                  %v3546 = vld [vmem:[%s3516 + $0x70] sm:$0xff]
                  %3547 = vst [vmem:[%s3517 + $0xe0] sm:$0xff] %v3546
                  %v3548 = vld [vmem:[%s3516 + $0x78] sm:$0xff]
                  %3549 = vst [vmem:[%s3517 + $0xe8] sm:$0xff] %v3548
                  %v3550 = vld [vmem:[%s3516 + $0x80] sm:$0xff]
                  %3551 = vst [vmem:[%s3517 + $0x100] sm:$0xff] %v3550
                  %v3552 = vld [vmem:[%s3516 + $0x88] sm:$0xff]
                  %3553 = vst [vmem:[%s3517 + $0x108] sm:$0xff] %v3552
                  %v3554 = vld [vmem:[%s3516 + $0x90] sm:$0xff]
                  %3555 = vst [vmem:[%s3517 + $0x120] sm:$0xff] %v3554
                  %v3556 = vld [vmem:[%s3516 + $0x98] sm:$0xff]
                  %3557 = vst [vmem:[%s3517 + $0x128] sm:$0xff] %v3556
                  %v3558 = vld [vmem:[%s3516 + $0xa0] sm:$0xff]
                  %3559 = vst [vmem:[%s3517 + $0x140] sm:$0xff] %v3558
                  %v3560 = vld [vmem:[%s3516 + $0xa8] sm:$0xff]
                  %3561 = vst [vmem:[%s3517 + $0x148] sm:$0xff] %v3560
                  %v3562 = vld [vmem:[%s3516 + $0xb0] sm:$0xff]
                  %3563 = vst [vmem:[%s3517 + $0x160] sm:$0xff] %v3562
                  %v3564 = vld [vmem:[%s3516 + $0xb8] sm:$0xff]
                  %3565 = vst [vmem:[%s3517 + $0x168] sm:$0xff] %v3564
                  %v3566 = vld [vmem:[%s3516 + $0xc0] sm:$0xff]
                  %3567 = vst [vmem:[%s3517 + $0x180] sm:$0xff] %v3566
                  %v3568 = vld [vmem:[%s3516 + $0xc8] sm:$0xff]
                  %3569 = vst [vmem:[%s3517 + $0x188] sm:$0xff] %v3568
                  %v3570 = vld [vmem:[%s3516 + $0xd0] sm:$0xff]
                  %3571 = vst [vmem:[%s3517 + $0x1a0] sm:$0xff] %v3570
                  %v3572 = vld [vmem:[%s3516 + $0xd8] sm:$0xff]
                  %3573 = vst [vmem:[%s3517 + $0x1a8] sm:$0xff] %v3572
                  %v3574 = vld [vmem:[%s3516 + $0xe0] sm:$0xff]
                  %3575 = vst [vmem:[%s3517 + $0x1c0] sm:$0xff] %v3574
                  %v3576 = vld [vmem:[%s3516 + $0xe8] sm:$0xff]
                  %3577 = vst [vmem:[%s3517 + $0x1c8] sm:$0xff] %v3576
                  %v3578 = vld [vmem:[%s3516 + $0xf0] sm:$0xff]
                  %3579 = vst [vmem:[%s3517 + $0x1e0] sm:$0xff] %v3578
                  %v3580 = vld [vmem:[%s3516 + $0xf8] sm:$0xff]
                  %3581 = vst [vmem:[%s3517 + $0x1e8] sm:$0xff] %v3580
                $region95: #{random_walk_embed_p2g.1} parent=89 // loop_footer
                  %s3515 = sadd.s32 1, %s3511
                $region96: #{random_walk_embed_p2g.1} parent=89 // loop_footer_branch
                  %3510 = sbr.rel target = $region92
                $region97: #{random_walk_embed_p2g.1} parent=89 // loop_exit
                  _
              $region90: #{random_walk_embed_p2g.1} parent=74 // pred_fallthru
                _
              // Predicated region
              $region98: #{random_walk_embed_p2g.1} parent=74 // pred_check
                _
              $region99: #{random_walk_embed_p2g.1} parent=74 // pred_check_branch
                %3583 = sbr.rel target = $region101
              $region100: #{random_walk_embed_p2g.1} parent=74 // pred_region
                _
              $region101: #{random_walk_embed_p2g.1} parent=74 // pred_fallthru
                _
            $region75: #{random_walk_embed_p2g.1} parent=70 // pred_fallthru
              _
            // Predicated region
            $region76: #{random_walk_embed_p2g.1} parent=70 // pred_check
              _
            $region77: #{random_walk_embed_p2g.1} parent=70 // pred_check_branch
              %3434 = sbr.rel target = $region79
            $region78: #{random_walk_embed_p2g.1} parent=70 // pred_region
              loop: start=0, step=1, limit=1
              $region80: #{random_walk_embed_p2g.1} parent=78 // loop_pre_header
                _
              $region81: #{random_walk_embed_p2g.1} parent=78 // loop_header
                %s3437 = sphi 0, %s3441
                %p3438 = scmp.ge.s32.totalorder %s3437, 1
                %s3442 = sphi %s3419, %s3419
                %s3443 = sphi %s3428, %s3428
              $region82: #{random_walk_embed_p2g.1} parent=78 // loop_header_branch
                %3440 = sbr.rel (%p3438) target = $region86
              $region83: #{random_walk_embed_p2g.1} parent=78 // loop_body
                %v3444 = vld [vmem:[%s3442] sm:$0xff]
                %3445 = vst [vmem:[%s3443] sm:$0xff] %v3444
                %v3446 = vld [vmem:[%s3442 + $0x8] sm:$0xff]
                %3447 = vst [vmem:[%s3443 + $0x8] sm:$0xff] %v3446
                %v3448 = vld [vmem:[%s3442 + $0x10] sm:$0xff]
                %3449 = vst [vmem:[%s3443 + $0x20] sm:$0xff] %v3448
                %v3450 = vld [vmem:[%s3442 + $0x18] sm:$0xff]
                %3451 = vst [vmem:[%s3443 + $0x28] sm:$0xff] %v3450
                %v3452 = vld [vmem:[%s3442 + $0x20] sm:$0xff]
                %3453 = vst [vmem:[%s3443 + $0x40] sm:$0xff] %v3452
                %v3454 = vld [vmem:[%s3442 + $0x28] sm:$0xff]
                %3455 = vst [vmem:[%s3443 + $0x48] sm:$0xff] %v3454
                %v3456 = vld [vmem:[%s3442 + $0x30] sm:$0xff]
                %3457 = vst [vmem:[%s3443 + $0x60] sm:$0xff] %v3456
                %v3458 = vld [vmem:[%s3442 + $0x38] sm:$0xff]
                %3459 = vst [vmem:[%s3443 + $0x68] sm:$0xff] %v3458
                %v3460 = vld [vmem:[%s3442 + $0x40] sm:$0xff]
                %3461 = vst [vmem:[%s3443 + $0x80] sm:$0xff] %v3460
                %v3462 = vld [vmem:[%s3442 + $0x48] sm:$0xff]
                %3463 = vst [vmem:[%s3443 + $0x88] sm:$0xff] %v3462
                %v3464 = vld [vmem:[%s3442 + $0x50] sm:$0xff]
                %3465 = vst [vmem:[%s3443 + $0xa0] sm:$0xff] %v3464
                %v3466 = vld [vmem:[%s3442 + $0x58] sm:$0xff]
                %3467 = vst [vmem:[%s3443 + $0xa8] sm:$0xff] %v3466
                %v3468 = vld [vmem:[%s3442 + $0x60] sm:$0xff]
                %3469 = vst [vmem:[%s3443 + $0xc0] sm:$0xff] %v3468
                %v3470 = vld [vmem:[%s3442 + $0x68] sm:$0xff]
                %3471 = vst [vmem:[%s3443 + $0xc8] sm:$0xff] %v3470
                %v3472 = vld [vmem:[%s3442 + $0x70] sm:$0xff]
                %3473 = vst [vmem:[%s3443 + $0xe0] sm:$0xff] %v3472
                %v3474 = vld [vmem:[%s3442 + $0x78] sm:$0xff]
                %3475 = vst [vmem:[%s3443 + $0xe8] sm:$0xff] %v3474
                %v3476 = vld [vmem:[%s3442 + $0x80] sm:$0xff]
                %3477 = vst [vmem:[%s3443 + $0x100] sm:$0xff] %v3476
                %v3478 = vld [vmem:[%s3442 + $0x88] sm:$0xff]
                %3479 = vst [vmem:[%s3443 + $0x108] sm:$0xff] %v3478
                %v3480 = vld [vmem:[%s3442 + $0x90] sm:$0xff]
                %3481 = vst [vmem:[%s3443 + $0x120] sm:$0xff] %v3480
                %v3482 = vld [vmem:[%s3442 + $0x98] sm:$0xff]
                %3483 = vst [vmem:[%s3443 + $0x128] sm:$0xff] %v3482
                %v3484 = vld [vmem:[%s3442 + $0xa0] sm:$0xff]
                %3485 = vst [vmem:[%s3443 + $0x140] sm:$0xff] %v3484
                %v3486 = vld [vmem:[%s3442 + $0xa8] sm:$0xff]
                %3487 = vst [vmem:[%s3443 + $0x148] sm:$0xff] %v3486
                %v3488 = vld [vmem:[%s3442 + $0xb0] sm:$0xff]
                %3489 = vst [vmem:[%s3443 + $0x160] sm:$0xff] %v3488
                %v3490 = vld [vmem:[%s3442 + $0xb8] sm:$0xff]
                %3491 = vst [vmem:[%s3443 + $0x168] sm:$0xff] %v3490
                %v3492 = vld [vmem:[%s3442 + $0xc0] sm:$0xff]
                %3493 = vst [vmem:[%s3443 + $0x180] sm:$0xff] %v3492
                %v3494 = vld [vmem:[%s3442 + $0xc8] sm:$0xff]
                %3495 = vst [vmem:[%s3443 + $0x188] sm:$0xff] %v3494
                %v3496 = vld [vmem:[%s3442 + $0xd0] sm:$0xff]
                %3497 = vst [vmem:[%s3443 + $0x1a0] sm:$0xff] %v3496
                %v3498 = vld [vmem:[%s3442 + $0xd8] sm:$0xff]
                %3499 = vst [vmem:[%s3443 + $0x1a8] sm:$0xff] %v3498
                %v3500 = vld [vmem:[%s3442 + $0xe0] sm:$0xff]
                %3501 = vst [vmem:[%s3443 + $0x1c0] sm:$0xff] %v3500
                %v3502 = vld [vmem:[%s3442 + $0xe8] sm:$0xff]
                %3503 = vst [vmem:[%s3443 + $0x1c8] sm:$0xff] %v3502
                %v3504 = vld [vmem:[%s3442 + $0xf0] sm:$0xff]
                %3505 = vst [vmem:[%s3443 + $0x1e0] sm:$0xff] %v3504
                %v3506 = vld [vmem:[%s3442 + $0xf8] sm:$0xff]
                %3507 = vst [vmem:[%s3443 + $0x1e8] sm:$0xff] %v3506
              $region84: #{random_walk_embed_p2g.1} parent=78 // loop_footer
                %s3441 = sadd.s32 1, %s3437
              $region85: #{random_walk_embed_p2g.1} parent=78 // loop_footer_branch
                %3436 = sbr.rel target = $region81
              $region86: #{random_walk_embed_p2g.1} parent=78 // loop_exit
                _
            $region79: #{random_walk_embed_p2g.1} parent=70 // pred_fallthru
              _
          $region71: #{random_walk_embed_p2g.1} parent=66 // pred_fallthru
            _
          %3584 = vnop
        $region67: #{random_walk_embed_p2g.1} parent=58 // pred_fallthru
          _
      $region59: #{random_walk_embed_p2g.1} parent=5 // pred_fallthru
        _
      %p3585 = scmp.le.s32.totalorder 2, %s11
      // Predicated region
      $region102: #{random_walk_embed_p2g.1} parent=5 // pred_check
        %p3586 = pneg %p3585
      $region103: #{random_walk_embed_p2g.1} parent=5 // pred_check_branch
        %3588 = sbr.rel (%p3586) target = $region105
      $region104: #{random_walk_embed_p2g.1} parent=5 // pred_region
        %s3589 = ssub.s32 %s11, 2
        // Predicated region
        $region106: #{random_walk_embed_p2g.1} parent=104 // pred_check
          %p3590 = pneg %p179
        $region107: #{random_walk_embed_p2g.1} parent=104 // pred_check_branch
          %3592 = sbr.rel (%p3590) target = $region109
        $region108: #{random_walk_embed_p2g.1} parent=104 // pred_region
          %s3593 = sand.u32 %s164, 1
          %s3594 = sand.u32 %s164, 1
          %s3595 = smul.addr %s3594, 256
          %s3596 = scalar_lea.vmem [#allocation4], %s3595
        $region109: #{random_walk_embed_p2g.1} parent=104 // pred_fallthru
          _
      $region105: #{random_walk_embed_p2g.1} parent=5 // pred_fallthru
        _
    $region6: #{random_walk_embed_p2g.1} parent=1 // loop_footer
      %s15 = sadd.s32 1, %s11
    $region7: #{random_walk_embed_p2g.1} parent=1 // loop_footer_branch
      %10 = sbr.rel target = $region3
    $region8: #{random_walk_embed_p2g.1} parent=1 // loop_exit
      _

</llo_original>
